<compile_context>
chip_gen: v7x
topology: tpu7x:2x2x1
jax: 0.10.0
libtpu: 0.0.40
codegen_flags: <defaults>
</compile_context>

<pallas_src>
import functools

import jax
import jax.numpy as jnp
from jax.experimental import pallas as pl
from jax.experimental.pallas import tpu as pltpu


def _paa_g_kernel(x_cn_ref, x_strip_ref, out_ref,
                  neg_inv_bw_ref, sq_col_ref, s_col_ref, acc_ref, *,
                  hw, tr, strips_per_split, inv_scale, kernel_mul, kernel_num,
                  gram_precision, exp_dtype):
    """One (batch, split, row-strip) grid step.

    x_cn_ref:    (c, N)  lane-dense [source; target] points, N = 2*h*w.
    x_strip_ref: (tr, c) row strip of the same point cloud (MXU LHS).
    out_ref:     (1, 1)  per-(batch, split) loss, written on the last strip.
    Scratch:     -1/bw (1,1), squared norms (1,N), sign vector (N,1), acc (1,1).
    """
    r = pl.program_id(2)
    r_global = pl.program_id(1) * strips_per_split + r

    # ---- Once per (batch, split): bandwidth, squared norms, sign vector. ----
    @pl.when(r == 0)
    def _hoist_invariants():
        x = x_cn_ref[...].astype(jnp.float32)                     # (c, N)
        n_pts = x.shape[1]
        sq_col_ref[...] = jnp.sum(x * x, axis=0, keepdims=True)   # (1, N)
        # fix_sigma=None bandwidth via the cancellation-safe centered identity
        #   sum_{i,j} |x_i - x_j|^2 = 2 * N * sum_i |x_i - mean|^2
        mean = jnp.sum(x, axis=1, keepdims=True) * (1.0 / n_pts)  # (c, 1)
        xc = x - mean
        sum_l2 = (2.0 * n_pts) * jnp.sum(xc * xc, axis=(0, 1), keepdims=True)
        bw = sum_l2 * (1.0 / float(n_pts * n_pts - n_pts))
        bw = bw * (1.0 / (kernel_mul ** (kernel_num // 2)))
        bw = jnp.maximum(bw, 1e-12)            # degenerate-input guard
        neg_inv_bw_ref[...] = -1.0 / bw                           # (1, 1)
        # +1 for source points (j < hw), -1 for target points.
        jj = jax.lax.broadcasted_iota(jnp.int32, s_col_ref.shape, 0)   # (N, 1)
        s_col_ref[...] = jnp.where(jj < hw, jnp.float32(1.0), jnp.float32(-1.0))
        acc_ref[...] = jnp.zeros_like(acc_ref)

    # ---- Per strip: one MXU matmul -> distances -> Gaussian kernels. ----
    x = x_cn_ref[...]                                             # (c, N)
    xs = x_strip_ref[...]                                         # (tr, c)
    xs_f32 = xs.astype(jnp.float32)
    sq_row = jnp.sum(xs_f32 * xs_f32, axis=1, keepdims=True)      # (tr, 1)

    # -2 folded into the tiny LHS so l2 is just two broadcast adds + a clamp.
    gram_m2 = jax.lax.dot_general(
        xs * (-2.0), x, (((1,), (0,)), ((), ())),
        preferred_element_type=jnp.float32,
        precision=gram_precision)                                 # (tr, N)
    l2 = jnp.maximum(sq_row + (sq_col_ref[...] + gram_m2), 0.0)

    neg_inv_bw = neg_inv_bw_ref[...]                              # (1, 1)
    ks = None
    for i in range(kernel_num):
        coeff = (neg_inv_bw if i == 0
                 else neg_inv_bw * (1.0 / float(kernel_mul ** i)))
        arg = l2 * coeff
        if jnp.dtype(exp_dtype) != jnp.dtype(jnp.float32):
            term = jnp.exp(arg.astype(exp_dtype)).astype(jnp.float32)
        else:
            term = jnp.exp(arg)                                   # EUP
        ks = term if ks is None else ks + term

    # Signed column reduction on the (otherwise idle) MXU:
    #   row_sums[i] = sum_j ks[i, j] * s_j,  s_j in {+1, -1}.
    row_sums = jax.lax.dot_general(
        ks, s_col_ref[...], (((1,), (0,)), ((), ())),
        preferred_element_type=jnp.float32,
        precision=jax.lax.Precision.HIGHEST)                      # (tr, 1)

    ii = jax.lax.broadcasted_iota(jnp.int32, (tr, 1), 0) + r_global * tr
    s_row = jnp.where(ii < hw, jnp.float32(1.0), jnp.float32(-1.0))
    partial = jnp.sum(row_sums * s_row, axis=(0, 1), keepdims=True)   # (1, 1)
    acc_ref[...] = acc_ref[...] + partial

    @pl.when(r == strips_per_split - 1)
    def _finalize():
        out_ref[...] = acc_ref[...] * inv_scale


def _vmem_limit_bytes():
    """~75% of physical VMEM; v7x-safe 48 MiB fallback if the query fails."""
    try:
        cap = int(pltpu.get_tpu_info().vmem_capacity_bytes)
    except Exception:
        cap = 64 * 1024 * 1024
    return max(cap - cap // 4, 32 * 1024 * 1024)


def _row_tile(N, c, in_itemsize, vmem_limit, row_tile=None):
    """Largest row strip `tr` that divides N, is a multiple of 8 (or == N) and
    keeps the residents + ~5 live (tr, N) f32 intermediates inside VMEM."""
    if row_tile is not None:
        assert N % row_tile == 0 and (row_tile % 8 == 0 or row_tile == N), (
            "row_tile must divide N=2*h*w and be a multiple of 8 (or == N)")
        return int(row_tile)
    fixed = 2 * c * N * in_itemsize            # double-buffered (c, N) block
    fixed += 8 * N * 4                         # (1, N) sq-norm scratch (padded)
    fixed += N * 128 * 4                       # (N, 1) sign scratch (lane pad)
    fixed += 2 * 1024 * 1024                   # compiler-internal headroom
    budget = max(vmem_limit - fixed, 0)
    per_row = 5 * N * 4 + 2 * c * in_itemsize  # live (tr,N) f32 + (tr,c) strip
    max_rows = max(budget // per_row, 8)
    if N <= max_rows or N % 8 != 0:
        return N
    t = (min(max_rows, N) // 8) * 8
    while t >= 8:
        if N % t == 0:
            return int(t)
        t -= 8
    return N  # no suitable divisor: fall back to a single strip


def paa_g(source, target, kernel_mul=2.0, kernel_num=1, precision=None,
          row_tile=None, n_split=None, exp_dtype=jnp.float32):
    """Pallas implementation of PAA_g.forward(source, target) -> (n,) loss."""
    n, c, h, w = source.shape
    assert target.shape == source.shape
    assert kernel_num >= 1
    hw = h * w
    N = 2 * hw

    # Keep MXU-friendly dtypes as-is (bf16 stays bf16); everything else -> f32.
    in_dtype = jnp.dtype(source.dtype)
    if in_dtype not in (jnp.dtype(jnp.bfloat16), jnp.dtype(jnp.float32)):
        in_dtype = jnp.dtype(jnp.float32)

    # Lane-dense (n, c, N): straight reshape + concat.
    total_cn = jnp.concatenate(
        [source.reshape(n, c, hw), target.reshape(n, c, hw)], axis=2
    ).astype(in_dtype)
    # (n, N, c) copy used only to deliver (tr, c) MXU-LHS row strips with a
    # canonical (no in-kernel transpose) contraction; kept for lowering safety.
    total_nc = jnp.transpose(total_cn, (0, 2, 1))

    vmem_limit = _vmem_limit_bytes()
    itemsize = jnp.dtype(in_dtype).itemsize
    tr = _row_tile(N, c, itemsize, vmem_limit, row_tile)
    n_strips = N // tr

    # Optional split of the strip axis so batch-1 calls can still use both
    # v7x TensorCores (a second "parallel" grid axis).
    if n_split is None:
        n_split = 2 if (n == 1 and n_strips >= 2 and n_strips % 2 == 0) else 1
    assert n_split >= 1 and n_strips % n_split == 0, (
        "n_split must divide the number of row strips")
    strips_per_split = n_strips // n_split

    if precision is None:   # HIGHEST only pays off while c (the K dim) is tiny
        precision = (jax.lax.Precision.HIGHEST if c < 64
                     else jax.lax.Precision.DEFAULT)

    inv_scale = 1.0 / float(c * c * w * w * h * h)

    kernel = functools.partial(
        _paa_g_kernel, hw=hw, tr=tr, strips_per_split=strips_per_split,
        inv_scale=inv_scale, kernel_mul=float(kernel_mul),
        kernel_num=int(kernel_num), gram_precision=precision,
        exp_dtype=exp_dtype)

    out = pl.pallas_call(
        kernel,
        out_shape=jax.ShapeDtypeStruct((n * n_split, 1, 1), jnp.float32),
        grid=(n, n_split, strips_per_split),
        in_specs=[
            # Full (c, N) point cloud, resident across all strips of a batch.
            pl.BlockSpec((None, c, N), lambda b, s, r: (b, 0, 0)),
            # (tr, c) row strip (canonical MXU LHS).
            pl.BlockSpec((None, tr, c),
                         lambda b, s, r: (b, s * strips_per_split + r, 0)),
        ],
        out_specs=pl.BlockSpec((None, 1, 1),
                               lambda b, s, r: (b * n_split + s, 0, 0)),
        scratch_shapes=[
            pltpu.VMEM((1, 1), jnp.float32),   # -1 / bandwidth (per batch)
            pltpu.VMEM((1, N), jnp.float32),   # per-point squared norms
            pltpu.VMEM((N, 1), jnp.float32),   # +-1 column sign vector
            pltpu.VMEM((1, 1), jnp.float32),   # per-(batch, split) accumulator
        ],
        compiler_params=pltpu.CompilerParams(
            dimension_semantics=("parallel", "parallel", "arbitrary"),
            vmem_limit_bytes=int(vmem_limit)),
    )(total_cn, total_nc)
    return jnp.sum(out.reshape(n, n_split), axis=1)


def _paa_g_reference(source, target, kernel_mul=2.0, kernel_num=1):
    """Pure-JAX reference mirroring the PyTorch forward exactly."""
    n, c, h, w = source.shape
    hw = h * w
    N = 2 * hw
    src = source.reshape(n, c, hw).transpose(0, 2, 1)
    tgt = target.reshape(n, c, hw).transpose(0, 2, 1)
    total = jnp.concatenate([src, tgt], axis=1)
    diff = total[:, :, None, :] - total[:, None, :, :]
    L2 = jnp.sum(diff ** 2, axis=-1)                               # (n, N, N)
    bw = jnp.sum(L2, axis=(1, 2), keepdims=True) / (N * N - N)
    bw = bw / (kernel_mul ** (kernel_num // 2))
    K = sum(jnp.exp(-L2 / (bw * kernel_mul ** i)) for i in range(kernel_num))
    XX = K[:, :hw, :hw]
    YY = K[:, hw:, hw:]
    XY = K[:, :hw, hw:]
    YX = K[:, hw:, :hw]
    return jnp.sum(XX + YY - XY - YX, axis=(1, 2)) / (c * c * w * w * h * h)


if __name__ == "__main__":
    key = jax.random.PRNGKey(0)
    k1, k2, k3, k4 = jax.random.split(key, 4)

    # Case 1: default path (single strip per batch element).
    n, c, h, w = 2, 4, 8, 8                     # N = 2*h*w = 128 points/batch
    source = jax.random.normal(k1, (n, c, h, w), dtype=jnp.float32)
    target = jax.random.normal(k2, (n, c, h, w), dtype=jnp.float32)
    loss = paa_g(source, target)
    jax.block_until_ready(loss)
    ref = _paa_g_reference(source, target)
    assert loss.shape == (n,)
    assert bool(jnp.all(jnp.isfinite(loss)))
    assert jnp.allclose(loss, ref, rtol=1e-3, atol=1e-6), (loss, ref)

    # Case 2: multi-strip accumulation path and kernel_num > 1.
    loss3 = paa_g(source, target, kernel_num=3, row_tile=32)
    jax.block_until_ready(loss3)
    ref3 = _paa_g_reference(source, target, kernel_num=3)
    assert jnp.allclose(loss3, ref3, rtol=1e-3, atol=1e-6), (loss3, ref3)

    # Case 3: batch-1 input exercising the 2-way TensorCore strip split.
    n1, c1, h1, w1 = 1, 8, 8, 8
    src1 = jax.random.normal(k3, (n1, c1, h1, w1), dtype=jnp.float32)
    tgt1 = jax.random.normal(k4, (n1, c1, h1, w1), dtype=jnp.float32)
    loss1 = paa_g(src1, tgt1, row_tile=64)      # 2 strips -> n_split = 2
    jax.block_until_ready(loss1)
    ref1 = _paa_g_reference(src1, tgt1)
    assert loss1.shape == (n1,)
    assert jnp.allclose(loss1, ref1, rtol=1e-3, atol=1e-6), (loss1, ref1)

    print("KERNEL_OK")
</pallas_src>

<mosaic_0001>
module attributes {stable_mosaic.version = 11 : i64} {
  func.func @_paa_g_kernel(%arg0: i32, %arg1: i32, %arg2: i32, %arg3: memref<1x4x128xf32, #tpu.memory_space<vmem>>, %arg4: memref<1x128x4xf32, #tpu.memory_space<vmem>>, %arg5: memref<1x1x1xf32, #tpu.memory_space<vmem>>, %arg6: memref<1x1xf32, #tpu.memory_space<vmem>>, %arg7: memref<1x128xf32, #tpu.memory_space<vmem>>, %arg8: memref<128x1xf32, #tpu.memory_space<vmem>>, %arg9: memref<1x1xf32, #tpu.memory_space<vmem>>) attributes {dimension_semantics = [#tpu.dimension_semantics<parallel>, #tpu.dimension_semantics<parallel>, #tpu.dimension_semantics<arbitrary>], iteration_bounds = array<i64: 2, 1, 1>, scalar_prefetch = 0 : i64, scratch_operands = 4 : i64, tpu.core_type = #tpu.core_type<tc>, window_params = [{transform_indices = @transform_0, window_bounds = array<i64: 1, 4, 128>}, {transform_indices = @transform_1, window_bounds = array<i64: 1, 128, 4>}, {transform_indices = @transform_2, window_bounds = array<i64: 1, 1, 1>}]} {
    %c1_i32 = arith.constant 1 : i32
    %0 = arith.muli %arg1, %c1_i32 : i32
    %1 = arith.addi %0, %arg2 : i32
    %c0_i32 = arith.constant 0 : i32
    %2 = arith.cmpi eq, %arg2, %c0_i32 : i32
    %3 = arith.extui %2 : i1 to i32
    %c0_i32_0 = arith.constant 0 : i32
    %4 = arith.cmpi ne, %3, %c0_i32_0 : i32
    scf.if %4 {
      %c0_25 = arith.constant 0 : index
      %c0_26 = arith.constant 0 : index
      %c0_27 = arith.constant 0 : index
      %49 = vector.load %arg3[%c0_25, %c0_26, %c0_27] : memref<1x4x128xf32, #tpu.memory_space<vmem>>, vector<1x4x128xf32>
      %50 = vector.shape_cast %49 : vector<1x4x128xf32> to vector<4x128xf32>
      %51 = arith.mulf %50, %50 : vector<4x128xf32>
      %cst_28 = arith.constant dense<0.000000e+00> : vector<128xf32>
      %52 = vector.multi_reduction <add>, %51, %cst_28 [0] : vector<4x128xf32> to vector<128xf32>
      %53 = vector.shape_cast %52 : vector<128xf32> to vector<1x128xf32>
      %c0_29 = arith.constant 0 : index
      %c0_30 = arith.constant 0 : index
      %54 = vector.load %arg7[%c0_29, %c0_30] : memref<1x128xf32, #tpu.memory_space<vmem>>, vector<1x128xf32>
      tpu.vector_store %arg7[%c0_29, %c0_30], %53 {strides = array<i32>} : memref<1x128xf32, #tpu.memory_space<vmem>>, vector<1x128xf32>,
      %cst_31 = arith.constant dense<0.000000e+00> : vector<4xf32>
      %55 = vector.multi_reduction <add>, %50, %cst_31 [1] : vector<4x128xf32> to vector<4xf32>
      %56 = vector.shape_cast %55 : vector<4xf32> to vector<4x1xf32>
      %cst_32 = arith.constant 7.812500e-03 : f32
      %57 = vector.broadcast %cst_32 : f32 to vector<4x1xf32>
      %58 = arith.mulf %56, %57 : vector<4x1xf32>
      %59 = vector.broadcast %58 : vector<4x1xf32> to vector<4x128xf32>
      %60 = arith.subf %50, %59 : vector<4x128xf32>
      %61 = arith.mulf %60, %60 : vector<4x128xf32>
      %62 = vector.shape_cast %61 : vector<4x128xf32> to vector<1x4x128xf32>
      %cst_33 = arith.constant dense<0.000000e+00> : vector<1xf32>
      %63 = vector.multi_reduction <add>, %62, %cst_33 [1, 2] : vector<1x4x128xf32> to vector<1xf32>
      %64 = vector.shape_cast %63 : vector<1xf32> to vector<1x1x1xf32>
      %65 = vector.extract %64[0, 0, 0] : f32 from vector<1x1x1xf32>
      %66 = vector.broadcast %65 : f32 to vector<1x1xf32>
      %cst_34 = arith.constant 2.560000e+02 : f32
      %67 = vector.broadcast %cst_34 : f32 to vector<1x1xf32>
      %68 = arith.mulf %67, %66 : vector<1x1xf32>
      %cst_35 = arith.constant 6.15157478E-5 : f32
      %69 = vector.broadcast %cst_35 : f32 to vector<1x1xf32>
      %70 = arith.mulf %68, %69 : vector<1x1xf32>
      %cst_36 = arith.constant 1.000000e+00 : f32
      %71 = vector.broadcast %cst_36 : f32 to vector<1x1xf32>
      %72 = arith.mulf %70, %71 : vector<1x1xf32>
      %cst_37 = arith.constant 9.99999996E-13 : f32
      %73 = vector.broadcast %cst_37 : f32 to vector<1x1xf32>
      %74 = arith.maximumf %72, %73 : vector<1x1xf32>
      %cst_38 = arith.constant -1.000000e+00 : f32
      %75 = vector.broadcast %cst_38 : f32 to vector<1x1xf32>
      %76 = arith.divf %75, %74 : vector<1x1xf32>
      %c0_39 = arith.constant 0 : index
      %c0_40 = arith.constant 0 : index
      %77 = vector.load %arg6[%c0_39, %c0_40] : memref<1x1xf32, #tpu.memory_space<vmem>>, vector<1x1xf32>
      tpu.vector_store %arg6[%c0_39, %c0_40], %76 {strides = array<i32>} : memref<1x1xf32, #tpu.memory_space<vmem>>, vector<1x1xf32>,
      %78 = tpu.iota {dimensions = array<i32: 0>} : vector<128x1xi32>
      %c64_i32_41 = arith.constant 64 : i32
      %79 = vector.broadcast %c64_i32_41 : i32 to vector<128x1xi32>
      %80 = arith.cmpi slt, %78, %79 : vector<128x1xi32>
      %cst_42 = arith.constant 1.000000e+00 : f32
      %cst_43 = arith.constant -1.000000e+00 : f32
      %81 = vector.broadcast %cst_42 : f32 to vector<128x1xf32>
      %82 = vector.broadcast %cst_43 : f32 to vector<128x1xf32>
      %83 = arith.select %80, %81, %82 : vector<128x1xi1>, vector<128x1xf32>
      %c0_44 = arith.constant 0 : index
      %c0_45 = arith.constant 0 : index
      %84 = vector.load %arg8[%c0_44, %c0_45] : memref<128x1xf32, #tpu.memory_space<vmem>>, vector<128x1xf32>
      tpu.vector_store %arg8[%c0_44, %c0_45], %83 {strides = array<i32>} : memref<128x1xf32, #tpu.memory_space<vmem>>, vector<128x1xf32>,
      %cst_46 = arith.constant 0.000000e+00 : f32
      %85 = vector.broadcast %cst_46 : f32 to vector<1x1xf32>
      %c0_47 = arith.constant 0 : index
      %c0_48 = arith.constant 0 : index
      %86 = vector.load %arg9[%c0_47, %c0_48] : memref<1x1xf32, #tpu.memory_space<vmem>>, vector<1x1xf32>
      tpu.vector_store %arg9[%c0_47, %c0_48], %85 {strides = array<i32>} : memref<1x1xf32, #tpu.memory_space<vmem>>, vector<1x1xf32>,
    } else {
    }
    %c0 = arith.constant 0 : index
    %c0_1 = arith.constant 0 : index
    %c0_2 = arith.constant 0 : index
    %5 = vector.load %arg3[%c0, %c0_1, %c0_2] : memref<1x4x128xf32, #tpu.memory_space<vmem>>, vector<1x4x128xf32>
    %6 = vector.shape_cast %5 : vector<1x4x128xf32> to vector<4x128xf32>
    %c0_3 = arith.constant 0 : index
    %c0_4 = arith.constant 0 : index
    %c0_5 = arith.constant 0 : index
    %7 = vector.load %arg4[%c0_3, %c0_4, %c0_5] : memref<1x128x4xf32, #tpu.memory_space<vmem>>, vector<1x128x4xf32>
    %8 = vector.shape_cast %7 : vector<1x128x4xf32> to vector<128x4xf32>
    %9 = arith.mulf %8, %8 : vector<128x4xf32>
    %cst = arith.constant dense<0.000000e+00> : vector<128xf32>
    %10 = vector.multi_reduction <add>, %9, %cst [1] : vector<128x4xf32> to vector<128xf32>
    %11 = vector.shape_cast %10 : vector<128xf32> to vector<128x1xf32>
    %cst_6 = arith.constant -2.000000e+00 : f32
    %12 = vector.broadcast %cst_6 : f32 to vector<128x4xf32>
    %13 = arith.mulf %8, %12 : vector<128x4xf32>
    %cst_7 = arith.constant dense<0.000000e+00> : vector<128x128xf32>
    %14 = tpu.matmul %13, %6, %cst_7 {dimension_numbers = #tpu.dot_dimension_numbers<[1], [0], [0], [1], [0, 0, 1, 1], [], []>, precision = #tpu.contract_precision<fp32>} : vector<128x4xf32>, vector<4x128xf32>, vector<128x128xf32> -> vector<128x128xf32>
    %c0_8 = arith.constant 0 : index
    %c0_9 = arith.constant 0 : index
    %15 = vector.load %arg7[%c0_8, %c0_9] : memref<1x128xf32, #tpu.memory_space<vmem>>, vector<1x128xf32>
    %16 = vector.broadcast %15 : vector<1x128xf32> to vector<128x128xf32>
    %17 = arith.addf %16, %14 : vector<128x128xf32>
    %18 = vector.broadcast %11 : vector<128x1xf32> to vector<128x128xf32>
    %19 = arith.addf %18, %17 : vector<128x128xf32>
    %cst_10 = arith.constant 0.000000e+00 : f32
    %20 = vector.broadcast %cst_10 : f32 to vector<128x128xf32>
    %21 = arith.maximumf %19, %20 : vector<128x128xf32>
    %c0_11 = arith.constant 0 : index
    %c0_12 = arith.constant 0 : index
    %22 = vector.load %arg6[%c0_11, %c0_12] : memref<1x1xf32, #tpu.memory_space<vmem>>, vector<1x1xf32>
    %23 = vector.broadcast %22 : vector<1x1xf32> to vector<128x128xf32>
    %24 = arith.mulf %21, %23 : vector<128x128xf32>
    %25 = math.exp %24 : vector<128x128xf32>
    %c0_13 = arith.constant 0 : index
    %c0_14 = arith.constant 0 : index
    %26 = vector.load %arg8[%c0_13, %c0_14] : memref<128x1xf32, #tpu.memory_space<vmem>>, vector<128x1xf32>
    %cst_15 = arith.constant dense<0.000000e+00> : vector<128x1xf32>
    %27 = tpu.matmul %25, %26, %cst_15 {dimension_numbers = #tpu.dot_dimension_numbers<[1], [0], [0], [1], [0, 0, 1, 1], [], []>, precision = #tpu.contract_precision<fp32>} : vector<128x128xf32>, vector<128x1xf32>, vector<128x1xf32> -> vector<128x1xf32>
    %28 = tpu.iota {dimensions = array<i32: 0>} : vector<128x1xi32>
    %c128_i32 = arith.constant 128 : i32
    %29 = arith.muli %1, %c128_i32 : i32
    %30 = vector.broadcast %29 : i32 to vector<128x1xi32>
    %31 = arith.addi %28, %30 : vector<128x1xi32>
    %c64_i32 = arith.constant 64 : i32
    %32 = vector.broadcast %c64_i32 : i32 to vector<128x1xi32>
    %33 = arith.cmpi slt, %31, %32 : vector<128x1xi32>
    %cst_16 = arith.constant 1.000000e+00 : f32
    %cst_17 = arith.constant -1.000000e+00 : f32
    %34 = vector.broadcast %cst_16 : f32 to vector<128x1xf32>
    %35 = vector.broadcast %cst_17 : f32 to vector<128x1xf32>
    %36 = arith.select %33, %34, %35 : vector<128x1xi1>, vector<128x1xf32>
    %37 = arith.mulf %27, %36 : vector<128x1xf32>
    %38 = vector.shape_cast %37 : vector<128x1xf32> to vector<1x128x1xf32>
    %cst_18 = arith.constant dense<0.000000e+00> : vector<1xf32>
    %39 = vector.multi_reduction <add>, %38, %cst_18 [1, 2] : vector<1x128x1xf32> to vector<1xf32>
    %40 = vector.shape_cast %39 : vector<1xf32> to vector<1x1x1xf32>
    %41 = vector.extract %40[0, 0, 0] : f32 from vector<1x1x1xf32>
    %42 = vector.broadcast %41 : f32 to vector<1x1xf32>
    %c0_19 = arith.constant 0 : index
    %c0_20 = arith.constant 0 : index
    %43 = vector.load %arg9[%c0_19, %c0_20] : memref<1x1xf32, #tpu.memory_space<vmem>>, vector<1x1xf32>
    %44 = arith.addf %43, %42 : vector<1x1xf32>
    %c0_21 = arith.constant 0 : index
    %c0_22 = arith.constant 0 : index
    %45 = vector.load %arg9[%c0_21, %c0_22] : memref<1x1xf32, #tpu.memory_space<vmem>>, vector<1x1xf32>
    tpu.vector_store %arg9[%c0_21, %c0_22], %44 {strides = array<i32>} : memref<1x1xf32, #tpu.memory_space<vmem>>, vector<1x1xf32>,
    %c0_i32_23 = arith.constant 0 : i32
    %46 = arith.cmpi eq, %arg2, %c0_i32_23 : i32
    %47 = arith.extui %46 : i1 to i32
    %c0_i32_24 = arith.constant 0 : i32
    %48 = arith.cmpi ne, %47, %c0_i32_24 : i32
    scf.if %48 {
      %c0_25 = arith.constant 0 : index
      %c0_26 = arith.constant 0 : index
      %49 = vector.load %arg9[%c0_25, %c0_26] : memref<1x1xf32, #tpu.memory_space<vmem>>, vector<1x1xf32>
      %cst_27 = arith.constant 1.52587891E-5 : f32
      %50 = vector.broadcast %cst_27 : f32 to vector<1x1xf32>
      %51 = arith.mulf %49, %50 : vector<1x1xf32>
      %c0_28 = arith.constant 0 : index
      %c0_29 = arith.constant 0 : index
      %c0_30 = arith.constant 0 : index
      %52 = vector.load %arg5[%c0_28, %c0_29, %c0_30] : memref<1x1x1xf32, #tpu.memory_space<vmem>>, vector<1x1x1xf32>
      %53 = vector.shape_cast %52 : vector<1x1x1xf32> to vector<1x1xf32>
      %54 = vector.shape_cast %51 : vector<1x1xf32> to vector<1x1x1xf32>
      tpu.vector_store %arg5[%c0_28, %c0_29, %c0_30], %54 {strides = array<i32>} : memref<1x1x1xf32, #tpu.memory_space<vmem>>, vector<1x1x1xf32>,
    } else {
    }
    return
  }
  func.func @transform_0(%arg0: i32, %arg1: i32, %arg2: i32) -> (i32, i32, i32) {
    %c0_i32 = arith.constant 0 : i32
    %c0_i32_0 = arith.constant 0 : i32
    %c0_i32_1 = arith.constant 0 : i32
    return %arg0, %c0_i32, %c0_i32_0 : i32, i32, i32
  }
  func.func @transform_1(%arg0: i32, %arg1: i32, %arg2: i32) -> (i32, i32, i32) {
    %c1_i32 = arith.constant 1 : i32
    %0 = arith.muli %arg1, %c1_i32 : i32
    %1 = arith.addi %0, %arg2 : i32
    %c0_i32 = arith.constant 0 : i32
    %c0_i32_0 = arith.constant 0 : i32
    return %arg0, %1, %c0_i32 : i32, i32, i32
  }
  func.func @transform_2(%arg0: i32, %arg1: i32, %arg2: i32) -> (i32, i32, i32) {
    %c1_i32 = arith.constant 1 : i32
    %0 = arith.muli %arg0, %c1_i32 : i32
    %1 = arith.addi %0, %arg1 : i32
    %c0_i32 = arith.constant 0 : i32
    %c0_i32_0 = arith.constant 0 : i32
    %c0_i32_1 = arith.constant 0 : i32
    return %1, %c0_i32, %c0_i32_0 : i32, i32, i32
  }
}

</mosaic_0001>

<llo_original>
// kernel: tpu_custom_call.1
$region0: #{tpu_custom_call.1}
  #allocation0 [shape = 'u32[]', space=smem, size = 0x4, offset = 0x4, fixed_abs, tag = 'smem constant byte address 0x4 - core index']
  #allocation1 [shape = 'u32[144,128]{1,0:T(1,128)}', space=vmem, size = 0x12000, scoped, tag = 'internal scratch']
  #allocation2 [shape = 'f32[1,1]{1,0:T(1,128)}', space=vmem, size = 0x200, scoped, tag = 'scratch operand']
  #allocation3 [shape = 'f32[1,128]{1,0:T(1,128)}', space=vmem, size = 0x200, scoped, tag = 'scratch operand']
  #allocation4 [shape = 'f32[128,1]{1,0:T(8,128)}', space=vmem, size = 0x10000, scoped, tag = 'scratch operand']
  #allocation5 [shape = 'f32[1,1]{1,0:T(1,128)}', space=vmem, size = 0x200, scoped, tag = 'scratch operand']
  %s0 = inlined_call_operand.vmem [shape: f32[2,4,128], index: 0, kind: input, shape index: {}]
  %s1 = inlined_call_operand.vmem [shape: f32[2,128,4], index: 1, kind: input, shape index: {}]
  %s2 = inlined_call_operand.vmem [shape: f32[2,1,1], index: 2, kind: output, shape index: {}]
  %s3 = sld [smem:[#allocation0]]
  $region49: #{tpu_custom_call.1} parent=0
    _
  %s5 = ssub.s32 1, %s3
  %s6 = scalar_select 0, %s5, %s3
  loop: start=0, step=1, limit=4
  $region2: #{tpu_custom_call.1} parent=0 // loop_pre_header
    _
  $region3: #{tpu_custom_call.1} parent=0 // loop_header
    %s8 = sphi 0, %s12
    %p9 = scmp.ge.s32.totalorder %s8, 4
    %s15 = sphi 0, %s34
    %s16 = sphi 0, %s30
    %s17 = sphi 0, %s26
    %s18 = sphi 0, %s15
    %s19 = sphi 0, %s16
    %s20 = sphi 0, %s17
    %s21 = sphi 0, %s18
    %s22 = sphi 0, %s19
    %s23 = sphi 0, %s20
    %s37 = sphi 0, %s39
    %s40 = sphi 0, %s37
    %s41 = sphi 0, %s40
    %s57 = sphi 0, %s41
    %s67 = sphi 0, %s69
    %s70 = sphi 0, %s67
    %s71 = sphi 0, %s70
    %s87 = sphi 0, %s71
    %s95 = sphi 0, %s97
    %s98 = sphi 0, %s95
    %s99 = sphi 0, %s98
    %s115 = sphi 0, %s99
  $region4: #{tpu_custom_call.1} parent=0 // loop_header_branch
    %11 = sbr.rel (%p9) target = $region8
  $region5: #{tpu_custom_call.1} parent=0 // loop_body
    %s13 = ssub.s32 %s8, 1
    %s14 = ssub.s32 %s8, 2
    %s24 = sadd.s32 1, %s17
    %p25 = scmp.ge.s32.totalorder %s24, 1
    %s26 = scalar_select %p25, 0, %s24
    %s27 = sadd.s32 1, %s16
    %s28 = scalar_select %p25, %s27, %s16
    %p29 = scmp.ge.s32.totalorder %s28, 1
    %s30 = scalar_select %p29, 0, %s28
    %s31 = sadd.s32 1, %s15
    %s32 = scalar_select %p29, %s31, %s15
    %p33 = scmp.ge.s32.totalorder %s32, 2
    %s34 = scalar_select %p33, 0, %s32
    %s35 = ssub.s32 %s15, %s34
    %p36 = scmp.eq.s32.totalorder %s35, 0
    %s38 = sadd.s32 %s37, 1
    %s39 = scalar_select %p36, %s37, %s38
    %p42 = pneg %p36
    %p43 = scmp.eq.s32.totalorder %s8, 1
    %p44 = por %p42, %p43
    %p45 = scmp.ne.s32.totalorder %s37, %s40
    %p46 = scmp.eq.s32.totalorder %s8, 0
    %p47 = por %p45, %p46
    %p48 = scmp.ne.s32.totalorder %s37, %s40
    %p49 = scmp.eq.s32.totalorder %s13, 1
    %p50 = por %p48, %p49
    %p51 = scmp.ne.s32.totalorder %s40, %s41
    %p52 = scmp.eq.s32.totalorder %s13, 0
    %p53 = por %p51, %p52
    %p54 = scmp.ne.s32.totalorder %s40, %s41
    %p55 = scmp.eq.s32.totalorder %s14, 1
    %p56 = por %p54, %p55
    %p58 = scmp.ne.s32.totalorder %s41, %s57
    %p59 = scmp.eq.s32.totalorder %s14, 0
    %p60 = por %p58, %p59
    %s61 = sadd.s32 %s16, %s17
    %s62 = sadd.s32 %s30, %s26
    %s63 = ssub.s32 %s15, %s34
    %s64 = ssub.s32 %s61, %s62
    %s65 = sor.u32 %s63, %s64
    %p66 = scmp.eq.s32.totalorder %s65, 0
    %s68 = sadd.s32 %s67, 1
    %s69 = scalar_select %p66, %s67, %s68
    %p72 = pneg %p66
    %p73 = scmp.eq.s32.totalorder %s8, 1
    %p74 = por %p72, %p73
    %p75 = scmp.ne.s32.totalorder %s67, %s70
    %p76 = scmp.eq.s32.totalorder %s8, 0
    %p77 = por %p75, %p76
    %p78 = scmp.ne.s32.totalorder %s67, %s70
    %p79 = scmp.eq.s32.totalorder %s13, 1
    %p80 = por %p78, %p79
    %p81 = scmp.ne.s32.totalorder %s70, %s71
    %p82 = scmp.eq.s32.totalorder %s13, 0
    %p83 = por %p81, %p82
    %p84 = scmp.ne.s32.totalorder %s70, %s71
    %p85 = scmp.eq.s32.totalorder %s14, 1
    %p86 = por %p84, %p85
    %p88 = scmp.ne.s32.totalorder %s71, %s87
    %p89 = scmp.eq.s32.totalorder %s14, 0
    %p90 = por %p88, %p89
    %s91 = sadd.s32 %s15, %s16
    %s92 = sadd.s32 %s34, %s30
    %s93 = ssub.s32 %s91, %s92
    %p94 = scmp.eq.s32.totalorder %s93, 0
    %s96 = sadd.s32 %s95, 1
    %s97 = scalar_select %p94, %s95, %s96
    %p100 = pneg %p94
    %p101 = scmp.eq.s32.totalorder %s8, 1
    %p102 = por %p100, %p101
    %p103 = scmp.ne.s32.totalorder %s95, %s98
    %p104 = scmp.eq.s32.totalorder %s8, 0
    %p105 = por %p103, %p104
    %p106 = scmp.ne.s32.totalorder %s95, %s98
    %p107 = scmp.eq.s32.totalorder %s13, 1
    %p108 = por %p106, %p107
    %p109 = scmp.ne.s32.totalorder %s98, %s99
    %p110 = scmp.eq.s32.totalorder %s13, 0
    %p111 = por %p109, %p110
    %p112 = scmp.ne.s32.totalorder %s98, %s99
    %p113 = scmp.eq.s32.totalorder %s14, 1
    %p114 = por %p112, %p113
    %p116 = scmp.ne.s32.totalorder %s99, %s115
    %p117 = scmp.eq.s32.totalorder %s14, 0
    %p118 = por %p116, %p117
    %p119 = scmp.le.s32.totalorder 1, %s8
    %p120 = scmp.lt.s32.totalorder %s8, 3
    %p121 = pnand %p119, %p120
    %p122 = pneg %p121
    // Predicated region
    $region9: #{tpu_custom_call.1} parent=5 // pred_check
      _
    $region10: #{tpu_custom_call.1} parent=5 // pred_check_branch
      %124 = sbr.rel (%p121) target = $region12
    $region11: #{tpu_custom_call.1} parent=5 // pred_region
      %s125 = ssub.s32 %s8, 1
    $region12: #{tpu_custom_call.1} parent=5 // pred_fallthru
      _
    %p126 = scmp.lt.s32.totalorder %s8, 2
    // Predicated region
    $region13: #{tpu_custom_call.1} parent=5 // pred_check
      %p127 = pneg %p126
    $region14: #{tpu_custom_call.1} parent=5 // pred_check_branch
      %129 = sbr.rel (%p127) target = $region16
    $region15: #{tpu_custom_call.1} parent=5 // pred_region
      // Predicated region
      $region17: #{tpu_custom_call.1} parent=15 // pred_check
        %p130 = pneg %p47
      $region18: #{tpu_custom_call.1} parent=15 // pred_check_branch
        %132 = sbr.rel (%p130) target = $region20
      $region19: #{tpu_custom_call.1} parent=15 // pred_region
        %p133 = scmp.lt.s32.totalorder %s15, 1
        %s134 = scalar_select %p133, %s15, 1
        %s135 = smul.addr %s134, 4
        %s136 = scalar_lea.vmem %s0, %s135
      $region20: #{tpu_custom_call.1} parent=15 // pred_fallthru
        _
      // Predicated region
      $region21: #{tpu_custom_call.1} parent=15 // pred_check
        %p137 = pneg %p77
      $region22: #{tpu_custom_call.1} parent=15 // pred_check_branch
        %139 = sbr.rel (%p137) target = $region24
      $region23: #{tpu_custom_call.1} parent=15 // pred_region
        %s140 = sadd.s32 %s16, %s17
        %s141 = smul.u32 16, %s140
        %p142 = scmp.lt.s32.totalorder %s15, 1
        %s143 = scalar_select %p142, %s15, 1
        %p144 = scmp.lt.s32.totalorder %s141, 15
        %s145 = scalar_select %p144, %s141, 15
        %s146 = smul.addr %s143, 16
        %s147 = sadd.s32 %s145, %s146
        %s148 = smul.addr %s147, 8
        %s149 = scalar_lea.vmem %s1, %s148
        %s150 = sadd.s32 %s16, %s17
        %s151 = smul.u32 16, %s150
      $region24: #{tpu_custom_call.1} parent=15 // pred_fallthru
        _
    $region16: #{tpu_custom_call.1} parent=5 // pred_fallthru
      _
    %p152 = scmp.le.s32.totalorder 1, %s8
    %p153 = scmp.lt.s32.totalorder %s8, 3
    %p154 = pnand %p152, %p153
    %p155 = pneg %p154
    // Predicated region
    $region25: #{tpu_custom_call.1} parent=5 // pred_check
      _
    $region26: #{tpu_custom_call.1} parent=5 // pred_check_branch
      %157 = sbr.rel (%p154) target = $region28
    $region27: #{tpu_custom_call.1} parent=5 // pred_region
      %s158 = ssub.s32 %s8, 1
      %p159 = scmp.lt.s32.totalorder %s18, 1
      %s160 = scalar_select %p159, %s18, 1
      %s161 = smul.addr %s160, 4
      %s162 = scalar_lea.vmem %s0, %s161
      %p163 = pneg %p53
      %p164 = pneg %p50
      %s165 = sadd.s32 %s19, %s20
      %s166 = smul.u32 16, %s165
      %p167 = scmp.lt.s32.totalorder %s18, 1
      %s168 = scalar_select %p167, %s18, 1
      %p169 = scmp.lt.s32.totalorder %s166, 15
      %s170 = scalar_select %p169, %s166, 15
      %s171 = smul.addr %s168, 16
      %s172 = sadd.s32 %s170, %s171
      %s173 = smul.addr %s172, 8
      %s174 = scalar_lea.vmem %s1, %s173
      %p175 = pneg %p83
      %p176 = pneg %p80
      %p177 = pneg %p111
      %p178 = pneg %p108
      %s179 = sadd.s32 %s18, %s19
      %p180 = scmp.lt.s32.totalorder %s179, 1
      %s181 = scalar_select %p180, %s179, 1
      %s182 = scalar_lea.vmem %s2, %s181
      %p183 = scmp.lt.s32.totalorder %s18, 1
      %s184 = scalar_select %p183, %s18, 1
      %s185 = smul.addr %s184, 4
      %s186 = scalar_lea.vmem %s0, %s185
      %s187 = sadd.s32 %s19, %s20
      %s188 = smul.u32 16, %s187
      %p189 = scmp.lt.s32.totalorder %s18, 1
      %s190 = scalar_select %p189, %s18, 1
      %p191 = scmp.lt.s32.totalorder %s188, 15
      %s192 = scalar_select %p191, %s188, 15
      %s193 = smul.addr %s190, 16
      %s194 = sadd.s32 %s192, %s193
      %s195 = smul.addr %s194, 8
      %s196 = scalar_lea.vmem %s1, %s195
      %s197 = sadd.s32 %s19, %s20
      %s198 = smul.u32 16, %s197
      %s199 = sadd.s32 %s18, %s19
      %p200 = scmp.lt.s32.totalorder %s199, 1
      %s201 = scalar_select %p200, %s199, 1
      %s202 = scalar_lea.vmem %s2, %s201
      %s203 = sadd.s32 %s18, %s19
      %s204 = sadd.s32 %s19, %s20
      %p205 = scmp.eq.s32.totalorder %s20, 0
      // Predicated region
      $region29: #{tpu_custom_call.1} parent=27 // pred_check
        %p206 = pneg %p205
      $region30: #{tpu_custom_call.1} parent=27 // pred_check_branch
        %208 = sbr.rel (%p206) target = $region32
      $region31: #{tpu_custom_call.1} parent=27 // pred_region
        %v209 = vld [vmem:[%s186] sm:$0xf]
        %v210 = vmul.f32 %v209, %v209
        %vm211 = vcmask 1043456
        %v212 = vsel %vm211, %v210, 0.0
        %v213 = vrot.slane %v212, 4
        %v214 = vadd.f32 %v212, %v213
        %v215 = vrot.slane %v214, 2
        %v216 = vadd.f32 %v214, %v215
        %v217 = vrot.slane %v216, 1
        %v218 = vadd.f32 %v216, %v217
        %219 = vst [vmem:[#allocation3] sm:$0x1] %v218
        %v220 = vsel %vm211, %v209, 0.0
        %221 = vadd.xlane.f32.xlu0 %v220
        %v222 = vpop.xlane.xlu0 %221
        %v223 = vmul.f32 %v222, 0.0078125
        %v224 = vsub.f32 %v209, %v223
        %v225 = vmul.f32 %v224, %v224
        %v226 = vsel %vm211, %v225, 0.0
        %227 = vadd.xlane.f32.xlu0 %v226
        %v228 = vpop.xlane.xlu0 %227
        %v229 = vrot.slane %v228, 4
        %v230 = vadd.f32 %v228, %v229
        %v231 = vrot.slane %v230, 2
        %v232 = vadd.f32 %v230, %v231
        %v233 = vrot.slane %v232, 1
        %v234 = vadd.f32 %v232, %v233
        %s235 = vtos %v234
        %v236 = vstv %s235
        %v237 = vmul.f32 %v236, 256.0
        %v238 = vmul.f32 %v237, 6.151575e-05
        %v239 = vmax.f32 %v238, 1e-12
        %v240 = vrcp.pop %v239
        %v241 = vmul.f32 -1.0, %v240
        %vm242 = vcmask 0
        %243 = vst.msk [vmem:[#allocation2] sm:$0x1] %vm242, %v241
        %v244 = vlaneseq
        %v245 = vshrl.u32 %v244, 7
        %v246 = vadd.s32 %v245, 8
        %v247 = vadd.s32 %v245, 16
        %v248 = vadd.s32 %v245, 24
        %v249 = vadd.s32 %v245, 32
        %v250 = vadd.s32 %v245, 40
        %v251 = vadd.s32 %v245, 48
        %v252 = vadd.s32 %v245, 56
        %v253 = vadd.s32 %v245, 64
        %v254 = vadd.s32 %v245, 72
        %v255 = vadd.s32 %v245, 80
        %v256 = vadd.s32 %v245, 88
        %v257 = vadd.s32 %v245, 96
        %v258 = vadd.s32 %v245, 104
        %v259 = vadd.s32 %v245, 112
        %v260 = vadd.s32 %v245, 120
        %vm261 = vcmp.lt.s32.totalorder %v245, 64
        %vm262 = vcmp.lt.s32.totalorder %v246, 64
        %vm263 = vcmp.lt.s32.totalorder %v247, 64
        %vm264 = vcmp.lt.s32.totalorder %v248, 64
        %vm265 = vcmp.lt.s32.totalorder %v249, 64
        %vm266 = vcmp.lt.s32.totalorder %v250, 64
        %vm267 = vcmp.lt.s32.totalorder %v251, 64
        %vm268 = vcmp.lt.s32.totalorder %v252, 64
        %vm269 = vcmp.lt.s32.totalorder %v253, 64
        %vm270 = vcmp.lt.s32.totalorder %v254, 64
        %vm271 = vcmp.lt.s32.totalorder %v255, 64
        %vm272 = vcmp.lt.s32.totalorder %v256, 64
        %vm273 = vcmp.lt.s32.totalorder %v257, 64
        %vm274 = vcmp.lt.s32.totalorder %v258, 64
        %vm275 = vcmp.lt.s32.totalorder %v259, 64
        %vm276 = vcmp.lt.s32.totalorder %v260, 64
        %v277 = vsel %vm261, 1.0, -1.0
        %v278 = vsel %vm262, 1.0, -1.0
        %v279 = vsel %vm263, 1.0, -1.0
        %v280 = vsel %vm264, 1.0, -1.0
        %v281 = vsel %vm265, 1.0, -1.0
        %v282 = vsel %vm266, 1.0, -1.0
        %v283 = vsel %vm267, 1.0, -1.0
        %v284 = vsel %vm268, 1.0, -1.0
        %v285 = vsel %vm269, 1.0, -1.0
        %v286 = vsel %vm270, 1.0, -1.0
        %v287 = vsel %vm271, 1.0, -1.0
        %v288 = vsel %vm272, 1.0, -1.0
        %v289 = vsel %vm273, 1.0, -1.0
        %v290 = vsel %vm274, 1.0, -1.0
        %v291 = vsel %vm275, 1.0, -1.0
        %v292 = vsel %vm276, 1.0, -1.0
        %vm293 = vcmask 7168
        %294 = vst.msk [vmem:[#allocation4] sm:$0xff] %vm293, %v277
        %295 = vst.msk [vmem:[#allocation4 + $0x8] sm:$0xff] %vm293, %v278
        %296 = vst.msk [vmem:[#allocation4 + $0x10] sm:$0xff] %vm293, %v279
        %297 = vst.msk [vmem:[#allocation4 + $0x18] sm:$0xff] %vm293, %v280
        %298 = vst.msk [vmem:[#allocation4 + $0x20] sm:$0xff] %vm293, %v281
        %299 = vst.msk [vmem:[#allocation4 + $0x28] sm:$0xff] %vm293, %v282
        %300 = vst.msk [vmem:[#allocation4 + $0x30] sm:$0xff] %vm293, %v283
        %301 = vst.msk [vmem:[#allocation4 + $0x38] sm:$0xff] %vm293, %v284
        %302 = vst.msk [vmem:[#allocation4 + $0x40] sm:$0xff] %vm293, %v285
        %303 = vst.msk [vmem:[#allocation4 + $0x48] sm:$0xff] %vm293, %v286
        %304 = vst.msk [vmem:[#allocation4 + $0x50] sm:$0xff] %vm293, %v287
        %305 = vst.msk [vmem:[#allocation4 + $0x58] sm:$0xff] %vm293, %v288
        %306 = vst.msk [vmem:[#allocation4 + $0x60] sm:$0xff] %vm293, %v289
        %307 = vst.msk [vmem:[#allocation4 + $0x68] sm:$0xff] %vm293, %v290
        %308 = vst.msk [vmem:[#allocation4 + $0x70] sm:$0xff] %vm293, %v291
        %309 = vst.msk [vmem:[#allocation4 + $0x78] sm:$0xff] %vm293, %v292
        %310 = vst.msk [vmem:[#allocation5] sm:$0x1] %vm242, 0.0
      $region32: #{tpu_custom_call.1} parent=27 // pred_fallthru
        _
      %v311 = vld [vmem:[%s186] sm:$0xf]
      %v312 = vld [vmem:[%s196] sm:$0xff]
      %v313 = vld [vmem:[%s196 + $0x8] sm:$0xff]
      %v314 = vld [vmem:[%s196 + $0x10] sm:$0xff]
      %v315 = vld [vmem:[%s196 + $0x18] sm:$0xff]
      %v316 = vld [vmem:[%s196 + $0x20] sm:$0xff]
      %v317 = vld [vmem:[%s196 + $0x28] sm:$0xff]
      %v318 = vld [vmem:[%s196 + $0x30] sm:$0xff]
      %v319 = vld [vmem:[%s196 + $0x38] sm:$0xff]
      %v320 = vld [vmem:[%s196 + $0x40] sm:$0xff]
      %v321 = vld [vmem:[%s196 + $0x48] sm:$0xff]
      %v322 = vld [vmem:[%s196 + $0x50] sm:$0xff]
      %v323 = vld [vmem:[%s196 + $0x58] sm:$0xff]
      %v324 = vld [vmem:[%s196 + $0x60] sm:$0xff]
      %v325 = vld [vmem:[%s196 + $0x68] sm:$0xff]
      %v326 = vld [vmem:[%s196 + $0x70] sm:$0xff]
      %v327 = vld [vmem:[%s196 + $0x78] sm:$0xff]
      %v328 = vmul.f32 %v312, %v312
      %v329 = vmul.f32 %v313, %v313
      %v330 = vmul.f32 %v314, %v314
      %v331 = vmul.f32 %v315, %v315
      %v332 = vmul.f32 %v316, %v316
      %v333 = vmul.f32 %v317, %v317
      %v334 = vmul.f32 %v318, %v318
      %v335 = vmul.f32 %v319, %v319
      %v336 = vmul.f32 %v320, %v320
      %v337 = vmul.f32 %v321, %v321
      %v338 = vmul.f32 %v322, %v322
      %v339 = vmul.f32 %v323, %v323
      %v340 = vmul.f32 %v324, %v324
      %v341 = vmul.f32 %v325, %v325
      %v342 = vmul.f32 %v326, %v326
      %v343 = vmul.f32 %v327, %v327
      %vm344 = vcmask 31744
      %v345 = vsel %vm344, %v328, 0.0
      %346 = vadd.xlane.f32.xlu0 %v345
      %v347 = vpop.xlane.xlu0 %346
      %v348 = vsel %vm344, %v329, 0.0
      %349 = vadd.xlane.f32.xlu0 %v348
      %v350 = vpop.xlane.xlu0 %349
      %v351 = vsel %vm344, %v330, 0.0
      %352 = vadd.xlane.f32.xlu0 %v351
      %v353 = vpop.xlane.xlu0 %352
      %v354 = vsel %vm344, %v331, 0.0
      %355 = vadd.xlane.f32.xlu0 %v354
      %v356 = vpop.xlane.xlu0 %355
      %v357 = vsel %vm344, %v332, 0.0
      %358 = vadd.xlane.f32.xlu0 %v357
      %v359 = vpop.xlane.xlu0 %358
      %v360 = vsel %vm344, %v333, 0.0
      %361 = vadd.xlane.f32.xlu0 %v360
      %v362 = vpop.xlane.xlu0 %361
      %v363 = vsel %vm344, %v334, 0.0
      %364 = vadd.xlane.f32.xlu0 %v363
      %v365 = vpop.xlane.xlu0 %364
      %v366 = vsel %vm344, %v335, 0.0
      %367 = vadd.xlane.f32.xlu0 %v366
      %v368 = vpop.xlane.xlu0 %367
      %v369 = vsel %vm344, %v336, 0.0
      %370 = vadd.xlane.f32.xlu0 %v369
      %v371 = vpop.xlane.xlu0 %370
      %v372 = vsel %vm344, %v337, 0.0
      %373 = vadd.xlane.f32.xlu0 %v372
      %v374 = vpop.xlane.xlu0 %373
      %v375 = vsel %vm344, %v338, 0.0
      %376 = vadd.xlane.f32.xlu0 %v375
      %v377 = vpop.xlane.xlu0 %376
      %v378 = vsel %vm344, %v339, 0.0
      %379 = vadd.xlane.f32.xlu0 %v378
      %v380 = vpop.xlane.xlu0 %379
      %v381 = vsel %vm344, %v340, 0.0
      %382 = vadd.xlane.f32.xlu0 %v381
      %v383 = vpop.xlane.xlu0 %382
      %v384 = vsel %vm344, %v341, 0.0
      %385 = vadd.xlane.f32.xlu0 %v384
      %v386 = vpop.xlane.xlu0 %385
      %v387 = vsel %vm344, %v342, 0.0
      %388 = vadd.xlane.f32.xlu0 %v387
      %v389 = vpop.xlane.xlu0 %388
      %v390 = vsel %vm344, %v343, 0.0
      %391 = vadd.xlane.f32.xlu0 %v390
      %v392 = vpop.xlane.xlu0 %391
      %v393 = vmul.f32 %v312, -2.0
      %v394 = vmul.f32 %v313, -2.0
      %v395 = vmul.f32 %v314, -2.0
      %v396 = vmul.f32 %v315, -2.0
      %v397 = vmul.f32 %v316, -2.0
      %v398 = vmul.f32 %v317, -2.0
      %v399 = vmul.f32 %v318, -2.0
      %v400 = vmul.f32 %v319, -2.0
      %v401 = vmul.f32 %v320, -2.0
      %v402 = vmul.f32 %v321, -2.0
      %v403 = vmul.f32 %v322, -2.0
      %v404 = vmul.f32 %v323, -2.0
      %v405 = vmul.f32 %v324, -2.0
      %v406 = vmul.f32 %v325, -2.0
      %v407 = vmul.f32 %v326, -2.0
      %v408 = vmul.f32 %v327, -2.0
      %v410 = vsel %vm344, %v393, 0
      %v413 = vsel %vm344, %v394, 0
      %v416 = vsel %vm344, %v395, 0
      %v419 = vsel %vm344, %v396, 0
      %v422 = vsel %vm344, %v397, 0
      %v425 = vsel %vm344, %v398, 0
      %v428 = vsel %vm344, %v399, 0
      %v431 = vsel %vm344, %v400, 0
      %v434 = vsel %vm344, %v401, 0
      %v437 = vsel %vm344, %v402, 0
      %v440 = vsel %vm344, %v403, 0
      %v443 = vsel %vm344, %v404, 0
      %v446 = vsel %vm344, %v405, 0
      %v449 = vsel %vm344, %v406, 0
      %v452 = vsel %vm344, %v407, 0
      %v455 = vsel %vm344, %v408, 0
      %vm457 = vcmask 1043456
      %v459 = vsel %vm457, %v311, 0
      %461 = vmatprep.subr.mxu0 0.0
      %v462 = vand.u32 %v459, 4294901760
      %463 = vmatpush1.msra.mxu0 %v462
      %464 = vmatprep.subr.mxu0 0.0
      %465 = vmatpush1.msra.mxu0 0.0
      %466 = vmatprep.subr.mxu0 0.0
      %467 = vmatpush1.msra.mxu0 0.0
      %468 = vmatprep.subr.mxu0 0.0
      %469 = vmatpush1.msra.mxu0 0.0
      %470 = vmatprep.subr.mxu0 0.0
      %471 = vmatpush1.msra.mxu0 0.0
      %472 = vmatprep.subr.mxu0 0.0
      %473 = vmatpush1.msra.mxu0 0.0
      %474 = vmatprep.subr.mxu0 0.0
      %475 = vmatpush1.msra.mxu0 0.0
      %476 = vmatprep.subr.mxu0 0.0
      %477 = vmatpush1.msra.mxu0 0.0
      %478 = vmatprep.subr.mxu0 0.0
      %479 = vmatpush1.msra.mxu0 0.0
      %480 = vmatprep.subr.mxu0 0.0
      %481 = vmatpush1.msra.mxu0 0.0
      %482 = vmatprep.subr.mxu0 0.0
      %483 = vmatpush1.msra.mxu0 0.0
      %484 = vmatprep.subr.mxu0 0.0
      %485 = vmatpush1.msra.mxu0 0.0
      %486 = vmatprep.subr.mxu0 0.0
      %487 = vmatpush1.msra.mxu0 0.0
      %488 = vmatprep.subr.mxu0 0.0
      %489 = vmatpush1.msra.mxu0 0.0
      %490 = vmatprep.subr.mxu0 0.0
      %491 = vmatpush1.msra.mxu0 0.0
      %492 = vmatprep.subr.mxu0 0.0
      %493 = vmatpush1.msra.mxu0 0.0
      %494 = vmatprep.subr.mxu0 0.0
      %495 = vmatpush1.msra.mxu0 0.0
      %496 = vmatprep.subr.mxu0 0.0
      %497 = vmatpush1.msra.mxu0 0.0
      %498 = vmatprep.subr.mxu0 0.0
      %499 = vmatpush1.msra.mxu0 0.0
      %500 = vmatprep.subr.mxu0 0.0
      %501 = vmatpush1.msra.mxu0 0.0
      %502 = vmatprep.subr.mxu0 0.0
      %503 = vmatpush1.msra.mxu0 0.0
      %504 = vmatprep.subr.mxu0 0.0
      %505 = vmatpush1.msra.mxu0 0.0
      %506 = vmatprep.subr.mxu0 0.0
      %507 = vmatpush1.msra.mxu0 0.0
      %508 = vmatprep.subr.mxu0 0.0
      %509 = vmatpush1.msra.mxu0 0.0
      %510 = vmatprep.subr.mxu0 0.0
      %511 = vmatpush1.msra.mxu0 0.0
      %512 = vmatprep.subr.mxu0 0.0
      %513 = vmatpush1.msra.mxu0 0.0
      %514 = vmatprep.subr.mxu0 0.0
      %515 = vmatpush1.msra.mxu0 0.0
      %516 = vmatprep.subr.mxu0 0.0
      %517 = vmatpush1.msra.mxu0 0.0
      %518 = vmatprep.subr.mxu0 0.0
      %519 = vmatpush1.msra.mxu0 0.0
      %520 = vmatprep.subr.mxu0 0.0
      %521 = vmatpush1.msra.mxu0 0.0
      %522 = vmatprep.subr.mxu0 0.0
      %523 = vmatpush1.msra.mxu0 0.0
      %524 = vmatprep.subr.mxu0 0.0
      %525 = vmatpush1.msra.mxu0 0.0
      %526 = vmatprep.mubr.f32.mxu0 0.0
      %v527 = vand.u32 %v410, 4294901760
      %v528 = vsub.f32 %v410, %v527
      %v529 = vand.u32 %v528, 4294901760
      %v530 = vsub.f32 %v528, %v529
      %v531 = vand.u32 %v530, 4294901760
      %532 = vmatmul.mubr.f32.gmra.mrb[0].mxu0 %v531
      %v533 = vpop.f32.mrb[0].mxu0
      %v534 = vadd.f32 0.0, %v533
      %v535 = vpop.f32.mrb[0].mxu0
      %536 = vmatprep.mubr.f32.mxu0 0.0
      %v537 = vand.u32 %v413, 4294901760
      %v538 = vsub.f32 %v413, %v537
      %v539 = vand.u32 %v538, 4294901760
      %v540 = vsub.f32 %v538, %v539
      %v541 = vand.u32 %v540, 4294901760
      %542 = vmatmul.mubr.f32.gmra.mrb[0].mxu0 %v541
      %v543 = vpop.f32.mrb[0].mxu0
      %v544 = vadd.f32 0.0, %v543
      %v545 = vpop.f32.mrb[0].mxu0
      %546 = vmatprep.mubr.f32.mxu0 0.0
      %v547 = vand.u32 %v416, 4294901760
      %v548 = vsub.f32 %v416, %v547
      %v549 = vand.u32 %v548, 4294901760
      %v550 = vsub.f32 %v548, %v549
      %v551 = vand.u32 %v550, 4294901760
      %552 = vmatmul.mubr.f32.gmra.mrb[0].mxu0 %v551
      %v553 = vpop.f32.mrb[0].mxu0
      %v554 = vadd.f32 0.0, %v553
      %v555 = vpop.f32.mrb[0].mxu0
      %556 = vmatprep.mubr.f32.mxu0 0.0
      %v557 = vand.u32 %v419, 4294901760
      %v558 = vsub.f32 %v419, %v557
      %v559 = vand.u32 %v558, 4294901760
      %v560 = vsub.f32 %v558, %v559
      %v561 = vand.u32 %v560, 4294901760
      %562 = vmatmul.mubr.f32.gmra.mrb[0].mxu0 %v561
      %v563 = vpop.f32.mrb[0].mxu0
      %v564 = vadd.f32 0.0, %v563
      %v565 = vpop.f32.mrb[0].mxu0
      %566 = vmatprep.mubr.f32.mxu0 0.0
      %v567 = vand.u32 %v422, 4294901760
      %v568 = vsub.f32 %v422, %v567
      %v569 = vand.u32 %v568, 4294901760
      %v570 = vsub.f32 %v568, %v569
      %v571 = vand.u32 %v570, 4294901760
      %572 = vmatmul.mubr.f32.gmra.mrb[0].mxu0 %v571
      %v573 = vpop.f32.mrb[0].mxu0
      %v574 = vadd.f32 0.0, %v573
      %v575 = vpop.f32.mrb[0].mxu0
      %576 = vmatprep.mubr.f32.mxu0 0.0
      %v577 = vand.u32 %v425, 4294901760
      %v578 = vsub.f32 %v425, %v577
      %v579 = vand.u32 %v578, 4294901760
      %v580 = vsub.f32 %v578, %v579
      %v581 = vand.u32 %v580, 4294901760
      %582 = vmatmul.mubr.f32.gmra.mrb[0].mxu0 %v581
      %v583 = vpop.f32.mrb[0].mxu0
      %v584 = vadd.f32 0.0, %v583
      %v585 = vpop.f32.mrb[0].mxu0
      %586 = vmatprep.mubr.f32.mxu0 0.0
      %v587 = vand.u32 %v428, 4294901760
      %v588 = vsub.f32 %v428, %v587
      %v589 = vand.u32 %v588, 4294901760
      %v590 = vsub.f32 %v588, %v589
      %v591 = vand.u32 %v590, 4294901760
      %592 = vmatmul.mubr.f32.gmra.mrb[0].mxu0 %v591
      %v593 = vpop.f32.mrb[0].mxu0
      %v594 = vadd.f32 0.0, %v593
      %v595 = vpop.f32.mrb[0].mxu0
      %596 = vmatprep.mubr.f32.mxu0 0.0
      %v597 = vand.u32 %v431, 4294901760
      %v598 = vsub.f32 %v431, %v597
      %v599 = vand.u32 %v598, 4294901760
      %v600 = vsub.f32 %v598, %v599
      %v601 = vand.u32 %v600, 4294901760
      %602 = vmatmul.mubr.f32.gmra.mrb[0].mxu0 %v601
      %v603 = vpop.f32.mrb[0].mxu0
      %v604 = vadd.f32 0.0, %v603
      %v605 = vpop.f32.mrb[0].mxu0
      %606 = vmatprep.mubr.f32.mxu0 0.0
      %v607 = vand.u32 %v434, 4294901760
      %v608 = vsub.f32 %v434, %v607
      %v609 = vand.u32 %v608, 4294901760
      %v610 = vsub.f32 %v608, %v609
      %v611 = vand.u32 %v610, 4294901760
      %612 = vmatmul.mubr.f32.gmra.mrb[0].mxu0 %v611
      %v613 = vpop.f32.mrb[0].mxu0
      %v614 = vadd.f32 0.0, %v613
      %v615 = vpop.f32.mrb[0].mxu0
      %616 = vmatprep.mubr.f32.mxu0 0.0
      %v617 = vand.u32 %v437, 4294901760
      %v618 = vsub.f32 %v437, %v617
      %v619 = vand.u32 %v618, 4294901760
      %v620 = vsub.f32 %v618, %v619
      %v621 = vand.u32 %v620, 4294901760
      %622 = vmatmul.mubr.f32.gmra.mrb[0].mxu0 %v621
      %v623 = vpop.f32.mrb[0].mxu0
      %v624 = vadd.f32 0.0, %v623
      %v625 = vpop.f32.mrb[0].mxu0
      %626 = vmatprep.mubr.f32.mxu0 0.0
      %v627 = vand.u32 %v440, 4294901760
      %v628 = vsub.f32 %v440, %v627
      %v629 = vand.u32 %v628, 4294901760
      %v630 = vsub.f32 %v628, %v629
      %v631 = vand.u32 %v630, 4294901760
      %632 = vmatmul.mubr.f32.gmra.mrb[0].mxu0 %v631
      %v633 = vpop.f32.mrb[0].mxu0
      %v634 = vadd.f32 0.0, %v633
      %v635 = vpop.f32.mrb[0].mxu0
      %636 = vmatprep.mubr.f32.mxu0 0.0
      %v637 = vand.u32 %v443, 4294901760
      %v638 = vsub.f32 %v443, %v637
      %v639 = vand.u32 %v638, 4294901760
      %v640 = vsub.f32 %v638, %v639
      %v641 = vand.u32 %v640, 4294901760
      %642 = vmatmul.mubr.f32.gmra.mrb[0].mxu0 %v641
      %v643 = vpop.f32.mrb[0].mxu0
      %v644 = vadd.f32 0.0, %v643
      %v645 = vpop.f32.mrb[0].mxu0
      %646 = vmatprep.mubr.f32.mxu0 0.0
      %v647 = vand.u32 %v446, 4294901760
      %v648 = vsub.f32 %v446, %v647
      %v649 = vand.u32 %v648, 4294901760
      %v650 = vsub.f32 %v648, %v649
      %v651 = vand.u32 %v650, 4294901760
      %652 = vmatmul.mubr.f32.gmra.mrb[0].mxu0 %v651
      %v653 = vpop.f32.mrb[0].mxu0
      %v654 = vadd.f32 0.0, %v653
      %v655 = vpop.f32.mrb[0].mxu0
      %656 = vmatprep.mubr.f32.mxu0 0.0
      %v657 = vand.u32 %v449, 4294901760
      %v658 = vsub.f32 %v449, %v657
      %v659 = vand.u32 %v658, 4294901760
      %v660 = vsub.f32 %v658, %v659
      %v661 = vand.u32 %v660, 4294901760
      %662 = vmatmul.mubr.f32.gmra.mrb[0].mxu0 %v661
      %v663 = vpop.f32.mrb[0].mxu0
      %v664 = vadd.f32 0.0, %v663
      %v665 = vpop.f32.mrb[0].mxu0
      %666 = vmatprep.mubr.f32.mxu0 0.0
      %v667 = vand.u32 %v452, 4294901760
      %v668 = vsub.f32 %v452, %v667
      %v669 = vand.u32 %v668, 4294901760
      %v670 = vsub.f32 %v668, %v669
      %v671 = vand.u32 %v670, 4294901760
      %672 = vmatmul.mubr.f32.gmra.mrb[0].mxu0 %v671
      %v673 = vpop.f32.mrb[0].mxu0
      %v674 = vadd.f32 0.0, %v673
      %v675 = vpop.f32.mrb[0].mxu0
      %676 = vmatprep.mubr.f32.mxu0 0.0
      %v677 = vand.u32 %v455, 4294901760
      %v678 = vsub.f32 %v455, %v677
      %v679 = vand.u32 %v678, 4294901760
      %v680 = vsub.f32 %v678, %v679
      %v681 = vand.u32 %v680, 4294901760
      %682 = vmatmul.mubr.f32.gmra.mrb[0].mxu0 %v681
      %v683 = vpop.f32.mrb[0].mxu0
      %v684 = vadd.f32 0.0, %v683
      %v685 = vpop.f32.mrb[0].mxu0
      %686 = vdwg.mxu0
      %687 = vmatprep.subr.mxu0 0.0
      %v688 = vand.u32 %v459, 4294901760
      %v689 = vsub.f32 %v459, %v688
      %v690 = vand.u32 %v689, 4294901760
      %v691 = vsub.f32 %v689, %v690
      %v692 = vand.u32 %v691, 4294901760
      %693 = vmatpush1.msra.mxu0 %v692
      %694 = vmatprep.subr.mxu0 0.0
      %695 = vmatpush1.msra.mxu0 0.0
      %696 = vmatprep.subr.mxu0 0.0
      %697 = vmatpush1.msra.mxu0 0.0
      %698 = vmatprep.subr.mxu0 0.0
      %699 = vmatpush1.msra.mxu0 0.0
      %700 = vmatprep.subr.mxu0 0.0
      %701 = vmatpush1.msra.mxu0 0.0
      %702 = vmatprep.subr.mxu0 0.0
      %703 = vmatpush1.msra.mxu0 0.0
      %704 = vmatprep.subr.mxu0 0.0
      %705 = vmatpush1.msra.mxu0 0.0
      %706 = vmatprep.subr.mxu0 0.0
      %707 = vmatpush1.msra.mxu0 0.0
      %708 = vmatprep.subr.mxu0 0.0
      %709 = vmatpush1.msra.mxu0 0.0
      %710 = vmatprep.subr.mxu0 0.0
      %711 = vmatpush1.msra.mxu0 0.0
      %712 = vmatprep.subr.mxu0 0.0
      %713 = vmatpush1.msra.mxu0 0.0
      %714 = vmatprep.subr.mxu0 0.0
      %715 = vmatpush1.msra.mxu0 0.0
      %716 = vmatprep.subr.mxu0 0.0
      %717 = vmatpush1.msra.mxu0 0.0
      %718 = vmatprep.subr.mxu0 0.0
      %719 = vmatpush1.msra.mxu0 0.0
      %720 = vmatprep.subr.mxu0 0.0
      %721 = vmatpush1.msra.mxu0 0.0
      %722 = vmatprep.subr.mxu0 0.0
      %723 = vmatpush1.msra.mxu0 0.0
      %724 = vmatprep.subr.mxu0 0.0
      %725 = vmatpush1.msra.mxu0 0.0
      %726 = vmatprep.subr.mxu0 0.0
      %727 = vmatpush1.msra.mxu0 0.0
      %728 = vmatprep.subr.mxu0 0.0
      %729 = vmatpush1.msra.mxu0 0.0
      %730 = vmatprep.subr.mxu0 0.0
      %731 = vmatpush1.msra.mxu0 0.0
      %732 = vmatprep.subr.mxu0 0.0
      %733 = vmatpush1.msra.mxu0 0.0
      %734 = vmatprep.subr.mxu0 0.0
      %735 = vmatpush1.msra.mxu0 0.0
      %736 = vmatprep.subr.mxu0 0.0
      %737 = vmatpush1.msra.mxu0 0.0
      %738 = vmatprep.subr.mxu0 0.0
      %739 = vmatpush1.msra.mxu0 0.0
      %740 = vmatprep.subr.mxu0 0.0
      %741 = vmatpush1.msra.mxu0 0.0
      %742 = vmatprep.subr.mxu0 0.0
      %743 = vmatpush1.msra.mxu0 0.0
      %744 = vmatprep.subr.mxu0 0.0
      %745 = vmatpush1.msra.mxu0 0.0
      %746 = vmatprep.subr.mxu0 0.0
      %747 = vmatpush1.msra.mxu0 0.0
      %748 = vmatprep.subr.mxu0 0.0
      %749 = vmatpush1.msra.mxu0 0.0
      %750 = vmatprep.subr.mxu0 0.0
      %751 = vmatpush1.msra.mxu0 0.0
      %752 = vmatprep.subr.mxu0 0.0
      %753 = vmatpush1.msra.mxu0 0.0
      %754 = vmatprep.subr.mxu0 0.0
      %755 = vmatpush1.msra.mxu0 0.0
      %756 = vmatprep.mubr.f32.mxu0 0.0
      %v757 = vand.u32 %v410, 4294901760
      %758 = vmatmul.mubr.f32.gmra.mrb[0].mxu0 %v757
      %v759 = vpop.f32.mrb[0].mxu0
      %v760 = vadd.f32 %v534, %v759
      %v761 = vpop.f32.mrb[0].mxu0
      %762 = vmatprep.mubr.f32.mxu0 0.0
      %v763 = vand.u32 %v413, 4294901760
      %764 = vmatmul.mubr.f32.gmra.mrb[0].mxu0 %v763
      %v765 = vpop.f32.mrb[0].mxu0
      %v766 = vadd.f32 %v544, %v765
      %v767 = vpop.f32.mrb[0].mxu0
      %768 = vmatprep.mubr.f32.mxu0 0.0
      %v769 = vand.u32 %v416, 4294901760
      %770 = vmatmul.mubr.f32.gmra.mrb[0].mxu0 %v769
      %v771 = vpop.f32.mrb[0].mxu0
      %v772 = vadd.f32 %v554, %v771
      %v773 = vpop.f32.mrb[0].mxu0
      %774 = vmatprep.mubr.f32.mxu0 0.0
      %v775 = vand.u32 %v419, 4294901760
      %776 = vmatmul.mubr.f32.gmra.mrb[0].mxu0 %v775
      %v777 = vpop.f32.mrb[0].mxu0
      %v778 = vadd.f32 %v564, %v777
      %v779 = vpop.f32.mrb[0].mxu0
      %780 = vmatprep.mubr.f32.mxu0 0.0
      %v781 = vand.u32 %v422, 4294901760
      %782 = vmatmul.mubr.f32.gmra.mrb[0].mxu0 %v781
      %v783 = vpop.f32.mrb[0].mxu0
      %v784 = vadd.f32 %v574, %v783
      %v785 = vpop.f32.mrb[0].mxu0
      %786 = vmatprep.mubr.f32.mxu0 0.0
      %v787 = vand.u32 %v425, 4294901760
      %788 = vmatmul.mubr.f32.gmra.mrb[0].mxu0 %v787
      %v789 = vpop.f32.mrb[0].mxu0
      %v790 = vadd.f32 %v584, %v789
      %v791 = vpop.f32.mrb[0].mxu0
      %792 = vmatprep.mubr.f32.mxu0 0.0
      %v793 = vand.u32 %v428, 4294901760
      %794 = vmatmul.mubr.f32.gmra.mrb[0].mxu0 %v793
      %v795 = vpop.f32.mrb[0].mxu0
      %v796 = vadd.f32 %v594, %v795
      %v797 = vpop.f32.mrb[0].mxu0
      %798 = vmatprep.mubr.f32.mxu0 0.0
      %v799 = vand.u32 %v431, 4294901760
      %800 = vmatmul.mubr.f32.gmra.mrb[0].mxu0 %v799
      %v801 = vpop.f32.mrb[0].mxu0
      %v802 = vadd.f32 %v604, %v801
      %v803 = vpop.f32.mrb[0].mxu0
      %804 = vmatprep.mubr.f32.mxu0 0.0
      %v805 = vand.u32 %v434, 4294901760
      %806 = vmatmul.mubr.f32.gmra.mrb[0].mxu0 %v805
      %v807 = vpop.f32.mrb[0].mxu0
      %v808 = vadd.f32 %v614, %v807
      %v809 = vpop.f32.mrb[0].mxu0
      %810 = vmatprep.mubr.f32.mxu0 0.0
      %v811 = vand.u32 %v437, 4294901760
      %812 = vmatmul.mubr.f32.gmra.mrb[0].mxu0 %v811
      %v813 = vpop.f32.mrb[0].mxu0
      %v814 = vadd.f32 %v624, %v813
      %v815 = vpop.f32.mrb[0].mxu0
      %816 = vmatprep.mubr.f32.mxu0 0.0
      %v817 = vand.u32 %v440, 4294901760
      %818 = vmatmul.mubr.f32.gmra.mrb[0].mxu0 %v817
      %v819 = vpop.f32.mrb[0].mxu0
      %v820 = vadd.f32 %v634, %v819
      %v821 = vpop.f32.mrb[0].mxu0
      %822 = vmatprep.mubr.f32.mxu0 0.0
      %v823 = vand.u32 %v443, 4294901760
      %824 = vmatmul.mubr.f32.gmra.mrb[0].mxu0 %v823
      %v825 = vpop.f32.mrb[0].mxu0
      %v826 = vadd.f32 %v644, %v825
      %v827 = vpop.f32.mrb[0].mxu0
      %828 = vmatprep.mubr.f32.mxu0 0.0
      %v829 = vand.u32 %v446, 4294901760
      %830 = vmatmul.mubr.f32.gmra.mrb[0].mxu0 %v829
      %v831 = vpop.f32.mrb[0].mxu0
      %v832 = vadd.f32 %v654, %v831
      %v833 = vpop.f32.mrb[0].mxu0
      %834 = vmatprep.mubr.f32.mxu0 0.0
      %v835 = vand.u32 %v449, 4294901760
      %836 = vmatmul.mubr.f32.gmra.mrb[0].mxu0 %v835
      %v837 = vpop.f32.mrb[0].mxu0
      %v838 = vadd.f32 %v664, %v837
      %v839 = vpop.f32.mrb[0].mxu0
      %840 = vmatprep.mubr.f32.mxu0 0.0
      %v841 = vand.u32 %v452, 4294901760
      %842 = vmatmul.mubr.f32.gmra.mrb[0].mxu0 %v841
      %v843 = vpop.f32.mrb[0].mxu0
      %v844 = vadd.f32 %v674, %v843
      %v845 = vpop.f32.mrb[0].mxu0
      %846 = vmatprep.mubr.f32.mxu0 0.0
      %v847 = vand.u32 %v455, 4294901760
      %848 = vmatmul.mubr.f32.gmra.mrb[0].mxu0 %v847
      %v849 = vpop.f32.mrb[0].mxu0
      %v850 = vadd.f32 %v684, %v849
      %v851 = vpop.f32.mrb[0].mxu0
      %852 = vdwg.mxu0
      %853 = vmatprep.subr.mxu0 0.0
      %v854 = vand.u32 %v459, 4294901760
      %v855 = vsub.f32 %v459, %v854
      %856 = vmatpush1.msra.mxu0 %v855
      %857 = vmatprep.subr.mxu0 0.0
      %858 = vmatpush1.msra.mxu0 0.0
      %859 = vmatprep.subr.mxu0 0.0
      %860 = vmatpush1.msra.mxu0 0.0
      %861 = vmatprep.subr.mxu0 0.0
      %862 = vmatpush1.msra.mxu0 0.0
      %863 = vmatprep.subr.mxu0 0.0
      %864 = vmatpush1.msra.mxu0 0.0
      %865 = vmatprep.subr.mxu0 0.0
      %866 = vmatpush1.msra.mxu0 0.0
      %867 = vmatprep.subr.mxu0 0.0
      %868 = vmatpush1.msra.mxu0 0.0
      %869 = vmatprep.subr.mxu0 0.0
      %870 = vmatpush1.msra.mxu0 0.0
      %871 = vmatprep.subr.mxu0 0.0
      %872 = vmatpush1.msra.mxu0 0.0
      %873 = vmatprep.subr.mxu0 0.0
      %874 = vmatpush1.msra.mxu0 0.0
      %875 = vmatprep.subr.mxu0 0.0
      %876 = vmatpush1.msra.mxu0 0.0
      %877 = vmatprep.subr.mxu0 0.0
      %878 = vmatpush1.msra.mxu0 0.0
      %879 = vmatprep.subr.mxu0 0.0
      %880 = vmatpush1.msra.mxu0 0.0
      %881 = vmatprep.subr.mxu0 0.0
      %882 = vmatpush1.msra.mxu0 0.0
      %883 = vmatprep.subr.mxu0 0.0
      %884 = vmatpush1.msra.mxu0 0.0
      %885 = vmatprep.subr.mxu0 0.0
      %886 = vmatpush1.msra.mxu0 0.0
      %887 = vmatprep.subr.mxu0 0.0
      %888 = vmatpush1.msra.mxu0 0.0
      %889 = vmatprep.subr.mxu0 0.0
      %890 = vmatpush1.msra.mxu0 0.0
      %891 = vmatprep.subr.mxu0 0.0
      %892 = vmatpush1.msra.mxu0 0.0
      %893 = vmatprep.subr.mxu0 0.0
      %894 = vmatpush1.msra.mxu0 0.0
      %895 = vmatprep.subr.mxu0 0.0
      %896 = vmatpush1.msra.mxu0 0.0
      %897 = vmatprep.subr.mxu0 0.0
      %898 = vmatpush1.msra.mxu0 0.0
      %899 = vmatprep.subr.mxu0 0.0
      %900 = vmatpush1.msra.mxu0 0.0
      %901 = vmatprep.subr.mxu0 0.0
      %902 = vmatpush1.msra.mxu0 0.0
      %903 = vmatprep.subr.mxu0 0.0
      %904 = vmatpush1.msra.mxu0 0.0
      %905 = vmatprep.subr.mxu0 0.0
      %906 = vmatpush1.msra.mxu0 0.0
      %907 = vmatprep.subr.mxu0 0.0
      %908 = vmatpush1.msra.mxu0 0.0
      %909 = vmatprep.subr.mxu0 0.0
      %910 = vmatpush1.msra.mxu0 0.0
      %911 = vmatprep.subr.mxu0 0.0
      %912 = vmatpush1.msra.mxu0 0.0
      %913 = vmatprep.subr.mxu0 0.0
      %914 = vmatpush1.msra.mxu0 0.0
      %915 = vmatprep.subr.mxu0 0.0
      %916 = vmatpush1.msra.mxu0 0.0
      %917 = vmatprep.subr.mxu0 0.0
      %918 = vmatpush1.msra.mxu0 0.0
      %919 = vmatprep.mubr.f32.mxu0 0.0
      %v920 = vand.u32 %v410, 4294901760
      %v921 = vsub.f32 %v410, %v920
      %922 = vmatmul.mubr.f32.gmra.mrb[0].mxu0 %v921
      %v923 = vpop.f32.mrb[0].mxu0
      %v924 = vadd.f32 %v760, %v923
      %v925 = vpop.f32.mrb[0].mxu0
      %926 = vmatprep.mubr.f32.mxu0 0.0
      %v927 = vand.u32 %v413, 4294901760
      %v928 = vsub.f32 %v413, %v927
      %929 = vmatmul.mubr.f32.gmra.mrb[0].mxu0 %v928
      %v930 = vpop.f32.mrb[0].mxu0
      %v931 = vadd.f32 %v766, %v930
      %v932 = vpop.f32.mrb[0].mxu0
      %933 = vmatprep.mubr.f32.mxu0 0.0
      %v934 = vand.u32 %v416, 4294901760
      %v935 = vsub.f32 %v416, %v934
      %936 = vmatmul.mubr.f32.gmra.mrb[0].mxu0 %v935
      %v937 = vpop.f32.mrb[0].mxu0
      %v938 = vadd.f32 %v772, %v937
      %v939 = vpop.f32.mrb[0].mxu0
      %940 = vmatprep.mubr.f32.mxu0 0.0
      %v941 = vand.u32 %v419, 4294901760
      %v942 = vsub.f32 %v419, %v941
      %943 = vmatmul.mubr.f32.gmra.mrb[0].mxu0 %v942
      %v944 = vpop.f32.mrb[0].mxu0
      %v945 = vadd.f32 %v778, %v944
      %v946 = vpop.f32.mrb[0].mxu0
      %947 = vmatprep.mubr.f32.mxu0 0.0
      %v948 = vand.u32 %v422, 4294901760
      %v949 = vsub.f32 %v422, %v948
      %950 = vmatmul.mubr.f32.gmra.mrb[0].mxu0 %v949
      %v951 = vpop.f32.mrb[0].mxu0
      %v952 = vadd.f32 %v784, %v951
      %v953 = vpop.f32.mrb[0].mxu0
      %954 = vmatprep.mubr.f32.mxu0 0.0
      %v955 = vand.u32 %v425, 4294901760
      %v956 = vsub.f32 %v425, %v955
      %957 = vmatmul.mubr.f32.gmra.mrb[0].mxu0 %v956
      %v958 = vpop.f32.mrb[0].mxu0
      %v959 = vadd.f32 %v790, %v958
      %v960 = vpop.f32.mrb[0].mxu0
      %961 = vmatprep.mubr.f32.mxu0 0.0
      %v962 = vand.u32 %v428, 4294901760
      %v963 = vsub.f32 %v428, %v962
      %964 = vmatmul.mubr.f32.gmra.mrb[0].mxu0 %v963
      %v965 = vpop.f32.mrb[0].mxu0
      %v966 = vadd.f32 %v796, %v965
      %v967 = vpop.f32.mrb[0].mxu0
      %968 = vmatprep.mubr.f32.mxu0 0.0
      %v969 = vand.u32 %v431, 4294901760
      %v970 = vsub.f32 %v431, %v969
      %971 = vmatmul.mubr.f32.gmra.mrb[0].mxu0 %v970
      %v972 = vpop.f32.mrb[0].mxu0
      %v973 = vadd.f32 %v802, %v972
      %v974 = vpop.f32.mrb[0].mxu0
      %975 = vmatprep.mubr.f32.mxu0 0.0
      %v976 = vand.u32 %v434, 4294901760
      %v977 = vsub.f32 %v434, %v976
      %978 = vmatmul.mubr.f32.gmra.mrb[0].mxu0 %v977
      %v979 = vpop.f32.mrb[0].mxu0
      %v980 = vadd.f32 %v808, %v979
      %v981 = vpop.f32.mrb[0].mxu0
      %982 = vmatprep.mubr.f32.mxu0 0.0
      %v983 = vand.u32 %v437, 4294901760
      %v984 = vsub.f32 %v437, %v983
      %985 = vmatmul.mubr.f32.gmra.mrb[0].mxu0 %v984
      %v986 = vpop.f32.mrb[0].mxu0
      %v987 = vadd.f32 %v814, %v986
      %v988 = vpop.f32.mrb[0].mxu0
      %989 = vmatprep.mubr.f32.mxu0 0.0
      %v990 = vand.u32 %v440, 4294901760
      %v991 = vsub.f32 %v440, %v990
      %992 = vmatmul.mubr.f32.gmra.mrb[0].mxu0 %v991
      %v993 = vpop.f32.mrb[0].mxu0
      %v994 = vadd.f32 %v820, %v993
      %v995 = vpop.f32.mrb[0].mxu0
      %996 = vmatprep.mubr.f32.mxu0 0.0
      %v997 = vand.u32 %v443, 4294901760
      %v998 = vsub.f32 %v443, %v997
      %999 = vmatmul.mubr.f32.gmra.mrb[0].mxu0 %v998
      %v1000 = vpop.f32.mrb[0].mxu0
      %v1001 = vadd.f32 %v826, %v1000
      %v1002 = vpop.f32.mrb[0].mxu0
      %1003 = vmatprep.mubr.f32.mxu0 0.0
      %v1004 = vand.u32 %v446, 4294901760
      %v1005 = vsub.f32 %v446, %v1004
      %1006 = vmatmul.mubr.f32.gmra.mrb[0].mxu0 %v1005
      %v1007 = vpop.f32.mrb[0].mxu0
      %v1008 = vadd.f32 %v832, %v1007
      %v1009 = vpop.f32.mrb[0].mxu0
      %1010 = vmatprep.mubr.f32.mxu0 0.0
      %v1011 = vand.u32 %v449, 4294901760
      %v1012 = vsub.f32 %v449, %v1011
      %1013 = vmatmul.mubr.f32.gmra.mrb[0].mxu0 %v1012
      %v1014 = vpop.f32.mrb[0].mxu0
      %v1015 = vadd.f32 %v838, %v1014
      %v1016 = vpop.f32.mrb[0].mxu0
      %1017 = vmatprep.mubr.f32.mxu0 0.0
      %v1018 = vand.u32 %v452, 4294901760
      %v1019 = vsub.f32 %v452, %v1018
      %1020 = vmatmul.mubr.f32.gmra.mrb[0].mxu0 %v1019
      %v1021 = vpop.f32.mrb[0].mxu0
      %v1022 = vadd.f32 %v844, %v1021
      %v1023 = vpop.f32.mrb[0].mxu0
      %1024 = vmatprep.mubr.f32.mxu0 0.0
      %v1025 = vand.u32 %v455, 4294901760
      %v1026 = vsub.f32 %v455, %v1025
      %1027 = vmatmul.mubr.f32.gmra.mrb[0].mxu0 %v1026
      %v1028 = vpop.f32.mrb[0].mxu0
      %v1029 = vadd.f32 %v850, %v1028
      %v1030 = vpop.f32.mrb[0].mxu0
      %1031 = vdwg.mxu0
      %1032 = vmatprep.subr.mxu0 0.0
      %v1033 = vand.u32 %v459, 4294901760
      %1034 = vmatpush1.msra.mxu0 %v1033
      %1035 = vmatprep.subr.mxu0 0.0
      %1036 = vmatpush1.msra.mxu0 0.0
      %1037 = vmatprep.subr.mxu0 0.0
      %1038 = vmatpush1.msra.mxu0 0.0
      %1039 = vmatprep.subr.mxu0 0.0
      %1040 = vmatpush1.msra.mxu0 0.0
      %1041 = vmatprep.subr.mxu0 0.0
      %1042 = vmatpush1.msra.mxu0 0.0
      %1043 = vmatprep.subr.mxu0 0.0
      %1044 = vmatpush1.msra.mxu0 0.0
      %1045 = vmatprep.subr.mxu0 0.0
      %1046 = vmatpush1.msra.mxu0 0.0
      %1047 = vmatprep.subr.mxu0 0.0
      %1048 = vmatpush1.msra.mxu0 0.0
      %1049 = vmatprep.subr.mxu0 0.0
      %1050 = vmatpush1.msra.mxu0 0.0
      %1051 = vmatprep.subr.mxu0 0.0
      %1052 = vmatpush1.msra.mxu0 0.0
      %1053 = vmatprep.subr.mxu0 0.0
      %1054 = vmatpush1.msra.mxu0 0.0
      %1055 = vmatprep.subr.mxu0 0.0
      %1056 = vmatpush1.msra.mxu0 0.0
      %1057 = vmatprep.subr.mxu0 0.0
      %1058 = vmatpush1.msra.mxu0 0.0
      %1059 = vmatprep.subr.mxu0 0.0
      %1060 = vmatpush1.msra.mxu0 0.0
      %1061 = vmatprep.subr.mxu0 0.0
      %1062 = vmatpush1.msra.mxu0 0.0
      %1063 = vmatprep.subr.mxu0 0.0
      %1064 = vmatpush1.msra.mxu0 0.0
      %1065 = vmatprep.subr.mxu0 0.0
      %1066 = vmatpush1.msra.mxu0 0.0
      %1067 = vmatprep.subr.mxu0 0.0
      %1068 = vmatpush1.msra.mxu0 0.0
      %1069 = vmatprep.subr.mxu0 0.0
      %1070 = vmatpush1.msra.mxu0 0.0
      %1071 = vmatprep.subr.mxu0 0.0
      %1072 = vmatpush1.msra.mxu0 0.0
      %1073 = vmatprep.subr.mxu0 0.0
      %1074 = vmatpush1.msra.mxu0 0.0
      %1075 = vmatprep.subr.mxu0 0.0
      %1076 = vmatpush1.msra.mxu0 0.0
      %1077 = vmatprep.subr.mxu0 0.0
      %1078 = vmatpush1.msra.mxu0 0.0
      %1079 = vmatprep.subr.mxu0 0.0
      %1080 = vmatpush1.msra.mxu0 0.0
      %1081 = vmatprep.subr.mxu0 0.0
      %1082 = vmatpush1.msra.mxu0 0.0
      %1083 = vmatprep.subr.mxu0 0.0
      %1084 = vmatpush1.msra.mxu0 0.0
      %1085 = vmatprep.subr.mxu0 0.0
      %1086 = vmatpush1.msra.mxu0 0.0
      %1087 = vmatprep.subr.mxu0 0.0
      %1088 = vmatpush1.msra.mxu0 0.0
      %1089 = vmatprep.subr.mxu0 0.0
      %1090 = vmatpush1.msra.mxu0 0.0
      %1091 = vmatprep.subr.mxu0 0.0
      %1092 = vmatpush1.msra.mxu0 0.0
      %1093 = vmatprep.subr.mxu0 0.0
      %1094 = vmatpush1.msra.mxu0 0.0
      %1095 = vmatprep.subr.mxu0 0.0
      %1096 = vmatpush1.msra.mxu0 0.0
      %1097 = vmatprep.mubr.f32.mxu0 0.0
      %v1098 = vand.u32 %v410, 4294901760
      %v1099 = vsub.f32 %v410, %v1098
      %v1100 = vand.u32 %v1099, 4294901760
      %1101 = vmatmul.mubr.f32.gmra.mrb[0].mxu0 %v1100
      %v1102 = vpop.f32.mrb[0].mxu0
      %v1103 = vadd.f32 %v924, %v1102
      %v1104 = vpop.f32.mrb[0].mxu0
      %1105 = vmatprep.mubr.f32.mxu0 0.0
      %v1106 = vand.u32 %v413, 4294901760
      %v1107 = vsub.f32 %v413, %v1106
      %v1108 = vand.u32 %v1107, 4294901760
      %1109 = vmatmul.mubr.f32.gmra.mrb[0].mxu0 %v1108
      %v1110 = vpop.f32.mrb[0].mxu0
      %v1111 = vadd.f32 %v931, %v1110
      %v1112 = vpop.f32.mrb[0].mxu0
      %1113 = vmatprep.mubr.f32.mxu0 0.0
      %v1114 = vand.u32 %v416, 4294901760
      %v1115 = vsub.f32 %v416, %v1114
      %v1116 = vand.u32 %v1115, 4294901760
      %1117 = vmatmul.mubr.f32.gmra.mrb[0].mxu0 %v1116
      %v1118 = vpop.f32.mrb[0].mxu0
      %v1119 = vadd.f32 %v938, %v1118
      %v1120 = vpop.f32.mrb[0].mxu0
      %1121 = vmatprep.mubr.f32.mxu0 0.0
      %v1122 = vand.u32 %v419, 4294901760
      %v1123 = vsub.f32 %v419, %v1122
      %v1124 = vand.u32 %v1123, 4294901760
      %1125 = vmatmul.mubr.f32.gmra.mrb[0].mxu0 %v1124
      %v1126 = vpop.f32.mrb[0].mxu0
      %v1127 = vadd.f32 %v945, %v1126
      %v1128 = vpop.f32.mrb[0].mxu0
      %1129 = vmatprep.mubr.f32.mxu0 0.0
      %v1130 = vand.u32 %v422, 4294901760
      %v1131 = vsub.f32 %v422, %v1130
      %v1132 = vand.u32 %v1131, 4294901760
      %1133 = vmatmul.mubr.f32.gmra.mrb[0].mxu0 %v1132
      %v1134 = vpop.f32.mrb[0].mxu0
      %v1135 = vadd.f32 %v952, %v1134
      %v1136 = vpop.f32.mrb[0].mxu0
      %1137 = vmatprep.mubr.f32.mxu0 0.0
      %v1138 = vand.u32 %v425, 4294901760
      %v1139 = vsub.f32 %v425, %v1138
      %v1140 = vand.u32 %v1139, 4294901760
      %1141 = vmatmul.mubr.f32.gmra.mrb[0].mxu0 %v1140
      %v1142 = vpop.f32.mrb[0].mxu0
      %v1143 = vadd.f32 %v959, %v1142
      %v1144 = vpop.f32.mrb[0].mxu0
      %1145 = vmatprep.mubr.f32.mxu0 0.0
      %v1146 = vand.u32 %v428, 4294901760
      %v1147 = vsub.f32 %v428, %v1146
      %v1148 = vand.u32 %v1147, 4294901760
      %1149 = vmatmul.mubr.f32.gmra.mrb[0].mxu0 %v1148
      %v1150 = vpop.f32.mrb[0].mxu0
      %v1151 = vadd.f32 %v966, %v1150
      %v1152 = vpop.f32.mrb[0].mxu0
      %1153 = vmatprep.mubr.f32.mxu0 0.0
      %v1154 = vand.u32 %v431, 4294901760
      %v1155 = vsub.f32 %v431, %v1154
      %v1156 = vand.u32 %v1155, 4294901760
      %1157 = vmatmul.mubr.f32.gmra.mrb[0].mxu0 %v1156
      %v1158 = vpop.f32.mrb[0].mxu0
      %v1159 = vadd.f32 %v973, %v1158
      %v1160 = vpop.f32.mrb[0].mxu0
      %1161 = vmatprep.mubr.f32.mxu0 0.0
      %v1162 = vand.u32 %v434, 4294901760
      %v1163 = vsub.f32 %v434, %v1162
      %v1164 = vand.u32 %v1163, 4294901760
      %1165 = vmatmul.mubr.f32.gmra.mrb[0].mxu0 %v1164
      %v1166 = vpop.f32.mrb[0].mxu0
      %v1167 = vadd.f32 %v980, %v1166
      %v1168 = vpop.f32.mrb[0].mxu0
      %1169 = vmatprep.mubr.f32.mxu0 0.0
      %v1170 = vand.u32 %v437, 4294901760
      %v1171 = vsub.f32 %v437, %v1170
      %v1172 = vand.u32 %v1171, 4294901760
      %1173 = vmatmul.mubr.f32.gmra.mrb[0].mxu0 %v1172
      %v1174 = vpop.f32.mrb[0].mxu0
      %v1175 = vadd.f32 %v987, %v1174
      %v1176 = vpop.f32.mrb[0].mxu0
      %1177 = vmatprep.mubr.f32.mxu0 0.0
      %v1178 = vand.u32 %v440, 4294901760
      %v1179 = vsub.f32 %v440, %v1178
      %v1180 = vand.u32 %v1179, 4294901760
      %1181 = vmatmul.mubr.f32.gmra.mrb[0].mxu0 %v1180
      %v1182 = vpop.f32.mrb[0].mxu0
      %v1183 = vadd.f32 %v994, %v1182
      %v1184 = vpop.f32.mrb[0].mxu0
      %1185 = vmatprep.mubr.f32.mxu0 0.0
      %v1186 = vand.u32 %v443, 4294901760
      %v1187 = vsub.f32 %v443, %v1186
      %v1188 = vand.u32 %v1187, 4294901760
      %1189 = vmatmul.mubr.f32.gmra.mrb[0].mxu0 %v1188
      %v1190 = vpop.f32.mrb[0].mxu0
      %v1191 = vadd.f32 %v1001, %v1190
      %v1192 = vpop.f32.mrb[0].mxu0
      %1193 = vmatprep.mubr.f32.mxu0 0.0
      %v1194 = vand.u32 %v446, 4294901760
      %v1195 = vsub.f32 %v446, %v1194
      %v1196 = vand.u32 %v1195, 4294901760
      %1197 = vmatmul.mubr.f32.gmra.mrb[0].mxu0 %v1196
      %v1198 = vpop.f32.mrb[0].mxu0
      %v1199 = vadd.f32 %v1008, %v1198
      %v1200 = vpop.f32.mrb[0].mxu0
      %1201 = vmatprep.mubr.f32.mxu0 0.0
      %v1202 = vand.u32 %v449, 4294901760
      %v1203 = vsub.f32 %v449, %v1202
      %v1204 = vand.u32 %v1203, 4294901760
      %1205 = vmatmul.mubr.f32.gmra.mrb[0].mxu0 %v1204
      %v1206 = vpop.f32.mrb[0].mxu0
      %v1207 = vadd.f32 %v1015, %v1206
      %v1208 = vpop.f32.mrb[0].mxu0
      %1209 = vmatprep.mubr.f32.mxu0 0.0
      %v1210 = vand.u32 %v452, 4294901760
      %v1211 = vsub.f32 %v452, %v1210
      %v1212 = vand.u32 %v1211, 4294901760
      %1213 = vmatmul.mubr.f32.gmra.mrb[0].mxu0 %v1212
      %v1214 = vpop.f32.mrb[0].mxu0
      %v1215 = vadd.f32 %v1022, %v1214
      %v1216 = vpop.f32.mrb[0].mxu0
      %1217 = vmatprep.mubr.f32.mxu0 0.0
      %v1218 = vand.u32 %v455, 4294901760
      %v1219 = vsub.f32 %v455, %v1218
      %v1220 = vand.u32 %v1219, 4294901760
      %1221 = vmatmul.mubr.f32.gmra.mrb[0].mxu0 %v1220
      %v1222 = vpop.f32.mrb[0].mxu0
      %v1223 = vadd.f32 %v1029, %v1222
      %v1224 = vpop.f32.mrb[0].mxu0
      %1225 = vdwg.mxu0
      %1226 = vmatprep.subr.mxu0 0.0
      %v1227 = vand.u32 %v459, 4294901760
      %v1228 = vsub.f32 %v459, %v1227
      %v1229 = vand.u32 %v1228, 4294901760
      %1230 = vmatpush1.msra.mxu0 %v1229
      %1231 = vmatprep.subr.mxu0 0.0
      %1232 = vmatpush1.msra.mxu0 0.0
      %1233 = vmatprep.subr.mxu0 0.0
      %1234 = vmatpush1.msra.mxu0 0.0
      %1235 = vmatprep.subr.mxu0 0.0
      %1236 = vmatpush1.msra.mxu0 0.0
      %1237 = vmatprep.subr.mxu0 0.0
      %1238 = vmatpush1.msra.mxu0 0.0
      %1239 = vmatprep.subr.mxu0 0.0
      %1240 = vmatpush1.msra.mxu0 0.0
      %1241 = vmatprep.subr.mxu0 0.0
      %1242 = vmatpush1.msra.mxu0 0.0
      %1243 = vmatprep.subr.mxu0 0.0
      %1244 = vmatpush1.msra.mxu0 0.0
      %1245 = vmatprep.subr.mxu0 0.0
      %1246 = vmatpush1.msra.mxu0 0.0
      %1247 = vmatprep.subr.mxu0 0.0
      %1248 = vmatpush1.msra.mxu0 0.0
      %1249 = vmatprep.subr.mxu0 0.0
      %1250 = vmatpush1.msra.mxu0 0.0
      %1251 = vmatprep.subr.mxu0 0.0
      %1252 = vmatpush1.msra.mxu0 0.0
      %1253 = vmatprep.subr.mxu0 0.0
      %1254 = vmatpush1.msra.mxu0 0.0
      %1255 = vmatprep.subr.mxu0 0.0
      %1256 = vmatpush1.msra.mxu0 0.0
      %1257 = vmatprep.subr.mxu0 0.0
      %1258 = vmatpush1.msra.mxu0 0.0
      %1259 = vmatprep.subr.mxu0 0.0
      %1260 = vmatpush1.msra.mxu0 0.0
      %1261 = vmatprep.subr.mxu0 0.0
      %1262 = vmatpush1.msra.mxu0 0.0
      %1263 = vmatprep.subr.mxu0 0.0
      %1264 = vmatpush1.msra.mxu0 0.0
      %1265 = vmatprep.subr.mxu0 0.0
      %1266 = vmatpush1.msra.mxu0 0.0
      %1267 = vmatprep.subr.mxu0 0.0
      %1268 = vmatpush1.msra.mxu0 0.0
      %1269 = vmatprep.subr.mxu0 0.0
      %1270 = vmatpush1.msra.mxu0 0.0
      %1271 = vmatprep.subr.mxu0 0.0
      %1272 = vmatpush1.msra.mxu0 0.0
      %1273 = vmatprep.subr.mxu0 0.0
      %1274 = vmatpush1.msra.mxu0 0.0
      %1275 = vmatprep.subr.mxu0 0.0
      %1276 = vmatpush1.msra.mxu0 0.0
      %1277 = vmatprep.subr.mxu0 0.0
      %1278 = vmatpush1.msra.mxu0 0.0
      %1279 = vmatprep.subr.mxu0 0.0
      %1280 = vmatpush1.msra.mxu0 0.0
      %1281 = vmatprep.subr.mxu0 0.0
      %1282 = vmatpush1.msra.mxu0 0.0
      %1283 = vmatprep.subr.mxu0 0.0
      %1284 = vmatpush1.msra.mxu0 0.0
      %1285 = vmatprep.subr.mxu0 0.0
      %1286 = vmatpush1.msra.mxu0 0.0
      %1287 = vmatprep.subr.mxu0 0.0
      %1288 = vmatpush1.msra.mxu0 0.0
      %1289 = vmatprep.subr.mxu0 0.0
      %1290 = vmatpush1.msra.mxu0 0.0
      %1291 = vmatprep.subr.mxu0 0.0
      %1292 = vmatpush1.msra.mxu0 0.0
      %1293 = vmatprep.mubr.f32.mxu0 0.0
      %v1294 = vand.u32 %v410, 4294901760
      %1295 = vmatmul.mubr.f32.gmra.mrb[0].mxu0 %v1294
      %v1296 = vpop.f32.mrb[0].mxu0
      %v1297 = vadd.f32 %v1103, %v1296
      %v1298 = vpop.f32.mrb[0].mxu0
      %1299 = vmatprep.mubr.f32.mxu0 0.0
      %v1300 = vand.u32 %v413, 4294901760
      %1301 = vmatmul.mubr.f32.gmra.mrb[0].mxu0 %v1300
      %v1302 = vpop.f32.mrb[0].mxu0
      %v1303 = vadd.f32 %v1111, %v1302
      %v1304 = vpop.f32.mrb[0].mxu0
      %1305 = vmatprep.mubr.f32.mxu0 0.0
      %v1306 = vand.u32 %v416, 4294901760
      %1307 = vmatmul.mubr.f32.gmra.mrb[0].mxu0 %v1306
      %v1308 = vpop.f32.mrb[0].mxu0
      %v1309 = vadd.f32 %v1119, %v1308
      %v1310 = vpop.f32.mrb[0].mxu0
      %1311 = vmatprep.mubr.f32.mxu0 0.0
      %v1312 = vand.u32 %v419, 4294901760
      %1313 = vmatmul.mubr.f32.gmra.mrb[0].mxu0 %v1312
      %v1314 = vpop.f32.mrb[0].mxu0
      %v1315 = vadd.f32 %v1127, %v1314
      %v1316 = vpop.f32.mrb[0].mxu0
      %1317 = vmatprep.mubr.f32.mxu0 0.0
      %v1318 = vand.u32 %v422, 4294901760
      %1319 = vmatmul.mubr.f32.gmra.mrb[0].mxu0 %v1318
      %v1320 = vpop.f32.mrb[0].mxu0
      %v1321 = vadd.f32 %v1135, %v1320
      %v1322 = vpop.f32.mrb[0].mxu0
      %1323 = vmatprep.mubr.f32.mxu0 0.0
      %v1324 = vand.u32 %v425, 4294901760
      %1325 = vmatmul.mubr.f32.gmra.mrb[0].mxu0 %v1324
      %v1326 = vpop.f32.mrb[0].mxu0
      %v1327 = vadd.f32 %v1143, %v1326
      %v1328 = vpop.f32.mrb[0].mxu0
      %1329 = vmatprep.mubr.f32.mxu0 0.0
      %v1330 = vand.u32 %v428, 4294901760
      %1331 = vmatmul.mubr.f32.gmra.mrb[0].mxu0 %v1330
      %v1332 = vpop.f32.mrb[0].mxu0
      %v1333 = vadd.f32 %v1151, %v1332
      %v1334 = vpop.f32.mrb[0].mxu0
      %1335 = vmatprep.mubr.f32.mxu0 0.0
      %v1336 = vand.u32 %v431, 4294901760
      %1337 = vmatmul.mubr.f32.gmra.mrb[0].mxu0 %v1336
      %v1338 = vpop.f32.mrb[0].mxu0
      %v1339 = vadd.f32 %v1159, %v1338
      %v1340 = vpop.f32.mrb[0].mxu0
      %1341 = vmatprep.mubr.f32.mxu0 0.0
      %v1342 = vand.u32 %v434, 4294901760
      %1343 = vmatmul.mubr.f32.gmra.mrb[0].mxu0 %v1342
      %v1344 = vpop.f32.mrb[0].mxu0
      %v1345 = vadd.f32 %v1167, %v1344
      %v1346 = vpop.f32.mrb[0].mxu0
      %1347 = vmatprep.mubr.f32.mxu0 0.0
      %v1348 = vand.u32 %v437, 4294901760
      %1349 = vmatmul.mubr.f32.gmra.mrb[0].mxu0 %v1348
      %v1350 = vpop.f32.mrb[0].mxu0
      %v1351 = vadd.f32 %v1175, %v1350
      %v1352 = vpop.f32.mrb[0].mxu0
      %1353 = vmatprep.mubr.f32.mxu0 0.0
      %v1354 = vand.u32 %v440, 4294901760
      %1355 = vmatmul.mubr.f32.gmra.mrb[0].mxu0 %v1354
      %v1356 = vpop.f32.mrb[0].mxu0
      %v1357 = vadd.f32 %v1183, %v1356
      %v1358 = vpop.f32.mrb[0].mxu0
      %1359 = vmatprep.mubr.f32.mxu0 0.0
      %v1360 = vand.u32 %v443, 4294901760
      %1361 = vmatmul.mubr.f32.gmra.mrb[0].mxu0 %v1360
      %v1362 = vpop.f32.mrb[0].mxu0
      %v1363 = vadd.f32 %v1191, %v1362
      %v1364 = vpop.f32.mrb[0].mxu0
      %1365 = vmatprep.mubr.f32.mxu0 0.0
      %v1366 = vand.u32 %v446, 4294901760
      %1367 = vmatmul.mubr.f32.gmra.mrb[0].mxu0 %v1366
      %v1368 = vpop.f32.mrb[0].mxu0
      %v1369 = vadd.f32 %v1199, %v1368
      %v1370 = vpop.f32.mrb[0].mxu0
      %1371 = vmatprep.mubr.f32.mxu0 0.0
      %v1372 = vand.u32 %v449, 4294901760
      %1373 = vmatmul.mubr.f32.gmra.mrb[0].mxu0 %v1372
      %v1374 = vpop.f32.mrb[0].mxu0
      %v1375 = vadd.f32 %v1207, %v1374
      %v1376 = vpop.f32.mrb[0].mxu0
      %1377 = vmatprep.mubr.f32.mxu0 0.0
      %v1378 = vand.u32 %v452, 4294901760
      %1379 = vmatmul.mubr.f32.gmra.mrb[0].mxu0 %v1378
      %v1380 = vpop.f32.mrb[0].mxu0
      %v1381 = vadd.f32 %v1215, %v1380
      %v1382 = vpop.f32.mrb[0].mxu0
      %1383 = vmatprep.mubr.f32.mxu0 0.0
      %v1384 = vand.u32 %v455, 4294901760
      %1385 = vmatmul.mubr.f32.gmra.mrb[0].mxu0 %v1384
      %v1386 = vpop.f32.mrb[0].mxu0
      %v1387 = vadd.f32 %v1223, %v1386
      %v1388 = vpop.f32.mrb[0].mxu0
      %1389 = vdwg.mxu0
      %1390 = vmatprep.subr.mxu0 0.0
      %v1391 = vand.u32 %v459, 4294901760
      %1392 = vmatpush1.msra.mxu0 %v1391
      %1393 = vmatprep.subr.mxu0 0.0
      %1394 = vmatpush1.msra.mxu0 0.0
      %1395 = vmatprep.subr.mxu0 0.0
      %1396 = vmatpush1.msra.mxu0 0.0
      %1397 = vmatprep.subr.mxu0 0.0
      %1398 = vmatpush1.msra.mxu0 0.0
      %1399 = vmatprep.subr.mxu0 0.0
      %1400 = vmatpush1.msra.mxu0 0.0
      %1401 = vmatprep.subr.mxu0 0.0
      %1402 = vmatpush1.msra.mxu0 0.0
      %1403 = vmatprep.subr.mxu0 0.0
      %1404 = vmatpush1.msra.mxu0 0.0
      %1405 = vmatprep.subr.mxu0 0.0
      %1406 = vmatpush1.msra.mxu0 0.0
      %1407 = vmatprep.subr.mxu0 0.0
      %1408 = vmatpush1.msra.mxu0 0.0
      %1409 = vmatprep.subr.mxu0 0.0
      %1410 = vmatpush1.msra.mxu0 0.0
      %1411 = vmatprep.subr.mxu0 0.0
      %1412 = vmatpush1.msra.mxu0 0.0
      %1413 = vmatprep.subr.mxu0 0.0
      %1414 = vmatpush1.msra.mxu0 0.0
      %1415 = vmatprep.subr.mxu0 0.0
      %1416 = vmatpush1.msra.mxu0 0.0
      %1417 = vmatprep.subr.mxu0 0.0
      %1418 = vmatpush1.msra.mxu0 0.0
      %1419 = vmatprep.subr.mxu0 0.0
      %1420 = vmatpush1.msra.mxu0 0.0
      %1421 = vmatprep.subr.mxu0 0.0
      %1422 = vmatpush1.msra.mxu0 0.0
      %1423 = vmatprep.subr.mxu0 0.0
      %1424 = vmatpush1.msra.mxu0 0.0
      %1425 = vmatprep.subr.mxu0 0.0
      %1426 = vmatpush1.msra.mxu0 0.0
      %1427 = vmatprep.subr.mxu0 0.0
      %1428 = vmatpush1.msra.mxu0 0.0
      %1429 = vmatprep.subr.mxu0 0.0
      %1430 = vmatpush1.msra.mxu0 0.0
      %1431 = vmatprep.subr.mxu0 0.0
      %1432 = vmatpush1.msra.mxu0 0.0
      %1433 = vmatprep.subr.mxu0 0.0
      %1434 = vmatpush1.msra.mxu0 0.0
      %1435 = vmatprep.subr.mxu0 0.0
      %1436 = vmatpush1.msra.mxu0 0.0
      %1437 = vmatprep.subr.mxu0 0.0
      %1438 = vmatpush1.msra.mxu0 0.0
      %1439 = vmatprep.subr.mxu0 0.0
      %1440 = vmatpush1.msra.mxu0 0.0
      %1441 = vmatprep.subr.mxu0 0.0
      %1442 = vmatpush1.msra.mxu0 0.0
      %1443 = vmatprep.subr.mxu0 0.0
      %1444 = vmatpush1.msra.mxu0 0.0
      %1445 = vmatprep.subr.mxu0 0.0
      %1446 = vmatpush1.msra.mxu0 0.0
      %1447 = vmatprep.subr.mxu0 0.0
      %1448 = vmatpush1.msra.mxu0 0.0
      %1449 = vmatprep.subr.mxu0 0.0
      %1450 = vmatpush1.msra.mxu0 0.0
      %1451 = vmatprep.subr.mxu0 0.0
      %1452 = vmatpush1.msra.mxu0 0.0
      %1453 = vmatprep.subr.mxu0 0.0
      %1454 = vmatpush1.msra.mxu0 0.0
      %1455 = vmatprep.mubr.f32.mxu0 0.0
      %v1456 = vand.u32 %v410, 4294901760
      %1457 = vmatmul.mubr.f32.gmra.mrb[0].mxu0 %v1456
      %v1458 = vpop.f32.mrb[0].mxu0
      %v1459 = vadd.f32 %v1297, %v1458
      %v1460 = vpop.f32.mrb[0].mxu0
      %1461 = vmatprep.mubr.f32.mxu0 0.0
      %v1462 = vand.u32 %v413, 4294901760
      %1463 = vmatmul.mubr.f32.gmra.mrb[0].mxu0 %v1462
      %v1464 = vpop.f32.mrb[0].mxu0
      %v1465 = vadd.f32 %v1303, %v1464
      %v1466 = vpop.f32.mrb[0].mxu0
      %1467 = vmatprep.mubr.f32.mxu0 0.0
      %v1468 = vand.u32 %v416, 4294901760
      %1469 = vmatmul.mubr.f32.gmra.mrb[0].mxu0 %v1468
      %v1470 = vpop.f32.mrb[0].mxu0
      %v1471 = vadd.f32 %v1309, %v1470
      %v1472 = vpop.f32.mrb[0].mxu0
      %1473 = vmatprep.mubr.f32.mxu0 0.0
      %v1474 = vand.u32 %v419, 4294901760
      %1475 = vmatmul.mubr.f32.gmra.mrb[0].mxu0 %v1474
      %v1476 = vpop.f32.mrb[0].mxu0
      %v1477 = vadd.f32 %v1315, %v1476
      %v1478 = vpop.f32.mrb[0].mxu0
      %1479 = vmatprep.mubr.f32.mxu0 0.0
      %v1480 = vand.u32 %v422, 4294901760
      %1481 = vmatmul.mubr.f32.gmra.mrb[0].mxu0 %v1480
      %v1482 = vpop.f32.mrb[0].mxu0
      %v1483 = vadd.f32 %v1321, %v1482
      %v1484 = vpop.f32.mrb[0].mxu0
      %1485 = vmatprep.mubr.f32.mxu0 0.0
      %v1486 = vand.u32 %v425, 4294901760
      %1487 = vmatmul.mubr.f32.gmra.mrb[0].mxu0 %v1486
      %v1488 = vpop.f32.mrb[0].mxu0
      %v1489 = vadd.f32 %v1327, %v1488
      %v1490 = vpop.f32.mrb[0].mxu0
      %1491 = vmatprep.mubr.f32.mxu0 0.0
      %v1492 = vand.u32 %v428, 4294901760
      %1493 = vmatmul.mubr.f32.gmra.mrb[0].mxu0 %v1492
      %v1494 = vpop.f32.mrb[0].mxu0
      %v1495 = vadd.f32 %v1333, %v1494
      %v1496 = vpop.f32.mrb[0].mxu0
      %1497 = vmatprep.mubr.f32.mxu0 0.0
      %v1498 = vand.u32 %v431, 4294901760
      %1499 = vmatmul.mubr.f32.gmra.mrb[0].mxu0 %v1498
      %v1500 = vpop.f32.mrb[0].mxu0
      %v1501 = vadd.f32 %v1339, %v1500
      %v1502 = vpop.f32.mrb[0].mxu0
      %1503 = vmatprep.mubr.f32.mxu0 0.0
      %v1504 = vand.u32 %v434, 4294901760
      %1505 = vmatmul.mubr.f32.gmra.mrb[0].mxu0 %v1504
      %v1506 = vpop.f32.mrb[0].mxu0
      %v1507 = vadd.f32 %v1345, %v1506
      %v1508 = vpop.f32.mrb[0].mxu0
      %1509 = vmatprep.mubr.f32.mxu0 0.0
      %v1510 = vand.u32 %v437, 4294901760
      %1511 = vmatmul.mubr.f32.gmra.mrb[0].mxu0 %v1510
      %v1512 = vpop.f32.mrb[0].mxu0
      %v1513 = vadd.f32 %v1351, %v1512
      %v1514 = vpop.f32.mrb[0].mxu0
      %1515 = vmatprep.mubr.f32.mxu0 0.0
      %v1516 = vand.u32 %v440, 4294901760
      %1517 = vmatmul.mubr.f32.gmra.mrb[0].mxu0 %v1516
      %v1518 = vpop.f32.mrb[0].mxu0
      %v1519 = vadd.f32 %v1357, %v1518
      %v1520 = vpop.f32.mrb[0].mxu0
      %1521 = vmatprep.mubr.f32.mxu0 0.0
      %v1522 = vand.u32 %v443, 4294901760
      %1523 = vmatmul.mubr.f32.gmra.mrb[0].mxu0 %v1522
      %v1524 = vpop.f32.mrb[0].mxu0
      %v1525 = vadd.f32 %v1363, %v1524
      %v1526 = vpop.f32.mrb[0].mxu0
      %1527 = vmatprep.mubr.f32.mxu0 0.0
      %v1528 = vand.u32 %v446, 4294901760
      %1529 = vmatmul.mubr.f32.gmra.mrb[0].mxu0 %v1528
      %v1530 = vpop.f32.mrb[0].mxu0
      %v1531 = vadd.f32 %v1369, %v1530
      %v1532 = vpop.f32.mrb[0].mxu0
      %1533 = vmatprep.mubr.f32.mxu0 0.0
      %v1534 = vand.u32 %v449, 4294901760
      %1535 = vmatmul.mubr.f32.gmra.mrb[0].mxu0 %v1534
      %v1536 = vpop.f32.mrb[0].mxu0
      %v1537 = vadd.f32 %v1375, %v1536
      %v1538 = vpop.f32.mrb[0].mxu0
      %1539 = vmatprep.mubr.f32.mxu0 0.0
      %v1540 = vand.u32 %v452, 4294901760
      %1541 = vmatmul.mubr.f32.gmra.mrb[0].mxu0 %v1540
      %v1542 = vpop.f32.mrb[0].mxu0
      %v1543 = vadd.f32 %v1381, %v1542
      %v1544 = vpop.f32.mrb[0].mxu0
      %1545 = vmatprep.mubr.f32.mxu0 0.0
      %v1546 = vand.u32 %v455, 4294901760
      %1547 = vmatmul.mubr.f32.gmra.mrb[0].mxu0 %v1546
      %v1548 = vpop.f32.mrb[0].mxu0
      %v1549 = vadd.f32 %v1387, %v1548
      %v1550 = vpop.f32.mrb[0].mxu0
      %1551 = vdwg.mxu0
      %v1552 = vld [vmem:[#allocation3] sm:$0x1]
      %v1554 = vlaneseq
      %v1555 = vshrl.u32 %v1554, 7
      %v1556 = vsub.s32 0, %v1555
      %v1557 = vrot.slane %v1552, %v1556
      %v1559 = vadd.f32 %v1557, %v1459
      %v1560 = vadd.f32 %v1557, %v1465
      %v1561 = vadd.f32 %v1557, %v1471
      %v1562 = vadd.f32 %v1557, %v1477
      %v1563 = vadd.f32 %v1557, %v1483
      %v1564 = vadd.f32 %v1557, %v1489
      %v1565 = vadd.f32 %v1557, %v1495
      %v1566 = vadd.f32 %v1557, %v1501
      %v1567 = vadd.f32 %v1557, %v1507
      %v1568 = vadd.f32 %v1557, %v1513
      %v1569 = vadd.f32 %v1557, %v1519
      %v1570 = vadd.f32 %v1557, %v1525
      %v1571 = vadd.f32 %v1557, %v1531
      %v1572 = vadd.f32 %v1557, %v1537
      %v1573 = vadd.f32 %v1557, %v1543
      %v1574 = vadd.f32 %v1557, %v1549
      %v1575 = vadd.f32 %v347, %v1559
      %v1576 = vadd.f32 %v350, %v1560
      %v1577 = vadd.f32 %v353, %v1561
      %v1578 = vadd.f32 %v356, %v1562
      %v1579 = vadd.f32 %v359, %v1563
      %v1580 = vadd.f32 %v362, %v1564
      %v1581 = vadd.f32 %v365, %v1565
      %v1582 = vadd.f32 %v368, %v1566
      %v1583 = vadd.f32 %v371, %v1567
      %v1584 = vadd.f32 %v374, %v1568
      %v1585 = vadd.f32 %v377, %v1569
      %v1586 = vadd.f32 %v380, %v1570
      %v1587 = vadd.f32 %v383, %v1571
      %v1588 = vadd.f32 %v386, %v1572
      %v1589 = vadd.f32 %v389, %v1573
      %v1590 = vadd.f32 %v392, %v1574
      %v1591 = vmax.f32 %v1575, 0.0
      %v1592 = vmax.f32 %v1576, 0.0
      %v1593 = vmax.f32 %v1577, 0.0
      %v1594 = vmax.f32 %v1578, 0.0
      %v1595 = vmax.f32 %v1579, 0.0
      %v1596 = vmax.f32 %v1580, 0.0
      %v1597 = vmax.f32 %v1581, 0.0
      %v1598 = vmax.f32 %v1582, 0.0
      %v1599 = vmax.f32 %v1583, 0.0
      %v1600 = vmax.f32 %v1584, 0.0
      %v1601 = vmax.f32 %v1585, 0.0
      %v1602 = vmax.f32 %v1586, 0.0
      %v1603 = vmax.f32 %v1587, 0.0
      %v1604 = vmax.f32 %v1588, 0.0
      %v1605 = vmax.f32 %v1589, 0.0
      %v1606 = vmax.f32 %v1590, 0.0
      %v1607 = vld [vmem:[#allocation2] sm:$0x1]
      %v1609 = vlaneseq
      %v1610 = vshrl.u32 %v1609, 7
      %v1611 = vsub.s32 0, %v1610
      %v1612 = vrot.slane %v1607, %v1611
      %1613 = vset.pattern.permute.xlu0 0
      %1614 = vperm.xlu0 %1613, %v1612
      %v1615 = vpop.permute.xlu0 %1614
      %v1617 = vmul.f32 %v1591, %v1615
      %v1618 = vmul.f32 %v1592, %v1615
      %v1619 = vmul.f32 %v1593, %v1615
      %v1620 = vmul.f32 %v1594, %v1615
      %v1621 = vmul.f32 %v1595, %v1615
      %v1622 = vmul.f32 %v1596, %v1615
      %v1623 = vmul.f32 %v1597, %v1615
      %v1624 = vmul.f32 %v1598, %v1615
      %v1625 = vmul.f32 %v1599, %v1615
      %v1626 = vmul.f32 %v1600, %v1615
      %v1627 = vmul.f32 %v1601, %v1615
      %v1628 = vmul.f32 %v1602, %v1615
      %v1629 = vmul.f32 %v1603, %v1615
      %v1630 = vmul.f32 %v1604, %v1615
      %v1631 = vmul.f32 %v1605, %v1615
      %v1632 = vmul.f32 %v1606, %v1615
      %v1633 = vmul.f32 %v1617, 1.442695
      %v1634 = vpow.pop %v1633
      %v1635 = vmul.f32 %v1618, 1.442695
      %v1636 = vpow.pop %v1635
      %v1637 = vmul.f32 %v1619, 1.442695
      %v1638 = vpow.pop %v1637
      %v1639 = vmul.f32 %v1620, 1.442695
      %v1640 = vpow.pop %v1639
      %v1641 = vmul.f32 %v1621, 1.442695
      %v1642 = vpow.pop %v1641
      %v1643 = vmul.f32 %v1622, 1.442695
      %v1644 = vpow.pop %v1643
      %v1645 = vmul.f32 %v1623, 1.442695
      %v1646 = vpow.pop %v1645
      %v1647 = vmul.f32 %v1624, 1.442695
      %v1648 = vpow.pop %v1647
      %v1649 = vmul.f32 %v1625, 1.442695
      %v1650 = vpow.pop %v1649
      %v1651 = vmul.f32 %v1626, 1.442695
      %v1652 = vpow.pop %v1651
      %v1653 = vmul.f32 %v1627, 1.442695
      %v1654 = vpow.pop %v1653
      %v1655 = vmul.f32 %v1628, 1.442695
      %v1656 = vpow.pop %v1655
      %v1657 = vmul.f32 %v1629, 1.442695
      %v1658 = vpow.pop %v1657
      %v1659 = vmul.f32 %v1630, 1.442695
      %v1660 = vpow.pop %v1659
      %v1661 = vmul.f32 %v1631, 1.442695
      %v1662 = vpow.pop %v1661
      %v1663 = vmul.f32 %v1632, 1.442695
      %v1664 = vpow.pop %v1663
      %v1665 = vld [vmem:[#allocation4] sm:$0xff]
      %v1666 = vld [vmem:[#allocation4 + $0x8] sm:$0xff]
      %v1667 = vld [vmem:[#allocation4 + $0x10] sm:$0xff]
      %v1668 = vld [vmem:[#allocation4 + $0x18] sm:$0xff]
      %v1669 = vld [vmem:[#allocation4 + $0x20] sm:$0xff]
      %v1670 = vld [vmem:[#allocation4 + $0x28] sm:$0xff]
      %v1671 = vld [vmem:[#allocation4 + $0x30] sm:$0xff]
      %v1672 = vld [vmem:[#allocation4 + $0x38] sm:$0xff]
      %v1673 = vld [vmem:[#allocation4 + $0x40] sm:$0xff]
      %v1674 = vld [vmem:[#allocation4 + $0x48] sm:$0xff]
      %v1675 = vld [vmem:[#allocation4 + $0x50] sm:$0xff]
      %v1676 = vld [vmem:[#allocation4 + $0x58] sm:$0xff]
      %v1677 = vld [vmem:[#allocation4 + $0x60] sm:$0xff]
      %v1678 = vld [vmem:[#allocation4 + $0x68] sm:$0xff]
      %v1679 = vld [vmem:[#allocation4 + $0x70] sm:$0xff]
      %v1680 = vld [vmem:[#allocation4 + $0x78] sm:$0xff]
      %1681 = vmatprep.subr.mxu0 0.0
      %v1682 = vand.u32 %v1665, 4294901760
      %1683 = vmatpush1.msra.mxu0 %v1682
      %1684 = vmatprep.subr.mxu0 0.0
      %v1685 = vand.u32 %v1666, 4294901760
      %1686 = vmatpush1.msra.mxu0 %v1685
      %1687 = vmatprep.subr.mxu0 0.0
      %v1688 = vand.u32 %v1667, 4294901760
      %1689 = vmatpush1.msra.mxu0 %v1688
      %1690 = vmatprep.subr.mxu0 0.0
      %v1691 = vand.u32 %v1668, 4294901760
      %1692 = vmatpush1.msra.mxu0 %v1691
      %1693 = vmatprep.subr.mxu0 0.0
      %v1694 = vand.u32 %v1669, 4294901760
      %1695 = vmatpush1.msra.mxu0 %v1694
      %1696 = vmatprep.subr.mxu0 0.0
      %v1697 = vand.u32 %v1670, 4294901760
      %1698 = vmatpush1.msra.mxu0 %v1697
      %1699 = vmatprep.subr.mxu0 0.0
      %v1700 = vand.u32 %v1671, 4294901760
      %1701 = vmatpush1.msra.mxu0 %v1700
      %1702 = vmatprep.subr.mxu0 0.0
      %v1703 = vand.u32 %v1672, 4294901760
      %1704 = vmatpush1.msra.mxu0 %v1703
      %1705 = vmatprep.subr.mxu0 0.0
      %v1706 = vand.u32 %v1673, 4294901760
      %1707 = vmatpush1.msra.mxu0 %v1706
      %1708 = vmatprep.subr.mxu0 0.0
      %v1709 = vand.u32 %v1674, 4294901760
      %1710 = vmatpush1.msra.mxu0 %v1709
      %1711 = vmatprep.subr.mxu0 0.0
      %v1712 = vand.u32 %v1675, 4294901760
      %1713 = vmatpush1.msra.mxu0 %v1712
      %1714 = vmatprep.subr.mxu0 0.0
      %v1715 = vand.u32 %v1676, 4294901760
      %1716 = vmatpush1.msra.mxu0 %v1715
      %1717 = vmatprep.subr.mxu0 0.0
      %v1718 = vand.u32 %v1677, 4294901760
      %1719 = vmatpush1.msra.mxu0 %v1718
      %1720 = vmatprep.subr.mxu0 0.0
      %v1721 = vand.u32 %v1678, 4294901760
      %1722 = vmatpush1.msra.mxu0 %v1721
      %1723 = vmatprep.subr.mxu0 0.0
      %v1724 = vand.u32 %v1679, 4294901760
      %1725 = vmatpush1.msra.mxu0 %v1724
      %1726 = vmatprep.subr.mxu0 0.0
      %v1727 = vand.u32 %v1680, 4294901760
      %1728 = vmatpush1.msra.mxu0 %v1727
      %1729 = vmatprep.subr.mxu0 0.0
      %1730 = vmatpush1.msra.mxu0 0.0
      %1731 = vmatprep.subr.mxu0 0.0
      %1732 = vmatpush1.msra.mxu0 0.0
      %1733 = vmatprep.subr.mxu0 0.0
      %1734 = vmatpush1.msra.mxu0 0.0
      %1735 = vmatprep.subr.mxu0 0.0
      %1736 = vmatpush1.msra.mxu0 0.0
      %1737 = vmatprep.subr.mxu0 0.0
      %1738 = vmatpush1.msra.mxu0 0.0
      %1739 = vmatprep.subr.mxu0 0.0
      %1740 = vmatpush1.msra.mxu0 0.0
      %1741 = vmatprep.subr.mxu0 0.0
      %1742 = vmatpush1.msra.mxu0 0.0
      %1743 = vmatprep.subr.mxu0 0.0
      %1744 = vmatpush1.msra.mxu0 0.0
      %1745 = vmatprep.subr.mxu0 0.0
      %1746 = vmatpush1.msra.mxu0 0.0
      %1747 = vmatprep.subr.mxu0 0.0
      %1748 = vmatpush1.msra.mxu0 0.0
      %1749 = vmatprep.subr.mxu0 0.0
      %1750 = vmatpush1.msra.mxu0 0.0
      %1751 = vmatprep.subr.mxu0 0.0
      %1752 = vmatpush1.msra.mxu0 0.0
      %1753 = vmatprep.subr.mxu0 0.0
      %1754 = vmatpush1.msra.mxu0 0.0
      %1755 = vmatprep.subr.mxu0 0.0
      %1756 = vmatpush1.msra.mxu0 0.0
      %1757 = vmatprep.subr.mxu0 0.0
      %1758 = vmatpush1.msra.mxu0 0.0
      %1759 = vmatprep.subr.mxu0 0.0
      %1760 = vmatpush1.msra.mxu0 0.0
      %1761 = vmatprep.mubr.f32.mxu0 0.0
      %v1762 = vand.u32 %v1634, 4294901760
      %v1763 = vsub.f32 %v1634, %v1762
      %v1764 = vand.u32 %v1763, 4294901760
      %v1765 = vsub.f32 %v1763, %v1764
      %v1766 = vand.u32 %v1765, 4294901760
      %1767 = vmatmul.mubr.f32.gmra.mrb[0].mxu0 %v1766
      %v1768 = vpop.f32.mrb[0].mxu0
      %v1769 = vadd.f32 0.0, %v1768
      %v1770 = vpop.f32.mrb[0].mxu0
      %1771 = vmatprep.mubr.f32.mxu0 0.0
      %v1772 = vand.u32 %v1636, 4294901760
      %v1773 = vsub.f32 %v1636, %v1772
      %v1774 = vand.u32 %v1773, 4294901760
      %v1775 = vsub.f32 %v1773, %v1774
      %v1776 = vand.u32 %v1775, 4294901760
      %1777 = vmatmul.mubr.f32.gmra.mrb[0].mxu0 %v1776
      %v1778 = vpop.f32.mrb[0].mxu0
      %v1779 = vadd.f32 0.0, %v1778
      %v1780 = vpop.f32.mrb[0].mxu0
      %1781 = vmatprep.mubr.f32.mxu0 0.0
      %v1782 = vand.u32 %v1638, 4294901760
      %v1783 = vsub.f32 %v1638, %v1782
      %v1784 = vand.u32 %v1783, 4294901760
      %v1785 = vsub.f32 %v1783, %v1784
      %v1786 = vand.u32 %v1785, 4294901760
      %1787 = vmatmul.mubr.f32.gmra.mrb[0].mxu0 %v1786
      %v1788 = vpop.f32.mrb[0].mxu0
      %v1789 = vadd.f32 0.0, %v1788
      %v1790 = vpop.f32.mrb[0].mxu0
      %1791 = vmatprep.mubr.f32.mxu0 0.0
      %v1792 = vand.u32 %v1640, 4294901760
      %v1793 = vsub.f32 %v1640, %v1792
      %v1794 = vand.u32 %v1793, 4294901760
      %v1795 = vsub.f32 %v1793, %v1794
      %v1796 = vand.u32 %v1795, 4294901760
      %1797 = vmatmul.mubr.f32.gmra.mrb[0].mxu0 %v1796
      %v1798 = vpop.f32.mrb[0].mxu0
      %v1799 = vadd.f32 0.0, %v1798
      %v1800 = vpop.f32.mrb[0].mxu0
      %1801 = vmatprep.mubr.f32.mxu0 0.0
      %v1802 = vand.u32 %v1642, 4294901760
      %v1803 = vsub.f32 %v1642, %v1802
      %v1804 = vand.u32 %v1803, 4294901760
      %v1805 = vsub.f32 %v1803, %v1804
      %v1806 = vand.u32 %v1805, 4294901760
      %1807 = vmatmul.mubr.f32.gmra.mrb[0].mxu0 %v1806
      %v1808 = vpop.f32.mrb[0].mxu0
      %v1809 = vadd.f32 0.0, %v1808
      %v1810 = vpop.f32.mrb[0].mxu0
      %1811 = vmatprep.mubr.f32.mxu0 0.0
      %v1812 = vand.u32 %v1644, 4294901760
      %v1813 = vsub.f32 %v1644, %v1812
      %v1814 = vand.u32 %v1813, 4294901760
      %v1815 = vsub.f32 %v1813, %v1814
      %v1816 = vand.u32 %v1815, 4294901760
      %1817 = vmatmul.mubr.f32.gmra.mrb[0].mxu0 %v1816
      %v1818 = vpop.f32.mrb[0].mxu0
      %v1819 = vadd.f32 0.0, %v1818
      %v1820 = vpop.f32.mrb[0].mxu0
      %1821 = vmatprep.mubr.f32.mxu0 0.0
      %v1822 = vand.u32 %v1646, 4294901760
      %v1823 = vsub.f32 %v1646, %v1822
      %v1824 = vand.u32 %v1823, 4294901760
      %v1825 = vsub.f32 %v1823, %v1824
      %v1826 = vand.u32 %v1825, 4294901760
      %1827 = vmatmul.mubr.f32.gmra.mrb[0].mxu0 %v1826
      %v1828 = vpop.f32.mrb[0].mxu0
      %v1829 = vadd.f32 0.0, %v1828
      %v1830 = vpop.f32.mrb[0].mxu0
      %1831 = vmatprep.mubr.f32.mxu0 0.0
      %v1832 = vand.u32 %v1648, 4294901760
      %v1833 = vsub.f32 %v1648, %v1832
      %v1834 = vand.u32 %v1833, 4294901760
      %v1835 = vsub.f32 %v1833, %v1834
      %v1836 = vand.u32 %v1835, 4294901760
      %1837 = vmatmul.mubr.f32.gmra.mrb[0].mxu0 %v1836
      %v1838 = vpop.f32.mrb[0].mxu0
      %v1839 = vadd.f32 0.0, %v1838
      %v1840 = vpop.f32.mrb[0].mxu0
      %1841 = vmatprep.mubr.f32.mxu0 0.0
      %v1842 = vand.u32 %v1650, 4294901760
      %v1843 = vsub.f32 %v1650, %v1842
      %v1844 = vand.u32 %v1843, 4294901760
      %v1845 = vsub.f32 %v1843, %v1844
      %v1846 = vand.u32 %v1845, 4294901760
      %1847 = vmatmul.mubr.f32.gmra.mrb[0].mxu0 %v1846
      %v1848 = vpop.f32.mrb[0].mxu0
      %v1849 = vadd.f32 0.0, %v1848
      %v1850 = vpop.f32.mrb[0].mxu0
      %1851 = vmatprep.mubr.f32.mxu0 0.0
      %v1852 = vand.u32 %v1652, 4294901760
      %v1853 = vsub.f32 %v1652, %v1852
      %v1854 = vand.u32 %v1853, 4294901760
      %v1855 = vsub.f32 %v1853, %v1854
      %v1856 = vand.u32 %v1855, 4294901760
      %1857 = vmatmul.mubr.f32.gmra.mrb[0].mxu0 %v1856
      %v1858 = vpop.f32.mrb[0].mxu0
      %v1859 = vadd.f32 0.0, %v1858
      %v1860 = vpop.f32.mrb[0].mxu0
      %1861 = vmatprep.mubr.f32.mxu0 0.0
      %v1862 = vand.u32 %v1654, 4294901760
      %v1863 = vsub.f32 %v1654, %v1862
      %v1864 = vand.u32 %v1863, 4294901760
      %v1865 = vsub.f32 %v1863, %v1864
      %v1866 = vand.u32 %v1865, 4294901760
      %1867 = vmatmul.mubr.f32.gmra.mrb[0].mxu0 %v1866
      %v1868 = vpop.f32.mrb[0].mxu0
      %v1869 = vadd.f32 0.0, %v1868
      %v1870 = vpop.f32.mrb[0].mxu0
      %1871 = vmatprep.mubr.f32.mxu0 0.0
      %v1872 = vand.u32 %v1656, 4294901760
      %v1873 = vsub.f32 %v1656, %v1872
      %v1874 = vand.u32 %v1873, 4294901760
      %v1875 = vsub.f32 %v1873, %v1874
      %v1876 = vand.u32 %v1875, 4294901760
      %1877 = vmatmul.mubr.f32.gmra.mrb[0].mxu0 %v1876
      %v1878 = vpop.f32.mrb[0].mxu0
      %v1879 = vadd.f32 0.0, %v1878
      %v1880 = vpop.f32.mrb[0].mxu0
      %1881 = vmatprep.mubr.f32.mxu0 0.0
      %v1882 = vand.u32 %v1658, 4294901760
      %v1883 = vsub.f32 %v1658, %v1882
      %v1884 = vand.u32 %v1883, 4294901760
      %v1885 = vsub.f32 %v1883, %v1884
      %v1886 = vand.u32 %v1885, 4294901760
      %1887 = vmatmul.mubr.f32.gmra.mrb[0].mxu0 %v1886
      %v1888 = vpop.f32.mrb[0].mxu0
      %v1889 = vadd.f32 0.0, %v1888
      %v1890 = vpop.f32.mrb[0].mxu0
      %1891 = vmatprep.mubr.f32.mxu0 0.0
      %v1892 = vand.u32 %v1660, 4294901760
      %v1893 = vsub.f32 %v1660, %v1892
      %v1894 = vand.u32 %v1893, 4294901760
      %v1895 = vsub.f32 %v1893, %v1894
      %v1896 = vand.u32 %v1895, 4294901760
      %1897 = vmatmul.mubr.f32.gmra.mrb[0].mxu0 %v1896
      %v1898 = vpop.f32.mrb[0].mxu0
      %v1899 = vadd.f32 0.0, %v1898
      %v1900 = vpop.f32.mrb[0].mxu0
      %1901 = vmatprep.mubr.f32.mxu0 0.0
      %v1902 = vand.u32 %v1662, 4294901760
      %v1903 = vsub.f32 %v1662, %v1902
      %v1904 = vand.u32 %v1903, 4294901760
      %v1905 = vsub.f32 %v1903, %v1904
      %v1906 = vand.u32 %v1905, 4294901760
      %1907 = vmatmul.mubr.f32.gmra.mrb[0].mxu0 %v1906
      %v1908 = vpop.f32.mrb[0].mxu0
      %v1909 = vadd.f32 0.0, %v1908
      %v1910 = vpop.f32.mrb[0].mxu0
      %1911 = vmatprep.mubr.f32.mxu0 0.0
      %v1912 = vand.u32 %v1664, 4294901760
      %v1913 = vsub.f32 %v1664, %v1912
      %v1914 = vand.u32 %v1913, 4294901760
      %v1915 = vsub.f32 %v1913, %v1914
      %v1916 = vand.u32 %v1915, 4294901760
      %1917 = vmatmul.mubr.f32.gmra.mrb[0].mxu0 %v1916
      %v1918 = vpop.f32.mrb[0].mxu0
      %v1919 = vadd.f32 0.0, %v1918
      %v1920 = vpop.f32.mrb[0].mxu0
      %1921 = vdwg.mxu0
      %1922 = vmatprep.subr.mxu0 0.0
      %v1923 = vand.u32 %v1665, 4294901760
      %v1924 = vsub.f32 %v1665, %v1923
      %v1925 = vand.u32 %v1924, 4294901760
      %v1926 = vsub.f32 %v1924, %v1925
      %v1927 = vand.u32 %v1926, 4294901760
      %1928 = vmatpush1.msra.mxu0 %v1927
      %1929 = vmatprep.subr.mxu0 0.0
      %v1930 = vand.u32 %v1666, 4294901760
      %v1931 = vsub.f32 %v1666, %v1930
      %v1932 = vand.u32 %v1931, 4294901760
      %v1933 = vsub.f32 %v1931, %v1932
      %v1934 = vand.u32 %v1933, 4294901760
      %1935 = vmatpush1.msra.mxu0 %v1934
      %1936 = vmatprep.subr.mxu0 0.0
      %v1937 = vand.u32 %v1667, 4294901760
      %v1938 = vsub.f32 %v1667, %v1937
      %v1939 = vand.u32 %v1938, 4294901760
      %v1940 = vsub.f32 %v1938, %v1939
      %v1941 = vand.u32 %v1940, 4294901760
      %1942 = vmatpush1.msra.mxu0 %v1941
      %1943 = vmatprep.subr.mxu0 0.0
      %v1944 = vand.u32 %v1668, 4294901760
      %v1945 = vsub.f32 %v1668, %v1944
      %v1946 = vand.u32 %v1945, 4294901760
      %v1947 = vsub.f32 %v1945, %v1946
      %v1948 = vand.u32 %v1947, 4294901760
      %1949 = vmatpush1.msra.mxu0 %v1948
      %1950 = vmatprep.subr.mxu0 0.0
      %v1951 = vand.u32 %v1669, 4294901760
      %v1952 = vsub.f32 %v1669, %v1951
      %v1953 = vand.u32 %v1952, 4294901760
      %v1954 = vsub.f32 %v1952, %v1953
      %v1955 = vand.u32 %v1954, 4294901760
      %1956 = vmatpush1.msra.mxu0 %v1955
      %1957 = vmatprep.subr.mxu0 0.0
      %v1958 = vand.u32 %v1670, 4294901760
      %v1959 = vsub.f32 %v1670, %v1958
      %v1960 = vand.u32 %v1959, 4294901760
      %v1961 = vsub.f32 %v1959, %v1960
      %v1962 = vand.u32 %v1961, 4294901760
      %1963 = vmatpush1.msra.mxu0 %v1962
      %1964 = vmatprep.subr.mxu0 0.0
      %v1965 = vand.u32 %v1671, 4294901760
      %v1966 = vsub.f32 %v1671, %v1965
      %v1967 = vand.u32 %v1966, 4294901760
      %v1968 = vsub.f32 %v1966, %v1967
      %v1969 = vand.u32 %v1968, 4294901760
      %1970 = vmatpush1.msra.mxu0 %v1969
      %1971 = vmatprep.subr.mxu0 0.0
      %v1972 = vand.u32 %v1672, 4294901760
      %v1973 = vsub.f32 %v1672, %v1972
      %v1974 = vand.u32 %v1973, 4294901760
      %v1975 = vsub.f32 %v1973, %v1974
      %v1976 = vand.u32 %v1975, 4294901760
      %1977 = vmatpush1.msra.mxu0 %v1976
      %1978 = vmatprep.subr.mxu0 0.0
      %v1979 = vand.u32 %v1673, 4294901760
      %v1980 = vsub.f32 %v1673, %v1979
      %v1981 = vand.u32 %v1980, 4294901760
      %v1982 = vsub.f32 %v1980, %v1981
      %v1983 = vand.u32 %v1982, 4294901760
      %1984 = vmatpush1.msra.mxu0 %v1983
      %1985 = vmatprep.subr.mxu0 0.0
      %v1986 = vand.u32 %v1674, 4294901760
      %v1987 = vsub.f32 %v1674, %v1986
      %v1988 = vand.u32 %v1987, 4294901760
      %v1989 = vsub.f32 %v1987, %v1988
      %v1990 = vand.u32 %v1989, 4294901760
      %1991 = vmatpush1.msra.mxu0 %v1990
      %1992 = vmatprep.subr.mxu0 0.0
      %v1993 = vand.u32 %v1675, 4294901760
      %v1994 = vsub.f32 %v1675, %v1993
      %v1995 = vand.u32 %v1994, 4294901760
      %v1996 = vsub.f32 %v1994, %v1995
      %v1997 = vand.u32 %v1996, 4294901760
      %1998 = vmatpush1.msra.mxu0 %v1997
      %1999 = vmatprep.subr.mxu0 0.0
      %v2000 = vand.u32 %v1676, 4294901760
      %v2001 = vsub.f32 %v1676, %v2000
      %v2002 = vand.u32 %v2001, 4294901760
      %v2003 = vsub.f32 %v2001, %v2002
      %v2004 = vand.u32 %v2003, 4294901760
      %2005 = vmatpush1.msra.mxu0 %v2004
      %2006 = vmatprep.subr.mxu0 0.0
      %v2007 = vand.u32 %v1677, 4294901760
      %v2008 = vsub.f32 %v1677, %v2007
      %v2009 = vand.u32 %v2008, 4294901760
      %v2010 = vsub.f32 %v2008, %v2009
      %v2011 = vand.u32 %v2010, 4294901760
      %2012 = vmatpush1.msra.mxu0 %v2011
      %2013 = vmatprep.subr.mxu0 0.0
      %v2014 = vand.u32 %v1678, 4294901760
      %v2015 = vsub.f32 %v1678, %v2014
      %v2016 = vand.u32 %v2015, 4294901760
      %v2017 = vsub.f32 %v2015, %v2016
      %v2018 = vand.u32 %v2017, 4294901760
      %2019 = vmatpush1.msra.mxu0 %v2018
      %2020 = vmatprep.subr.mxu0 0.0
      %v2021 = vand.u32 %v1679, 4294901760
      %v2022 = vsub.f32 %v1679, %v2021
      %v2023 = vand.u32 %v2022, 4294901760
      %v2024 = vsub.f32 %v2022, %v2023
      %v2025 = vand.u32 %v2024, 4294901760
      %2026 = vmatpush1.msra.mxu0 %v2025
      %2027 = vmatprep.subr.mxu0 0.0
      %v2028 = vand.u32 %v1680, 4294901760
      %v2029 = vsub.f32 %v1680, %v2028
      %v2030 = vand.u32 %v2029, 4294901760
      %v2031 = vsub.f32 %v2029, %v2030
      %v2032 = vand.u32 %v2031, 4294901760
      %2033 = vmatpush1.msra.mxu0 %v2032
      %2034 = vmatprep.subr.mxu0 0.0
      %2035 = vmatpush1.msra.mxu0 0.0
      %2036 = vmatprep.subr.mxu0 0.0
      %2037 = vmatpush1.msra.mxu0 0.0
      %2038 = vmatprep.subr.mxu0 0.0
      %2039 = vmatpush1.msra.mxu0 0.0
      %2040 = vmatprep.subr.mxu0 0.0
      %2041 = vmatpush1.msra.mxu0 0.0
      %2042 = vmatprep.subr.mxu0 0.0
      %2043 = vmatpush1.msra.mxu0 0.0
      %2044 = vmatprep.subr.mxu0 0.0
      %2045 = vmatpush1.msra.mxu0 0.0
      %2046 = vmatprep.subr.mxu0 0.0
      %2047 = vmatpush1.msra.mxu0 0.0
      %2048 = vmatprep.subr.mxu0 0.0
      %2049 = vmatpush1.msra.mxu0 0.0
      %2050 = vmatprep.subr.mxu0 0.0
      %2051 = vmatpush1.msra.mxu0 0.0
      %2052 = vmatprep.subr.mxu0 0.0
      %2053 = vmatpush1.msra.mxu0 0.0
      %2054 = vmatprep.subr.mxu0 0.0
      %2055 = vmatpush1.msra.mxu0 0.0
      %2056 = vmatprep.subr.mxu0 0.0
      %2057 = vmatpush1.msra.mxu0 0.0
      %2058 = vmatprep.subr.mxu0 0.0
      %2059 = vmatpush1.msra.mxu0 0.0
      %2060 = vmatprep.subr.mxu0 0.0
      %2061 = vmatpush1.msra.mxu0 0.0
      %2062 = vmatprep.subr.mxu0 0.0
      %2063 = vmatpush1.msra.mxu0 0.0
      %2064 = vmatprep.subr.mxu0 0.0
      %2065 = vmatpush1.msra.mxu0 0.0
      %2066 = vmatprep.mubr.f32.mxu0 0.0
      %v2067 = vand.u32 %v1634, 4294901760
      %2068 = vmatmul.mubr.f32.gmra.mrb[0].mxu0 %v2067
      %v2069 = vpop.f32.mrb[0].mxu0
      %v2070 = vadd.f32 %v1769, %v2069
      %v2071 = vpop.f32.mrb[0].mxu0
      %2072 = vmatprep.mubr.f32.mxu0 0.0
      %v2073 = vand.u32 %v1636, 4294901760
      %2074 = vmatmul.mubr.f32.gmra.mrb[0].mxu0 %v2073
      %v2075 = vpop.f32.mrb[0].mxu0
      %v2076 = vadd.f32 %v1779, %v2075
      %v2077 = vpop.f32.mrb[0].mxu0
      %2078 = vmatprep.mubr.f32.mxu0 0.0
      %v2079 = vand.u32 %v1638, 4294901760
      %2080 = vmatmul.mubr.f32.gmra.mrb[0].mxu0 %v2079
      %v2081 = vpop.f32.mrb[0].mxu0
      %v2082 = vadd.f32 %v1789, %v2081
      %v2083 = vpop.f32.mrb[0].mxu0
      %2084 = vmatprep.mubr.f32.mxu0 0.0
      %v2085 = vand.u32 %v1640, 4294901760
      %2086 = vmatmul.mubr.f32.gmra.mrb[0].mxu0 %v2085
      %v2087 = vpop.f32.mrb[0].mxu0
      %v2088 = vadd.f32 %v1799, %v2087
      %v2089 = vpop.f32.mrb[0].mxu0
      %2090 = vmatprep.mubr.f32.mxu0 0.0
      %v2091 = vand.u32 %v1642, 4294901760
      %2092 = vmatmul.mubr.f32.gmra.mrb[0].mxu0 %v2091
      %v2093 = vpop.f32.mrb[0].mxu0
      %v2094 = vadd.f32 %v1809, %v2093
      %v2095 = vpop.f32.mrb[0].mxu0
      %2096 = vmatprep.mubr.f32.mxu0 0.0
      %v2097 = vand.u32 %v1644, 4294901760
      %2098 = vmatmul.mubr.f32.gmra.mrb[0].mxu0 %v2097
      %v2099 = vpop.f32.mrb[0].mxu0
      %v2100 = vadd.f32 %v1819, %v2099
      %v2101 = vpop.f32.mrb[0].mxu0
      %2102 = vmatprep.mubr.f32.mxu0 0.0
      %v2103 = vand.u32 %v1646, 4294901760
      %2104 = vmatmul.mubr.f32.gmra.mrb[0].mxu0 %v2103
      %v2105 = vpop.f32.mrb[0].mxu0
      %v2106 = vadd.f32 %v1829, %v2105
      %v2107 = vpop.f32.mrb[0].mxu0
      %2108 = vmatprep.mubr.f32.mxu0 0.0
      %v2109 = vand.u32 %v1648, 4294901760
      %2110 = vmatmul.mubr.f32.gmra.mrb[0].mxu0 %v2109
      %v2111 = vpop.f32.mrb[0].mxu0
      %v2112 = vadd.f32 %v1839, %v2111
      %v2113 = vpop.f32.mrb[0].mxu0
      %2114 = vmatprep.mubr.f32.mxu0 0.0
      %v2115 = vand.u32 %v1650, 4294901760
      %2116 = vmatmul.mubr.f32.gmra.mrb[0].mxu0 %v2115
      %v2117 = vpop.f32.mrb[0].mxu0
      %v2118 = vadd.f32 %v1849, %v2117
      %v2119 = vpop.f32.mrb[0].mxu0
      %2120 = vmatprep.mubr.f32.mxu0 0.0
      %v2121 = vand.u32 %v1652, 4294901760
      %2122 = vmatmul.mubr.f32.gmra.mrb[0].mxu0 %v2121
      %v2123 = vpop.f32.mrb[0].mxu0
      %v2124 = vadd.f32 %v1859, %v2123
      %v2125 = vpop.f32.mrb[0].mxu0
      %2126 = vmatprep.mubr.f32.mxu0 0.0
      %v2127 = vand.u32 %v1654, 4294901760
      %2128 = vmatmul.mubr.f32.gmra.mrb[0].mxu0 %v2127
      %v2129 = vpop.f32.mrb[0].mxu0
      %v2130 = vadd.f32 %v1869, %v2129
      %v2131 = vpop.f32.mrb[0].mxu0
      %2132 = vmatprep.mubr.f32.mxu0 0.0
      %v2133 = vand.u32 %v1656, 4294901760
      %2134 = vmatmul.mubr.f32.gmra.mrb[0].mxu0 %v2133
      %v2135 = vpop.f32.mrb[0].mxu0
      %v2136 = vadd.f32 %v1879, %v2135
      %v2137 = vpop.f32.mrb[0].mxu0
      %2138 = vmatprep.mubr.f32.mxu0 0.0
      %v2139 = vand.u32 %v1658, 4294901760
      %2140 = vmatmul.mubr.f32.gmra.mrb[0].mxu0 %v2139
      %v2141 = vpop.f32.mrb[0].mxu0
      %v2142 = vadd.f32 %v1889, %v2141
      %v2143 = vpop.f32.mrb[0].mxu0
      %2144 = vmatprep.mubr.f32.mxu0 0.0
      %v2145 = vand.u32 %v1660, 4294901760
      %2146 = vmatmul.mubr.f32.gmra.mrb[0].mxu0 %v2145
      %v2147 = vpop.f32.mrb[0].mxu0
      %v2148 = vadd.f32 %v1899, %v2147
      %v2149 = vpop.f32.mrb[0].mxu0
      %2150 = vmatprep.mubr.f32.mxu0 0.0
      %v2151 = vand.u32 %v1662, 4294901760
      %2152 = vmatmul.mubr.f32.gmra.mrb[0].mxu0 %v2151
      %v2153 = vpop.f32.mrb[0].mxu0
      %v2154 = vadd.f32 %v1909, %v2153
      %v2155 = vpop.f32.mrb[0].mxu0
      %2156 = vmatprep.mubr.f32.mxu0 0.0
      %v2157 = vand.u32 %v1664, 4294901760
      %2158 = vmatmul.mubr.f32.gmra.mrb[0].mxu0 %v2157
      %v2159 = vpop.f32.mrb[0].mxu0
      %v2160 = vadd.f32 %v1919, %v2159
      %v2161 = vpop.f32.mrb[0].mxu0
      %2162 = vdwg.mxu0
      %2163 = vmatprep.subr.mxu0 0.0
      %v2164 = vand.u32 %v1665, 4294901760
      %v2165 = vsub.f32 %v1665, %v2164
      %2166 = vmatpush1.msra.mxu0 %v2165
      %2167 = vmatprep.subr.mxu0 0.0
      %v2168 = vand.u32 %v1666, 4294901760
      %v2169 = vsub.f32 %v1666, %v2168
      %2170 = vmatpush1.msra.mxu0 %v2169
      %2171 = vmatprep.subr.mxu0 0.0
      %v2172 = vand.u32 %v1667, 4294901760
      %v2173 = vsub.f32 %v1667, %v2172
      %2174 = vmatpush1.msra.mxu0 %v2173
      %2175 = vmatprep.subr.mxu0 0.0
      %v2176 = vand.u32 %v1668, 4294901760
      %v2177 = vsub.f32 %v1668, %v2176
      %2178 = vmatpush1.msra.mxu0 %v2177
      %2179 = vmatprep.subr.mxu0 0.0
      %v2180 = vand.u32 %v1669, 4294901760
      %v2181 = vsub.f32 %v1669, %v2180
      %2182 = vmatpush1.msra.mxu0 %v2181
      %2183 = vmatprep.subr.mxu0 0.0
      %v2184 = vand.u32 %v1670, 4294901760
      %v2185 = vsub.f32 %v1670, %v2184
      %2186 = vmatpush1.msra.mxu0 %v2185
      %2187 = vmatprep.subr.mxu0 0.0
      %v2188 = vand.u32 %v1671, 4294901760
      %v2189 = vsub.f32 %v1671, %v2188
      %2190 = vmatpush1.msra.mxu0 %v2189
      %2191 = vmatprep.subr.mxu0 0.0
      %v2192 = vand.u32 %v1672, 4294901760
      %v2193 = vsub.f32 %v1672, %v2192
      %2194 = vmatpush1.msra.mxu0 %v2193
      %2195 = vmatprep.subr.mxu0 0.0
      %v2196 = vand.u32 %v1673, 4294901760
      %v2197 = vsub.f32 %v1673, %v2196
      %2198 = vmatpush1.msra.mxu0 %v2197
      %2199 = vmatprep.subr.mxu0 0.0
      %v2200 = vand.u32 %v1674, 4294901760
      %v2201 = vsub.f32 %v1674, %v2200
      %2202 = vmatpush1.msra.mxu0 %v2201
      %2203 = vmatprep.subr.mxu0 0.0
      %v2204 = vand.u32 %v1675, 4294901760
      %v2205 = vsub.f32 %v1675, %v2204
      %2206 = vmatpush1.msra.mxu0 %v2205
      %2207 = vmatprep.subr.mxu0 0.0
      %v2208 = vand.u32 %v1676, 4294901760
      %v2209 = vsub.f32 %v1676, %v2208
      %2210 = vmatpush1.msra.mxu0 %v2209
      %2211 = vmatprep.subr.mxu0 0.0
      %v2212 = vand.u32 %v1677, 4294901760
      %v2213 = vsub.f32 %v1677, %v2212
      %2214 = vmatpush1.msra.mxu0 %v2213
      %2215 = vmatprep.subr.mxu0 0.0
      %v2216 = vand.u32 %v1678, 4294901760
      %v2217 = vsub.f32 %v1678, %v2216
      %2218 = vmatpush1.msra.mxu0 %v2217
      %2219 = vmatprep.subr.mxu0 0.0
      %v2220 = vand.u32 %v1679, 4294901760
      %v2221 = vsub.f32 %v1679, %v2220
      %2222 = vmatpush1.msra.mxu0 %v2221
      %2223 = vmatprep.subr.mxu0 0.0
      %v2224 = vand.u32 %v1680, 4294901760
      %v2225 = vsub.f32 %v1680, %v2224
      %2226 = vmatpush1.msra.mxu0 %v2225
      %2227 = vmatprep.subr.mxu0 0.0
      %2228 = vmatpush1.msra.mxu0 0.0
      %2229 = vmatprep.subr.mxu0 0.0
      %2230 = vmatpush1.msra.mxu0 0.0
      %2231 = vmatprep.subr.mxu0 0.0
      %2232 = vmatpush1.msra.mxu0 0.0
      %2233 = vmatprep.subr.mxu0 0.0
      %2234 = vmatpush1.msra.mxu0 0.0
      %2235 = vmatprep.subr.mxu0 0.0
      %2236 = vmatpush1.msra.mxu0 0.0
      %2237 = vmatprep.subr.mxu0 0.0
      %2238 = vmatpush1.msra.mxu0 0.0
      %2239 = vmatprep.subr.mxu0 0.0
      %2240 = vmatpush1.msra.mxu0 0.0
      %2241 = vmatprep.subr.mxu0 0.0
      %2242 = vmatpush1.msra.mxu0 0.0
      %2243 = vmatprep.subr.mxu0 0.0
      %2244 = vmatpush1.msra.mxu0 0.0
      %2245 = vmatprep.subr.mxu0 0.0
      %2246 = vmatpush1.msra.mxu0 0.0
      %2247 = vmatprep.subr.mxu0 0.0
      %2248 = vmatpush1.msra.mxu0 0.0
      %2249 = vmatprep.subr.mxu0 0.0
      %2250 = vmatpush1.msra.mxu0 0.0
      %2251 = vmatprep.subr.mxu0 0.0
      %2252 = vmatpush1.msra.mxu0 0.0
      %2253 = vmatprep.subr.mxu0 0.0
      %2254 = vmatpush1.msra.mxu0 0.0
      %2255 = vmatprep.subr.mxu0 0.0
      %2256 = vmatpush1.msra.mxu0 0.0
      %2257 = vmatprep.subr.mxu0 0.0
      %2258 = vmatpush1.msra.mxu0 0.0
      %2259 = vmatprep.mubr.f32.mxu0 0.0
      %v2260 = vand.u32 %v1634, 4294901760
      %v2261 = vsub.f32 %v1634, %v2260
      %2262 = vmatmul.mubr.f32.gmra.mrb[0].mxu0 %v2261
      %v2263 = vpop.f32.mrb[0].mxu0
      %v2264 = vadd.f32 %v2070, %v2263
      %v2265 = vpop.f32.mrb[0].mxu0
      %2266 = vmatprep.mubr.f32.mxu0 0.0
      %v2267 = vand.u32 %v1636, 4294901760
      %v2268 = vsub.f32 %v1636, %v2267
      %2269 = vmatmul.mubr.f32.gmra.mrb[0].mxu0 %v2268
      %v2270 = vpop.f32.mrb[0].mxu0
      %v2271 = vadd.f32 %v2076, %v2270
      %v2272 = vpop.f32.mrb[0].mxu0
      %2273 = vmatprep.mubr.f32.mxu0 0.0
      %v2274 = vand.u32 %v1638, 4294901760
      %v2275 = vsub.f32 %v1638, %v2274
      %2276 = vmatmul.mubr.f32.gmra.mrb[0].mxu0 %v2275
      %v2277 = vpop.f32.mrb[0].mxu0
      %v2278 = vadd.f32 %v2082, %v2277
      %v2279 = vpop.f32.mrb[0].mxu0
      %2280 = vmatprep.mubr.f32.mxu0 0.0
      %v2281 = vand.u32 %v1640, 4294901760
      %v2282 = vsub.f32 %v1640, %v2281
      %2283 = vmatmul.mubr.f32.gmra.mrb[0].mxu0 %v2282
      %v2284 = vpop.f32.mrb[0].mxu0
      %v2285 = vadd.f32 %v2088, %v2284
      %v2286 = vpop.f32.mrb[0].mxu0
      %2287 = vmatprep.mubr.f32.mxu0 0.0
      %v2288 = vand.u32 %v1642, 4294901760
      %v2289 = vsub.f32 %v1642, %v2288
      %2290 = vmatmul.mubr.f32.gmra.mrb[0].mxu0 %v2289
      %v2291 = vpop.f32.mrb[0].mxu0
      %v2292 = vadd.f32 %v2094, %v2291
      %v2293 = vpop.f32.mrb[0].mxu0
      %2294 = vmatprep.mubr.f32.mxu0 0.0
      %v2295 = vand.u32 %v1644, 4294901760
      %v2296 = vsub.f32 %v1644, %v2295
      %2297 = vmatmul.mubr.f32.gmra.mrb[0].mxu0 %v2296
      %v2298 = vpop.f32.mrb[0].mxu0
      %v2299 = vadd.f32 %v2100, %v2298
      %v2300 = vpop.f32.mrb[0].mxu0
      %2301 = vmatprep.mubr.f32.mxu0 0.0
      %v2302 = vand.u32 %v1646, 4294901760
      %v2303 = vsub.f32 %v1646, %v2302
      %2304 = vmatmul.mubr.f32.gmra.mrb[0].mxu0 %v2303
      %v2305 = vpop.f32.mrb[0].mxu0
      %v2306 = vadd.f32 %v2106, %v2305
      %v2307 = vpop.f32.mrb[0].mxu0
      %2308 = vmatprep.mubr.f32.mxu0 0.0
      %v2309 = vand.u32 %v1648, 4294901760
      %v2310 = vsub.f32 %v1648, %v2309
      %2311 = vmatmul.mubr.f32.gmra.mrb[0].mxu0 %v2310
      %v2312 = vpop.f32.mrb[0].mxu0
      %v2313 = vadd.f32 %v2112, %v2312
      %v2314 = vpop.f32.mrb[0].mxu0
      %2315 = vmatprep.mubr.f32.mxu0 0.0
      %v2316 = vand.u32 %v1650, 4294901760
      %v2317 = vsub.f32 %v1650, %v2316
      %2318 = vmatmul.mubr.f32.gmra.mrb[0].mxu0 %v2317
      %v2319 = vpop.f32.mrb[0].mxu0
      %v2320 = vadd.f32 %v2118, %v2319
      %v2321 = vpop.f32.mrb[0].mxu0
      %2322 = vmatprep.mubr.f32.mxu0 0.0
      %v2323 = vand.u32 %v1652, 4294901760
      %v2324 = vsub.f32 %v1652, %v2323
      %2325 = vmatmul.mubr.f32.gmra.mrb[0].mxu0 %v2324
      %v2326 = vpop.f32.mrb[0].mxu0
      %v2327 = vadd.f32 %v2124, %v2326
      %v2328 = vpop.f32.mrb[0].mxu0
      %2329 = vmatprep.mubr.f32.mxu0 0.0
      %v2330 = vand.u32 %v1654, 4294901760
      %v2331 = vsub.f32 %v1654, %v2330
      %2332 = vmatmul.mubr.f32.gmra.mrb[0].mxu0 %v2331
      %v2333 = vpop.f32.mrb[0].mxu0
      %v2334 = vadd.f32 %v2130, %v2333
      %v2335 = vpop.f32.mrb[0].mxu0
      %2336 = vmatprep.mubr.f32.mxu0 0.0
      %v2337 = vand.u32 %v1656, 4294901760
      %v2338 = vsub.f32 %v1656, %v2337
      %2339 = vmatmul.mubr.f32.gmra.mrb[0].mxu0 %v2338
      %v2340 = vpop.f32.mrb[0].mxu0
      %v2341 = vadd.f32 %v2136, %v2340
      %v2342 = vpop.f32.mrb[0].mxu0
      %2343 = vmatprep.mubr.f32.mxu0 0.0
      %v2344 = vand.u32 %v1658, 4294901760
      %v2345 = vsub.f32 %v1658, %v2344
      %2346 = vmatmul.mubr.f32.gmra.mrb[0].mxu0 %v2345
      %v2347 = vpop.f32.mrb[0].mxu0
      %v2348 = vadd.f32 %v2142, %v2347
      %v2349 = vpop.f32.mrb[0].mxu0
      %2350 = vmatprep.mubr.f32.mxu0 0.0
      %v2351 = vand.u32 %v1660, 4294901760
      %v2352 = vsub.f32 %v1660, %v2351
      %2353 = vmatmul.mubr.f32.gmra.mrb[0].mxu0 %v2352
      %v2354 = vpop.f32.mrb[0].mxu0
      %v2355 = vadd.f32 %v2148, %v2354
      %v2356 = vpop.f32.mrb[0].mxu0
      %2357 = vmatprep.mubr.f32.mxu0 0.0
      %v2358 = vand.u32 %v1662, 4294901760
      %v2359 = vsub.f32 %v1662, %v2358
      %2360 = vmatmul.mubr.f32.gmra.mrb[0].mxu0 %v2359
      %v2361 = vpop.f32.mrb[0].mxu0
      %v2362 = vadd.f32 %v2154, %v2361
      %v2363 = vpop.f32.mrb[0].mxu0
      %2364 = vmatprep.mubr.f32.mxu0 0.0
      %v2365 = vand.u32 %v1664, 4294901760
      %v2366 = vsub.f32 %v1664, %v2365
      %2367 = vmatmul.mubr.f32.gmra.mrb[0].mxu0 %v2366
      %v2368 = vpop.f32.mrb[0].mxu0
      %v2369 = vadd.f32 %v2160, %v2368
      %v2370 = vpop.f32.mrb[0].mxu0
      %2371 = vdwg.mxu0
      %2372 = vmatprep.subr.mxu0 0.0
      %v2373 = vand.u32 %v1665, 4294901760
      %2374 = vmatpush1.msra.mxu0 %v2373
      %2375 = vmatprep.subr.mxu0 0.0
      %v2376 = vand.u32 %v1666, 4294901760
      %2377 = vmatpush1.msra.mxu0 %v2376
      %2378 = vmatprep.subr.mxu0 0.0
      %v2379 = vand.u32 %v1667, 4294901760
      %2380 = vmatpush1.msra.mxu0 %v2379
      %2381 = vmatprep.subr.mxu0 0.0
      %v2382 = vand.u32 %v1668, 4294901760
      %2383 = vmatpush1.msra.mxu0 %v2382
      %2384 = vmatprep.subr.mxu0 0.0
      %v2385 = vand.u32 %v1669, 4294901760
      %2386 = vmatpush1.msra.mxu0 %v2385
      %2387 = vmatprep.subr.mxu0 0.0
      %v2388 = vand.u32 %v1670, 4294901760
      %2389 = vmatpush1.msra.mxu0 %v2388
      %2390 = vmatprep.subr.mxu0 0.0
      %v2391 = vand.u32 %v1671, 4294901760
      %2392 = vmatpush1.msra.mxu0 %v2391
      %2393 = vmatprep.subr.mxu0 0.0
      %v2394 = vand.u32 %v1672, 4294901760
      %2395 = vmatpush1.msra.mxu0 %v2394
      %2396 = vmatprep.subr.mxu0 0.0
      %v2397 = vand.u32 %v1673, 4294901760
      %2398 = vmatpush1.msra.mxu0 %v2397
      %2399 = vmatprep.subr.mxu0 0.0
      %v2400 = vand.u32 %v1674, 4294901760
      %2401 = vmatpush1.msra.mxu0 %v2400
      %2402 = vmatprep.subr.mxu0 0.0
      %v2403 = vand.u32 %v1675, 4294901760
      %2404 = vmatpush1.msra.mxu0 %v2403
      %2405 = vmatprep.subr.mxu0 0.0
      %v2406 = vand.u32 %v1676, 4294901760
      %2407 = vmatpush1.msra.mxu0 %v2406
      %2408 = vmatprep.subr.mxu0 0.0
      %v2409 = vand.u32 %v1677, 4294901760
      %2410 = vmatpush1.msra.mxu0 %v2409
      %2411 = vmatprep.subr.mxu0 0.0
      %v2412 = vand.u32 %v1678, 4294901760
      %2413 = vmatpush1.msra.mxu0 %v2412
      %2414 = vmatprep.subr.mxu0 0.0
      %v2415 = vand.u32 %v1679, 4294901760
      %2416 = vmatpush1.msra.mxu0 %v2415
      %2417 = vmatprep.subr.mxu0 0.0
      %v2418 = vand.u32 %v1680, 4294901760
      %2419 = vmatpush1.msra.mxu0 %v2418
      %2420 = vmatprep.subr.mxu0 0.0
      %2421 = vmatpush1.msra.mxu0 0.0
      %2422 = vmatprep.subr.mxu0 0.0
      %2423 = vmatpush1.msra.mxu0 0.0
      %2424 = vmatprep.subr.mxu0 0.0
      %2425 = vmatpush1.msra.mxu0 0.0
      %2426 = vmatprep.subr.mxu0 0.0
      %2427 = vmatpush1.msra.mxu0 0.0
      %2428 = vmatprep.subr.mxu0 0.0
      %2429 = vmatpush1.msra.mxu0 0.0
      %2430 = vmatprep.subr.mxu0 0.0
      %2431 = vmatpush1.msra.mxu0 0.0
      %2432 = vmatprep.subr.mxu0 0.0
      %2433 = vmatpush1.msra.mxu0 0.0
      %2434 = vmatprep.subr.mxu0 0.0
      %2435 = vmatpush1.msra.mxu0 0.0
      %2436 = vmatprep.subr.mxu0 0.0
      %2437 = vmatpush1.msra.mxu0 0.0
      %2438 = vmatprep.subr.mxu0 0.0
      %2439 = vmatpush1.msra.mxu0 0.0
      %2440 = vmatprep.subr.mxu0 0.0
      %2441 = vmatpush1.msra.mxu0 0.0
      %2442 = vmatprep.subr.mxu0 0.0
      %2443 = vmatpush1.msra.mxu0 0.0
      %2444 = vmatprep.subr.mxu0 0.0
      %2445 = vmatpush1.msra.mxu0 0.0
      %2446 = vmatprep.subr.mxu0 0.0
      %2447 = vmatpush1.msra.mxu0 0.0
      %2448 = vmatprep.subr.mxu0 0.0
      %2449 = vmatpush1.msra.mxu0 0.0
      %2450 = vmatprep.subr.mxu0 0.0
      %2451 = vmatpush1.msra.mxu0 0.0
      %2452 = vmatprep.mubr.f32.mxu0 0.0
      %v2453 = vand.u32 %v1634, 4294901760
      %v2454 = vsub.f32 %v1634, %v2453
      %v2455 = vand.u32 %v2454, 4294901760
      %2456 = vmatmul.mubr.f32.gmra.mrb[0].mxu0 %v2455
      %v2457 = vpop.f32.mrb[0].mxu0
      %v2458 = vadd.f32 %v2264, %v2457
      %v2459 = vpop.f32.mrb[0].mxu0
      %2460 = vmatprep.mubr.f32.mxu0 0.0
      %v2461 = vand.u32 %v1636, 4294901760
      %v2462 = vsub.f32 %v1636, %v2461
      %v2463 = vand.u32 %v2462, 4294901760
      %2464 = vmatmul.mubr.f32.gmra.mrb[0].mxu0 %v2463
      %v2465 = vpop.f32.mrb[0].mxu0
      %v2466 = vadd.f32 %v2271, %v2465
      %v2467 = vpop.f32.mrb[0].mxu0
      %2468 = vmatprep.mubr.f32.mxu0 0.0
      %v2469 = vand.u32 %v1638, 4294901760
      %v2470 = vsub.f32 %v1638, %v2469
      %v2471 = vand.u32 %v2470, 4294901760
      %2472 = vmatmul.mubr.f32.gmra.mrb[0].mxu0 %v2471
      %v2473 = vpop.f32.mrb[0].mxu0
      %v2474 = vadd.f32 %v2278, %v2473
      %v2475 = vpop.f32.mrb[0].mxu0
      %2476 = vmatprep.mubr.f32.mxu0 0.0
      %v2477 = vand.u32 %v1640, 4294901760
      %v2478 = vsub.f32 %v1640, %v2477
      %v2479 = vand.u32 %v2478, 4294901760
      %2480 = vmatmul.mubr.f32.gmra.mrb[0].mxu0 %v2479
      %v2481 = vpop.f32.mrb[0].mxu0
      %v2482 = vadd.f32 %v2285, %v2481
      %v2483 = vpop.f32.mrb[0].mxu0
      %2484 = vmatprep.mubr.f32.mxu0 0.0
      %v2485 = vand.u32 %v1642, 4294901760
      %v2486 = vsub.f32 %v1642, %v2485
      %v2487 = vand.u32 %v2486, 4294901760
      %2488 = vmatmul.mubr.f32.gmra.mrb[0].mxu0 %v2487
      %v2489 = vpop.f32.mrb[0].mxu0
      %v2490 = vadd.f32 %v2292, %v2489
      %v2491 = vpop.f32.mrb[0].mxu0
      %2492 = vmatprep.mubr.f32.mxu0 0.0
      %v2493 = vand.u32 %v1644, 4294901760
      %v2494 = vsub.f32 %v1644, %v2493
      %v2495 = vand.u32 %v2494, 4294901760
      %2496 = vmatmul.mubr.f32.gmra.mrb[0].mxu0 %v2495
      %v2497 = vpop.f32.mrb[0].mxu0
      %v2498 = vadd.f32 %v2299, %v2497
      %v2499 = vpop.f32.mrb[0].mxu0
      %2500 = vmatprep.mubr.f32.mxu0 0.0
      %v2501 = vand.u32 %v1646, 4294901760
      %v2502 = vsub.f32 %v1646, %v2501
      %v2503 = vand.u32 %v2502, 4294901760
      %2504 = vmatmul.mubr.f32.gmra.mrb[0].mxu0 %v2503
      %v2505 = vpop.f32.mrb[0].mxu0
      %v2506 = vadd.f32 %v2306, %v2505
      %v2507 = vpop.f32.mrb[0].mxu0
      %2508 = vmatprep.mubr.f32.mxu0 0.0
      %v2509 = vand.u32 %v1648, 4294901760
      %v2510 = vsub.f32 %v1648, %v2509
      %v2511 = vand.u32 %v2510, 4294901760
      %2512 = vmatmul.mubr.f32.gmra.mrb[0].mxu0 %v2511
      %v2513 = vpop.f32.mrb[0].mxu0
      %v2514 = vadd.f32 %v2313, %v2513
      %v2515 = vpop.f32.mrb[0].mxu0
      %2516 = vmatprep.mubr.f32.mxu0 0.0
      %v2517 = vand.u32 %v1650, 4294901760
      %v2518 = vsub.f32 %v1650, %v2517
      %v2519 = vand.u32 %v2518, 4294901760
      %2520 = vmatmul.mubr.f32.gmra.mrb[0].mxu0 %v2519
      %v2521 = vpop.f32.mrb[0].mxu0
      %v2522 = vadd.f32 %v2320, %v2521
      %v2523 = vpop.f32.mrb[0].mxu0
      %2524 = vmatprep.mubr.f32.mxu0 0.0
      %v2525 = vand.u32 %v1652, 4294901760
      %v2526 = vsub.f32 %v1652, %v2525
      %v2527 = vand.u32 %v2526, 4294901760
      %2528 = vmatmul.mubr.f32.gmra.mrb[0].mxu0 %v2527
      %v2529 = vpop.f32.mrb[0].mxu0
      %v2530 = vadd.f32 %v2327, %v2529
      %v2531 = vpop.f32.mrb[0].mxu0
      %2532 = vmatprep.mubr.f32.mxu0 0.0
      %v2533 = vand.u32 %v1654, 4294901760
      %v2534 = vsub.f32 %v1654, %v2533
      %v2535 = vand.u32 %v2534, 4294901760
      %2536 = vmatmul.mubr.f32.gmra.mrb[0].mxu0 %v2535
      %v2537 = vpop.f32.mrb[0].mxu0
      %v2538 = vadd.f32 %v2334, %v2537
      %v2539 = vpop.f32.mrb[0].mxu0
      %2540 = vmatprep.mubr.f32.mxu0 0.0
      %v2541 = vand.u32 %v1656, 4294901760
      %v2542 = vsub.f32 %v1656, %v2541
      %v2543 = vand.u32 %v2542, 4294901760
      %2544 = vmatmul.mubr.f32.gmra.mrb[0].mxu0 %v2543
      %v2545 = vpop.f32.mrb[0].mxu0
      %v2546 = vadd.f32 %v2341, %v2545
      %v2547 = vpop.f32.mrb[0].mxu0
      %2548 = vmatprep.mubr.f32.mxu0 0.0
      %v2549 = vand.u32 %v1658, 4294901760
      %v2550 = vsub.f32 %v1658, %v2549
      %v2551 = vand.u32 %v2550, 4294901760
      %2552 = vmatmul.mubr.f32.gmra.mrb[0].mxu0 %v2551
      %v2553 = vpop.f32.mrb[0].mxu0
      %v2554 = vadd.f32 %v2348, %v2553
      %v2555 = vpop.f32.mrb[0].mxu0
      %2556 = vmatprep.mubr.f32.mxu0 0.0
      %v2557 = vand.u32 %v1660, 4294901760
      %v2558 = vsub.f32 %v1660, %v2557
      %v2559 = vand.u32 %v2558, 4294901760
      %2560 = vmatmul.mubr.f32.gmra.mrb[0].mxu0 %v2559
      %v2561 = vpop.f32.mrb[0].mxu0
      %v2562 = vadd.f32 %v2355, %v2561
      %v2563 = vpop.f32.mrb[0].mxu0
      %2564 = vmatprep.mubr.f32.mxu0 0.0
      %v2565 = vand.u32 %v1662, 4294901760
      %v2566 = vsub.f32 %v1662, %v2565
      %v2567 = vand.u32 %v2566, 4294901760
      %2568 = vmatmul.mubr.f32.gmra.mrb[0].mxu0 %v2567
      %v2569 = vpop.f32.mrb[0].mxu0
      %v2570 = vadd.f32 %v2362, %v2569
      %v2571 = vpop.f32.mrb[0].mxu0
      %2572 = vmatprep.mubr.f32.mxu0 0.0
      %v2573 = vand.u32 %v1664, 4294901760
      %v2574 = vsub.f32 %v1664, %v2573
      %v2575 = vand.u32 %v2574, 4294901760
      %2576 = vmatmul.mubr.f32.gmra.mrb[0].mxu0 %v2575
      %v2577 = vpop.f32.mrb[0].mxu0
      %v2578 = vadd.f32 %v2369, %v2577
      %v2579 = vpop.f32.mrb[0].mxu0
      %2580 = vdwg.mxu0
      %2581 = vmatprep.subr.mxu0 0.0
      %v2582 = vand.u32 %v1665, 4294901760
      %v2583 = vsub.f32 %v1665, %v2582
      %v2584 = vand.u32 %v2583, 4294901760
      %2585 = vmatpush1.msra.mxu0 %v2584
      %2586 = vmatprep.subr.mxu0 0.0
      %v2587 = vand.u32 %v1666, 4294901760
      %v2588 = vsub.f32 %v1666, %v2587
      %v2589 = vand.u32 %v2588, 4294901760
      %2590 = vmatpush1.msra.mxu0 %v2589
      %2591 = vmatprep.subr.mxu0 0.0
      %v2592 = vand.u32 %v1667, 4294901760
      %v2593 = vsub.f32 %v1667, %v2592
      %v2594 = vand.u32 %v2593, 4294901760
      %2595 = vmatpush1.msra.mxu0 %v2594
      %2596 = vmatprep.subr.mxu0 0.0
      %v2597 = vand.u32 %v1668, 4294901760
      %v2598 = vsub.f32 %v1668, %v2597
      %v2599 = vand.u32 %v2598, 4294901760
      %2600 = vmatpush1.msra.mxu0 %v2599
      %2601 = vmatprep.subr.mxu0 0.0
      %v2602 = vand.u32 %v1669, 4294901760
      %v2603 = vsub.f32 %v1669, %v2602
      %v2604 = vand.u32 %v2603, 4294901760
      %2605 = vmatpush1.msra.mxu0 %v2604
      %2606 = vmatprep.subr.mxu0 0.0
      %v2607 = vand.u32 %v1670, 4294901760
      %v2608 = vsub.f32 %v1670, %v2607
      %v2609 = vand.u32 %v2608, 4294901760
      %2610 = vmatpush1.msra.mxu0 %v2609
      %2611 = vmatprep.subr.mxu0 0.0
      %v2612 = vand.u32 %v1671, 4294901760
      %v2613 = vsub.f32 %v1671, %v2612
      %v2614 = vand.u32 %v2613, 4294901760
      %2615 = vmatpush1.msra.mxu0 %v2614
      %2616 = vmatprep.subr.mxu0 0.0
      %v2617 = vand.u32 %v1672, 4294901760
      %v2618 = vsub.f32 %v1672, %v2617
      %v2619 = vand.u32 %v2618, 4294901760
      %2620 = vmatpush1.msra.mxu0 %v2619
      %2621 = vmatprep.subr.mxu0 0.0
      %v2622 = vand.u32 %v1673, 4294901760
      %v2623 = vsub.f32 %v1673, %v2622
      %v2624 = vand.u32 %v2623, 4294901760
      %2625 = vmatpush1.msra.mxu0 %v2624
      %2626 = vmatprep.subr.mxu0 0.0
      %v2627 = vand.u32 %v1674, 4294901760
      %v2628 = vsub.f32 %v1674, %v2627
      %v2629 = vand.u32 %v2628, 4294901760
      %2630 = vmatpush1.msra.mxu0 %v2629
      %2631 = vmatprep.subr.mxu0 0.0
      %v2632 = vand.u32 %v1675, 4294901760
      %v2633 = vsub.f32 %v1675, %v2632
      %v2634 = vand.u32 %v2633, 4294901760
      %2635 = vmatpush1.msra.mxu0 %v2634
      %2636 = vmatprep.subr.mxu0 0.0
      %v2637 = vand.u32 %v1676, 4294901760
      %v2638 = vsub.f32 %v1676, %v2637
      %v2639 = vand.u32 %v2638, 4294901760
      %2640 = vmatpush1.msra.mxu0 %v2639
      %2641 = vmatprep.subr.mxu0 0.0
      %v2642 = vand.u32 %v1677, 4294901760
      %v2643 = vsub.f32 %v1677, %v2642
      %v2644 = vand.u32 %v2643, 4294901760
      %2645 = vmatpush1.msra.mxu0 %v2644
      %2646 = vmatprep.subr.mxu0 0.0
      %v2647 = vand.u32 %v1678, 4294901760
      %v2648 = vsub.f32 %v1678, %v2647
      %v2649 = vand.u32 %v2648, 4294901760
      %2650 = vmatpush1.msra.mxu0 %v2649
      %2651 = vmatprep.subr.mxu0 0.0
      %v2652 = vand.u32 %v1679, 4294901760
      %v2653 = vsub.f32 %v1679, %v2652
      %v2654 = vand.u32 %v2653, 4294901760
      %2655 = vmatpush1.msra.mxu0 %v2654
      %2656 = vmatprep.subr.mxu0 0.0
      %v2657 = vand.u32 %v1680, 4294901760
      %v2658 = vsub.f32 %v1680, %v2657
      %v2659 = vand.u32 %v2658, 4294901760
      %2660 = vmatpush1.msra.mxu0 %v2659
      %2661 = vmatprep.subr.mxu0 0.0
      %2662 = vmatpush1.msra.mxu0 0.0
      %2663 = vmatprep.subr.mxu0 0.0
      %2664 = vmatpush1.msra.mxu0 0.0
      %2665 = vmatprep.subr.mxu0 0.0
      %2666 = vmatpush1.msra.mxu0 0.0
      %2667 = vmatprep.subr.mxu0 0.0
      %2668 = vmatpush1.msra.mxu0 0.0
      %2669 = vmatprep.subr.mxu0 0.0
      %2670 = vmatpush1.msra.mxu0 0.0
      %2671 = vmatprep.subr.mxu0 0.0
      %2672 = vmatpush1.msra.mxu0 0.0
      %2673 = vmatprep.subr.mxu0 0.0
      %2674 = vmatpush1.msra.mxu0 0.0
      %2675 = vmatprep.subr.mxu0 0.0
      %2676 = vmatpush1.msra.mxu0 0.0
      %2677 = vmatprep.subr.mxu0 0.0
      %2678 = vmatpush1.msra.mxu0 0.0
      %2679 = vmatprep.subr.mxu0 0.0
      %2680 = vmatpush1.msra.mxu0 0.0
      %2681 = vmatprep.subr.mxu0 0.0
      %2682 = vmatpush1.msra.mxu0 0.0
      %2683 = vmatprep.subr.mxu0 0.0
      %2684 = vmatpush1.msra.mxu0 0.0
      %2685 = vmatprep.subr.mxu0 0.0
      %2686 = vmatpush1.msra.mxu0 0.0
      %2687 = vmatprep.subr.mxu0 0.0
      %2688 = vmatpush1.msra.mxu0 0.0
      %2689 = vmatprep.subr.mxu0 0.0
      %2690 = vmatpush1.msra.mxu0 0.0
      %2691 = vmatprep.subr.mxu0 0.0
      %2692 = vmatpush1.msra.mxu0 0.0
      %2693 = vmatprep.mubr.f32.mxu0 0.0
      %v2694 = vand.u32 %v1634, 4294901760
      %2695 = vmatmul.mubr.f32.gmra.mrb[0].mxu0 %v2694
      %v2696 = vpop.f32.mrb[0].mxu0
      %v2697 = vadd.f32 %v2458, %v2696
      %v2698 = vpop.f32.mrb[0].mxu0
      %2699 = vmatprep.mubr.f32.mxu0 0.0
      %v2700 = vand.u32 %v1636, 4294901760
      %2701 = vmatmul.mubr.f32.gmra.mrb[0].mxu0 %v2700
      %v2702 = vpop.f32.mrb[0].mxu0
      %v2703 = vadd.f32 %v2466, %v2702
      %v2704 = vpop.f32.mrb[0].mxu0
      %2705 = vmatprep.mubr.f32.mxu0 0.0
      %v2706 = vand.u32 %v1638, 4294901760
      %2707 = vmatmul.mubr.f32.gmra.mrb[0].mxu0 %v2706
      %v2708 = vpop.f32.mrb[0].mxu0
      %v2709 = vadd.f32 %v2474, %v2708
      %v2710 = vpop.f32.mrb[0].mxu0
      %2711 = vmatprep.mubr.f32.mxu0 0.0
      %v2712 = vand.u32 %v1640, 4294901760
      %2713 = vmatmul.mubr.f32.gmra.mrb[0].mxu0 %v2712
      %v2714 = vpop.f32.mrb[0].mxu0
      %v2715 = vadd.f32 %v2482, %v2714
      %v2716 = vpop.f32.mrb[0].mxu0
      %2717 = vmatprep.mubr.f32.mxu0 0.0
      %v2718 = vand.u32 %v1642, 4294901760
      %2719 = vmatmul.mubr.f32.gmra.mrb[0].mxu0 %v2718
      %v2720 = vpop.f32.mrb[0].mxu0
      %v2721 = vadd.f32 %v2490, %v2720
      %v2722 = vpop.f32.mrb[0].mxu0
      %2723 = vmatprep.mubr.f32.mxu0 0.0
      %v2724 = vand.u32 %v1644, 4294901760
      %2725 = vmatmul.mubr.f32.gmra.mrb[0].mxu0 %v2724
      %v2726 = vpop.f32.mrb[0].mxu0
      %v2727 = vadd.f32 %v2498, %v2726
      %v2728 = vpop.f32.mrb[0].mxu0
      %2729 = vmatprep.mubr.f32.mxu0 0.0
      %v2730 = vand.u32 %v1646, 4294901760
      %2731 = vmatmul.mubr.f32.gmra.mrb[0].mxu0 %v2730
      %v2732 = vpop.f32.mrb[0].mxu0
      %v2733 = vadd.f32 %v2506, %v2732
      %v2734 = vpop.f32.mrb[0].mxu0
      %2735 = vmatprep.mubr.f32.mxu0 0.0
      %v2736 = vand.u32 %v1648, 4294901760
      %2737 = vmatmul.mubr.f32.gmra.mrb[0].mxu0 %v2736
      %v2738 = vpop.f32.mrb[0].mxu0
      %v2739 = vadd.f32 %v2514, %v2738
      %v2740 = vpop.f32.mrb[0].mxu0
      %2741 = vmatprep.mubr.f32.mxu0 0.0
      %v2742 = vand.u32 %v1650, 4294901760
      %2743 = vmatmul.mubr.f32.gmra.mrb[0].mxu0 %v2742
      %v2744 = vpop.f32.mrb[0].mxu0
      %v2745 = vadd.f32 %v2522, %v2744
      %v2746 = vpop.f32.mrb[0].mxu0
      %2747 = vmatprep.mubr.f32.mxu0 0.0
      %v2748 = vand.u32 %v1652, 4294901760
      %2749 = vmatmul.mubr.f32.gmra.mrb[0].mxu0 %v2748
      %v2750 = vpop.f32.mrb[0].mxu0
      %v2751 = vadd.f32 %v2530, %v2750
      %v2752 = vpop.f32.mrb[0].mxu0
      %2753 = vmatprep.mubr.f32.mxu0 0.0
      %v2754 = vand.u32 %v1654, 4294901760
      %2755 = vmatmul.mubr.f32.gmra.mrb[0].mxu0 %v2754
      %v2756 = vpop.f32.mrb[0].mxu0
      %v2757 = vadd.f32 %v2538, %v2756
      %v2758 = vpop.f32.mrb[0].mxu0
      %2759 = vmatprep.mubr.f32.mxu0 0.0
      %v2760 = vand.u32 %v1656, 4294901760
      %2761 = vmatmul.mubr.f32.gmra.mrb[0].mxu0 %v2760
      %v2762 = vpop.f32.mrb[0].mxu0
      %v2763 = vadd.f32 %v2546, %v2762
      %v2764 = vpop.f32.mrb[0].mxu0
      %2765 = vmatprep.mubr.f32.mxu0 0.0
      %v2766 = vand.u32 %v1658, 4294901760
      %2767 = vmatmul.mubr.f32.gmra.mrb[0].mxu0 %v2766
      %v2768 = vpop.f32.mrb[0].mxu0
      %v2769 = vadd.f32 %v2554, %v2768
      %v2770 = vpop.f32.mrb[0].mxu0
      %2771 = vmatprep.mubr.f32.mxu0 0.0
      %v2772 = vand.u32 %v1660, 4294901760
      %2773 = vmatmul.mubr.f32.gmra.mrb[0].mxu0 %v2772
      %v2774 = vpop.f32.mrb[0].mxu0
      %v2775 = vadd.f32 %v2562, %v2774
      %v2776 = vpop.f32.mrb[0].mxu0
      %2777 = vmatprep.mubr.f32.mxu0 0.0
      %v2778 = vand.u32 %v1662, 4294901760
      %2779 = vmatmul.mubr.f32.gmra.mrb[0].mxu0 %v2778
      %v2780 = vpop.f32.mrb[0].mxu0
      %v2781 = vadd.f32 %v2570, %v2780
      %v2782 = vpop.f32.mrb[0].mxu0
      %2783 = vmatprep.mubr.f32.mxu0 0.0
      %v2784 = vand.u32 %v1664, 4294901760
      %2785 = vmatmul.mubr.f32.gmra.mrb[0].mxu0 %v2784
      %v2786 = vpop.f32.mrb[0].mxu0
      %v2787 = vadd.f32 %v2578, %v2786
      %v2788 = vpop.f32.mrb[0].mxu0
      %2789 = vdwg.mxu0
      %2790 = vmatprep.subr.mxu0 0.0
      %v2791 = vand.u32 %v1665, 4294901760
      %2792 = vmatpush1.msra.mxu0 %v2791
      %2793 = vmatprep.subr.mxu0 0.0
      %v2794 = vand.u32 %v1666, 4294901760
      %2795 = vmatpush1.msra.mxu0 %v2794
      %2796 = vmatprep.subr.mxu0 0.0
      %v2797 = vand.u32 %v1667, 4294901760
      %2798 = vmatpush1.msra.mxu0 %v2797
      %2799 = vmatprep.subr.mxu0 0.0
      %v2800 = vand.u32 %v1668, 4294901760
      %2801 = vmatpush1.msra.mxu0 %v2800
      %2802 = vmatprep.subr.mxu0 0.0
      %v2803 = vand.u32 %v1669, 4294901760
      %2804 = vmatpush1.msra.mxu0 %v2803
      %2805 = vmatprep.subr.mxu0 0.0
      %v2806 = vand.u32 %v1670, 4294901760
      %2807 = vmatpush1.msra.mxu0 %v2806
      %2808 = vmatprep.subr.mxu0 0.0
      %v2809 = vand.u32 %v1671, 4294901760
      %2810 = vmatpush1.msra.mxu0 %v2809
      %2811 = vmatprep.subr.mxu0 0.0
      %v2812 = vand.u32 %v1672, 4294901760
      %2813 = vmatpush1.msra.mxu0 %v2812
      %2814 = vmatprep.subr.mxu0 0.0
      %v2815 = vand.u32 %v1673, 4294901760
      %2816 = vmatpush1.msra.mxu0 %v2815
      %2817 = vmatprep.subr.mxu0 0.0
      %v2818 = vand.u32 %v1674, 4294901760
      %2819 = vmatpush1.msra.mxu0 %v2818
      %2820 = vmatprep.subr.mxu0 0.0
      %v2821 = vand.u32 %v1675, 4294901760
      %2822 = vmatpush1.msra.mxu0 %v2821
      %2823 = vmatprep.subr.mxu0 0.0
      %v2824 = vand.u32 %v1676, 4294901760
      %2825 = vmatpush1.msra.mxu0 %v2824
      %2826 = vmatprep.subr.mxu0 0.0
      %v2827 = vand.u32 %v1677, 4294901760
      %2828 = vmatpush1.msra.mxu0 %v2827
      %2829 = vmatprep.subr.mxu0 0.0
      %v2830 = vand.u32 %v1678, 4294901760
      %2831 = vmatpush1.msra.mxu0 %v2830
      %2832 = vmatprep.subr.mxu0 0.0
      %v2833 = vand.u32 %v1679, 4294901760
      %2834 = vmatpush1.msra.mxu0 %v2833
      %2835 = vmatprep.subr.mxu0 0.0
      %v2836 = vand.u32 %v1680, 4294901760
      %2837 = vmatpush1.msra.mxu0 %v2836
      %2838 = vmatprep.subr.mxu0 0.0
      %2839 = vmatpush1.msra.mxu0 0.0
      %2840 = vmatprep.subr.mxu0 0.0
      %2841 = vmatpush1.msra.mxu0 0.0
      %2842 = vmatprep.subr.mxu0 0.0
      %2843 = vmatpush1.msra.mxu0 0.0
      %2844 = vmatprep.subr.mxu0 0.0
      %2845 = vmatpush1.msra.mxu0 0.0
      %2846 = vmatprep.subr.mxu0 0.0
      %2847 = vmatpush1.msra.mxu0 0.0
      %2848 = vmatprep.subr.mxu0 0.0
      %2849 = vmatpush1.msra.mxu0 0.0
      %2850 = vmatprep.subr.mxu0 0.0
      %2851 = vmatpush1.msra.mxu0 0.0
      %2852 = vmatprep.subr.mxu0 0.0
      %2853 = vmatpush1.msra.mxu0 0.0
      %2854 = vmatprep.subr.mxu0 0.0
      %2855 = vmatpush1.msra.mxu0 0.0
      %2856 = vmatprep.subr.mxu0 0.0
      %2857 = vmatpush1.msra.mxu0 0.0
      %2858 = vmatprep.subr.mxu0 0.0
      %2859 = vmatpush1.msra.mxu0 0.0
      %2860 = vmatprep.subr.mxu0 0.0
      %2861 = vmatpush1.msra.mxu0 0.0
      %2862 = vmatprep.subr.mxu0 0.0
      %2863 = vmatpush1.msra.mxu0 0.0
      %2864 = vmatprep.subr.mxu0 0.0
      %2865 = vmatpush1.msra.mxu0 0.0
      %2866 = vmatprep.subr.mxu0 0.0
      %2867 = vmatpush1.msra.mxu0 0.0
      %2868 = vmatprep.subr.mxu0 0.0
      %2869 = vmatpush1.msra.mxu0 0.0
      %2870 = vmatprep.mubr.f32.mxu0 0.0
      %v2871 = vand.u32 %v1634, 4294901760
      %2872 = vmatmul.mubr.f32.gmra.mrb[0].mxu0 %v2871
      %v2873 = vpop.f32.mrb[0].mxu0
      %v2874 = vadd.f32 %v2697, %v2873
      %v2875 = vpop.f32.mrb[0].mxu0
      %2876 = vmatprep.mubr.f32.mxu0 0.0
      %v2877 = vand.u32 %v1636, 4294901760
      %2878 = vmatmul.mubr.f32.gmra.mrb[0].mxu0 %v2877
      %v2879 = vpop.f32.mrb[0].mxu0
      %v2880 = vadd.f32 %v2703, %v2879
      %v2881 = vpop.f32.mrb[0].mxu0
      %2882 = vmatprep.mubr.f32.mxu0 0.0
      %v2883 = vand.u32 %v1638, 4294901760
      %2884 = vmatmul.mubr.f32.gmra.mrb[0].mxu0 %v2883
      %v2885 = vpop.f32.mrb[0].mxu0
      %v2886 = vadd.f32 %v2709, %v2885
      %v2887 = vpop.f32.mrb[0].mxu0
      %2888 = vmatprep.mubr.f32.mxu0 0.0
      %v2889 = vand.u32 %v1640, 4294901760
      %2890 = vmatmul.mubr.f32.gmra.mrb[0].mxu0 %v2889
      %v2891 = vpop.f32.mrb[0].mxu0
      %v2892 = vadd.f32 %v2715, %v2891
      %v2893 = vpop.f32.mrb[0].mxu0
      %2894 = vmatprep.mubr.f32.mxu0 0.0
      %v2895 = vand.u32 %v1642, 4294901760
      %2896 = vmatmul.mubr.f32.gmra.mrb[0].mxu0 %v2895
      %v2897 = vpop.f32.mrb[0].mxu0
      %v2898 = vadd.f32 %v2721, %v2897
      %v2899 = vpop.f32.mrb[0].mxu0
      %2900 = vmatprep.mubr.f32.mxu0 0.0
      %v2901 = vand.u32 %v1644, 4294901760
      %2902 = vmatmul.mubr.f32.gmra.mrb[0].mxu0 %v2901
      %v2903 = vpop.f32.mrb[0].mxu0
      %v2904 = vadd.f32 %v2727, %v2903
      %v2905 = vpop.f32.mrb[0].mxu0
      %2906 = vmatprep.mubr.f32.mxu0 0.0
      %v2907 = vand.u32 %v1646, 4294901760
      %2908 = vmatmul.mubr.f32.gmra.mrb[0].mxu0 %v2907
      %v2909 = vpop.f32.mrb[0].mxu0
      %v2910 = vadd.f32 %v2733, %v2909
      %v2911 = vpop.f32.mrb[0].mxu0
      %2912 = vmatprep.mubr.f32.mxu0 0.0
      %v2913 = vand.u32 %v1648, 4294901760
      %2914 = vmatmul.mubr.f32.gmra.mrb[0].mxu0 %v2913
      %v2915 = vpop.f32.mrb[0].mxu0
      %v2916 = vadd.f32 %v2739, %v2915
      %v2917 = vpop.f32.mrb[0].mxu0
      %2918 = vmatprep.mubr.f32.mxu0 0.0
      %v2919 = vand.u32 %v1650, 4294901760
      %2920 = vmatmul.mubr.f32.gmra.mrb[0].mxu0 %v2919
      %v2921 = vpop.f32.mrb[0].mxu0
      %v2922 = vadd.f32 %v2745, %v2921
      %v2923 = vpop.f32.mrb[0].mxu0
      %2924 = vmatprep.mubr.f32.mxu0 0.0
      %v2925 = vand.u32 %v1652, 4294901760
      %2926 = vmatmul.mubr.f32.gmra.mrb[0].mxu0 %v2925
      %v2927 = vpop.f32.mrb[0].mxu0
      %v2928 = vadd.f32 %v2751, %v2927
      %v2929 = vpop.f32.mrb[0].mxu0
      %2930 = vmatprep.mubr.f32.mxu0 0.0
      %v2931 = vand.u32 %v1654, 4294901760
      %2932 = vmatmul.mubr.f32.gmra.mrb[0].mxu0 %v2931
      %v2933 = vpop.f32.mrb[0].mxu0
      %v2934 = vadd.f32 %v2757, %v2933
      %v2935 = vpop.f32.mrb[0].mxu0
      %2936 = vmatprep.mubr.f32.mxu0 0.0
      %v2937 = vand.u32 %v1656, 4294901760
      %2938 = vmatmul.mubr.f32.gmra.mrb[0].mxu0 %v2937
      %v2939 = vpop.f32.mrb[0].mxu0
      %v2940 = vadd.f32 %v2763, %v2939
      %v2941 = vpop.f32.mrb[0].mxu0
      %2942 = vmatprep.mubr.f32.mxu0 0.0
      %v2943 = vand.u32 %v1658, 4294901760
      %2944 = vmatmul.mubr.f32.gmra.mrb[0].mxu0 %v2943
      %v2945 = vpop.f32.mrb[0].mxu0
      %v2946 = vadd.f32 %v2769, %v2945
      %v2947 = vpop.f32.mrb[0].mxu0
      %2948 = vmatprep.mubr.f32.mxu0 0.0
      %v2949 = vand.u32 %v1660, 4294901760
      %2950 = vmatmul.mubr.f32.gmra.mrb[0].mxu0 %v2949
      %v2951 = vpop.f32.mrb[0].mxu0
      %v2952 = vadd.f32 %v2775, %v2951
      %v2953 = vpop.f32.mrb[0].mxu0
      %2954 = vmatprep.mubr.f32.mxu0 0.0
      %v2955 = vand.u32 %v1662, 4294901760
      %2956 = vmatmul.mubr.f32.gmra.mrb[0].mxu0 %v2955
      %v2957 = vpop.f32.mrb[0].mxu0
      %v2958 = vadd.f32 %v2781, %v2957
      %v2959 = vpop.f32.mrb[0].mxu0
      %2960 = vmatprep.mubr.f32.mxu0 0.0
      %v2961 = vand.u32 %v1664, 4294901760
      %2962 = vmatmul.mubr.f32.gmra.mrb[0].mxu0 %v2961
      %v2963 = vpop.f32.mrb[0].mxu0
      %v2964 = vadd.f32 %v2787, %v2963
      %v2965 = vpop.f32.mrb[0].mxu0
      %2966 = vdwg.mxu0
      %v2967 = vlaneseq
      %v2968 = vshrl.u32 %v2967, 7
      %v2969 = vadd.s32 %v2968, 8
      %v2970 = vadd.s32 %v2968, 16
      %v2971 = vadd.s32 %v2968, 24
      %v2972 = vadd.s32 %v2968, 32
      %v2973 = vadd.s32 %v2968, 40
      %v2974 = vadd.s32 %v2968, 48
      %v2975 = vadd.s32 %v2968, 56
      %v2976 = vadd.s32 %v2968, 64
      %v2977 = vadd.s32 %v2968, 72
      %v2978 = vadd.s32 %v2968, 80
      %v2979 = vadd.s32 %v2968, 88
      %v2980 = vadd.s32 %v2968, 96
      %v2981 = vadd.s32 %v2968, 104
      %v2982 = vadd.s32 %v2968, 112
      %v2983 = vadd.s32 %v2968, 120
      %s2984 = smul.u32 %s204, 128
      %v2985 = vstv %s2984
      %v2986 = vadd.s32 %v2968, %v2985
      %v2987 = vadd.s32 %v2969, %v2985
      %v2988 = vadd.s32 %v2970, %v2985
      %v2989 = vadd.s32 %v2971, %v2985
      %v2990 = vadd.s32 %v2972, %v2985
      %v2991 = vadd.s32 %v2973, %v2985
      %v2992 = vadd.s32 %v2974, %v2985
      %v2993 = vadd.s32 %v2975, %v2985
      %v2994 = vadd.s32 %v2976, %v2985
      %v2995 = vadd.s32 %v2977, %v2985
      %v2996 = vadd.s32 %v2978, %v2985
      %v2997 = vadd.s32 %v2979, %v2985
      %v2998 = vadd.s32 %v2980, %v2985
      %v2999 = vadd.s32 %v2981, %v2985
      %v3000 = vadd.s32 %v2982, %v2985
      %v3001 = vadd.s32 %v2983, %v2985
      %vm3002 = vcmp.lt.s32.totalorder %v2986, 64
      %vm3003 = vcmp.lt.s32.totalorder %v2987, 64
      %vm3004 = vcmp.lt.s32.totalorder %v2988, 64
      %vm3005 = vcmp.lt.s32.totalorder %v2989, 64
      %vm3006 = vcmp.lt.s32.totalorder %v2990, 64
      %vm3007 = vcmp.lt.s32.totalorder %v2991, 64
      %vm3008 = vcmp.lt.s32.totalorder %v2992, 64
      %vm3009 = vcmp.lt.s32.totalorder %v2993, 64
      %vm3010 = vcmp.lt.s32.totalorder %v2994, 64
      %vm3011 = vcmp.lt.s32.totalorder %v2995, 64
      %vm3012 = vcmp.lt.s32.totalorder %v2996, 64
      %vm3013 = vcmp.lt.s32.totalorder %v2997, 64
      %vm3014 = vcmp.lt.s32.totalorder %v2998, 64
      %vm3015 = vcmp.lt.s32.totalorder %v2999, 64
      %vm3016 = vcmp.lt.s32.totalorder %v3000, 64
      %vm3017 = vcmp.lt.s32.totalorder %v3001, 64
      %v3018 = vsel %vm3002, 1.0, -1.0
      %v3019 = vsel %vm3003, 1.0, -1.0
      %v3020 = vsel %vm3004, 1.0, -1.0
      %v3021 = vsel %vm3005, 1.0, -1.0
      %v3022 = vsel %vm3006, 1.0, -1.0
      %v3023 = vsel %vm3007, 1.0, -1.0
      %v3024 = vsel %vm3008, 1.0, -1.0
      %v3025 = vsel %vm3009, 1.0, -1.0
      %v3026 = vsel %vm3010, 1.0, -1.0
      %v3027 = vsel %vm3011, 1.0, -1.0
      %v3028 = vsel %vm3012, 1.0, -1.0
      %v3029 = vsel %vm3013, 1.0, -1.0
      %v3030 = vsel %vm3014, 1.0, -1.0
      %v3031 = vsel %vm3015, 1.0, -1.0
      %v3032 = vsel %vm3016, 1.0, -1.0
      %v3033 = vsel %vm3017, 1.0, -1.0
      %v3034 = vmul.f32 %v2874, %v3018
      %v3035 = vmul.f32 %v2880, %v3019
      %v3036 = vmul.f32 %v2886, %v3020
      %v3037 = vmul.f32 %v2892, %v3021
      %v3038 = vmul.f32 %v2898, %v3022
      %v3039 = vmul.f32 %v2904, %v3023
      %v3040 = vmul.f32 %v2910, %v3024
      %v3041 = vmul.f32 %v2916, %v3025
      %v3042 = vmul.f32 %v2922, %v3026
      %v3043 = vmul.f32 %v2928, %v3027
      %v3044 = vmul.f32 %v2934, %v3028
      %v3045 = vmul.f32 %v2940, %v3029
      %v3046 = vmul.f32 %v2946, %v3030
      %v3047 = vmul.f32 %v2952, %v3031
      %v3048 = vmul.f32 %v2958, %v3032
      %v3049 = vmul.f32 %v2964, %v3033
      %vm3050 = vcmask 7168
      %v3051 = vsel %vm3050, %v3034, 0.0
      %v3052 = vsel %vm3050, %v3035, 0.0
      %v3053 = vadd.f32 %v3051, %v3052
      %v3054 = vsel %vm3050, %v3036, 0.0
      %v3055 = vadd.f32 %v3053, %v3054
      %v3056 = vsel %vm3050, %v3037, 0.0
      %v3057 = vadd.f32 %v3055, %v3056
      %v3058 = vsel %vm3050, %v3038, 0.0
      %v3059 = vadd.f32 %v3057, %v3058
      %v3060 = vsel %vm3050, %v3039, 0.0
      %v3061 = vadd.f32 %v3059, %v3060
      %v3062 = vsel %vm3050, %v3040, 0.0
      %v3063 = vadd.f32 %v3061, %v3062
      %v3064 = vsel %vm3050, %v3041, 0.0
      %v3065 = vadd.f32 %v3063, %v3064
      %v3066 = vsel %vm3050, %v3042, 0.0
      %v3067 = vadd.f32 %v3065, %v3066
      %v3068 = vsel %vm3050, %v3043, 0.0
      %v3069 = vadd.f32 %v3067, %v3068
      %v3070 = vsel %vm3050, %v3044, 0.0
      %v3071 = vadd.f32 %v3069, %v3070
      %v3072 = vsel %vm3050, %v3045, 0.0
      %v3073 = vadd.f32 %v3071, %v3072
      %v3074 = vsel %vm3050, %v3046, 0.0
      %v3075 = vadd.f32 %v3073, %v3074
      %v3076 = vsel %vm3050, %v3047, 0.0
      %v3077 = vadd.f32 %v3075, %v3076
      %v3078 = vsel %vm3050, %v3048, 0.0
      %v3079 = vadd.f32 %v3077, %v3078
      %v3080 = vsel %vm3050, %v3049, 0.0
      %v3081 = vadd.f32 %v3079, %v3080
      %3082 = vadd.xlane.f32.xlu0 %v3081
      %v3083 = vpop.xlane.xlu0 %3082
      %v3084 = vrot.slane %v3083, 4
      %v3085 = vadd.f32 %v3083, %v3084
      %v3086 = vrot.slane %v3085, 2
      %v3087 = vadd.f32 %v3085, %v3086
      %v3088 = vrot.slane %v3087, 1
      %v3089 = vadd.f32 %v3087, %v3088
      %s3090 = vtos %v3089
      %v3091 = vstv %s3090
      %v3092 = vld [vmem:[#allocation5] sm:$0x1]
      %v3093 = vadd.f32 %v3092, %v3091
      %vm3094 = vcmask 0
      %3095 = vst.msk [vmem:[#allocation5] sm:$0x1] %vm3094, %v3093
      // Predicated region
      $region33: #{tpu_custom_call.1} parent=27 // pred_check
        %p3096 = pneg %p205
      $region34: #{tpu_custom_call.1} parent=27 // pred_check_branch
        %3098 = sbr.rel (%p3096) target = $region36
      $region35: #{tpu_custom_call.1} parent=27 // pred_region
        %v3099 = vld [vmem:[#allocation5] sm:$0x1]
        %v3100 = vmul.f32 %v3099, 1.5258789e-05
        %3101 = vst.msk [vmem:[%s202] sm:$0x1] %vm3094, %v3100
      $region36: #{tpu_custom_call.1} parent=27 // pred_fallthru
        _
      %s3102 = sadd.s32 %s18, %s19
      %p3103 = scmp.lt.s32.totalorder %s3102, 1
      %s3104 = scalar_select %p3103, %s3102, 1
      %s3105 = scalar_lea.vmem %s2, %s3104
      // Predicated region
      $region37: #{tpu_custom_call.1} parent=27 // pred_check
        %p3106 = pneg %p108
      $region38: #{tpu_custom_call.1} parent=27 // pred_check_branch
        %3108 = sbr.rel (%p3106) target = $region40
      $region39: #{tpu_custom_call.1} parent=27 // pred_region
        %s3109 = sadd.s32 %s18, %s19
      $region40: #{tpu_custom_call.1} parent=27 // pred_fallthru
        _
    $region28: #{tpu_custom_call.1} parent=5 // pred_fallthru
      _
    %p3110 = scmp.le.s32.totalorder 2, %s8
    // Predicated region
    $region41: #{tpu_custom_call.1} parent=5 // pred_check
      %p3111 = pneg %p3110
    $region42: #{tpu_custom_call.1} parent=5 // pred_check_branch
      %3113 = sbr.rel (%p3111) target = $region44
    $region43: #{tpu_custom_call.1} parent=5 // pred_region
      %s3114 = ssub.s32 %s8, 2
      // Predicated region
      $region45: #{tpu_custom_call.1} parent=43 // pred_check
        %p3115 = pneg %p114
      $region46: #{tpu_custom_call.1} parent=43 // pred_check_branch
        %3117 = sbr.rel (%p3115) target = $region48
      $region47: #{tpu_custom_call.1} parent=43 // pred_region
        %s3118 = sadd.s32 %s21, %s22
        %p3119 = scmp.lt.s32.totalorder %s3118, 1
        %s3120 = scalar_select %p3119, %s3118, 1
        %s3121 = scalar_lea.vmem %s2, %s3120
      $region48: #{tpu_custom_call.1} parent=43 // pred_fallthru
        _
    $region44: #{tpu_custom_call.1} parent=5 // pred_fallthru
      _
  $region6: #{tpu_custom_call.1} parent=0 // loop_footer
    %s12 = sadd.s32 1, %s8
  $region7: #{tpu_custom_call.1} parent=0 // loop_footer_branch
    %7 = sbr.rel target = $region3
  $region8: #{tpu_custom_call.1} parent=0 // loop_exit
    _

</llo_original>
